<compile_context>
chip_gen: v6e
topology: v6e:2x2x1
jax: 0.10.0
libtpu: 0.0.40
codegen_flags: <defaults>
</compile_context>

<pallas_src>
import jax
import jax.numpy as jnp
from jax.experimental import pallas as pl
from jax.experimental.pallas import tpu as pltpu


C_OUT = 32              # conv output channels
HW = 14                 # pooled spatial size (28 / 2)
P_SP = HW * HW          # 196 pooled positions per image
KT = 4                  # fc1 weight pipeline steps
CPT = C_OUT // KT       # 8 channels contracted per step
K_FC1 = C_OUT * P_SP    # 6272 = fc1 contraction size


# ---------------------------------------------------------------------------
# Fused Pallas kernel: conv+relu+pool (step 0), pipelined fc1, fc2/fc3 (last step)
# ---------------------------------------------------------------------------

def fused_cnn_kernel(p_ref, wc_ref, bc_ref, w1_ref, b1_ref, w2_ref, b2_ref,
                     w3_ref, b3_ref, out_ref, pool_sc, acc_sc):
    k = pl.program_id(0)
    nk = pl.num_programs(0)
    n_batch = acc_sc.shape[0]

    # ---- step 0: conv(3x3, pad1) + bias + relu + 2x2 maxpool, kept in channel-major layout ----
    @pl.when(k == 0)
    def _():
        wc = wc_ref[...]                     # (32, 9)
        bc = bc_ref[...]                     # (32, 1)
        for b in range(n_batch):
            # conv output at the 4 positions of every 2x2 pooling window (lane-dense: 196 lanes)
            c00 = jnp.dot(wc, p_ref[0, b], preferred_element_type=jnp.float32)
            c01 = jnp.dot(wc, p_ref[1, b], preferred_element_type=jnp.float32)
            c10 = jnp.dot(wc, p_ref[2, b], preferred_element_type=jnp.float32)
            c11 = jnp.dot(wc, p_ref[3, b], preferred_element_type=jnp.float32)
            pooled = jnp.maximum(jnp.maximum(c00, c01), jnp.maximum(c10, c11))
            pooled = jnp.maximum(pooled + bc, 0.0)          # (32, 196) = maxpool(relu(conv))
            # lane-aligned stores (offset 0, width 196): no lane rotation, unlike a flat scatter
            for c in range(C_OUT):
                pool_sc[c, b:b + 1, :] = pooled[c:c + 1, :]
        acc_sc[...] = jnp.zeros_like(acc_sc)

    # ---- every step: fc1 partial contraction over this step's CPT channels ----
    # W1 is packed as (KT, CPT, 196, 128) so each channel's (196, 128) slab is a clean tile;
    # pooled activations are read with a dynamic leading index (no relayout needed).
    partial = jnp.zeros(acc_sc.shape, jnp.float32)
    for cc in range(CPT):
        x_cc = pool_sc[k * CPT + cc]                         # (B, 196)
        partial = partial + jnp.dot(x_cc, w1_ref[0, cc],
                                    preferred_element_type=jnp.float32)
    acc_sc[...] += partial

    # ---- last step: fc1 bias/relu -> (dropout = identity in eval) -> fc2/relu -> fc3 ----
    @pl.when(k == nk - 1)
    def _():
        h1 = jnp.maximum(acc_sc[...] + b1_ref[...], 0.0)
        # TODO(synk): nn.Dropout(0.5) is identity in eval/inference mode; training-mode dropout not implemented.
        h2 = jnp.dot(h1, w2_ref[...], preferred_element_type=jnp.float32) + b2_ref[...]
        h2 = jnp.maximum(h2, 0.0)
        logits = jnp.dot(h2, w3_ref[...], preferred_element_type=jnp.float32) + b3_ref[...]
        out_ref[...] = logits.astype(out_ref.dtype)


# ---------------------------------------------------------------------------
# Wrapper: tiny host/XLA-side prep (pool-quadrant im2col, parameter packing)
# ---------------------------------------------------------------------------

def _build_pool_quadrant_patches(x):
    """x: (B, 1, 28, 28) -> (4, B, 9, 196) with
    patches[qi*2+qj, b, di*3+dj, i*14+j] = xpad[b, 2i+qi+di, 2j+qj+dj]."""
    B = x.shape[0]
    xp = jnp.pad(x[:, 0, :, :], ((0, 0), (1, 1), (1, 1)))      # (B, 30, 30), zero pad=1
    quads = []
    for qi in range(2):
        for qj in range(2):
            taps = []
            for di in range(3):
                for dj in range(3):
                    r0, c0 = qi + di, qj + dj
                    sl = xp[:, r0:r0 + 27:2, c0:c0 + 27:2]     # (B, 14, 14)
                    taps.append(sl.reshape(B, P_SP))
            quads.append(jnp.stack(taps, axis=1))              # (B, 9, 196)
    return jnp.stack(quads, axis=0)                            # (4, B, 9, 196)


def simple_cnn_forward(x, params):
    """x: (B, 1, 28, 28) float32 NCHW. Returns (B, 10) float32 logits."""
    B = x.shape[0]
    assert x.shape[1:] == (1, 28, 28)

    patches = _build_pool_quadrant_patches(x.astype(jnp.float32))   # (4, B, 9, 196)

    wc = params["conv_w"].reshape(C_OUT, 9)                    # (32, 9), k = di*3+dj
    bc = params["conv_b"].reshape(C_OUT, 1)                    # (32, 1)
    # fc1 weight packed per channel: [k, cc, p, o] = fc1_w[o, (k*CPT+cc)*196 + p]
    w1 = params["fc1_w"].T.reshape(KT, CPT, P_SP, 128)
    b1 = params["fc1_b"].reshape(1, 128)
    w2 = params["fc2_w"].T                                     # (128, 64)
    b2 = params["fc2_b"].reshape(1, 64)
    w3 = params["fc3_w"].T                                     # (64, 10)
    b3 = params["fc3_b"].reshape(1, 10)

    const2 = lambda k: (0, 0)
    const4 = lambda k: (0, 0, 0, 0)

    return pl.pallas_call(
        fused_cnn_kernel,
        out_shape=jax.ShapeDtypeStruct((B, 10), jnp.float32),
        grid=(KT,),
        in_specs=[
            pl.BlockSpec((4, B, 9, P_SP), const4),                 # pool-quadrant patches (resident)
            pl.BlockSpec((C_OUT, 9), const2),                      # conv weight
            pl.BlockSpec((C_OUT, 1), const2),                      # conv bias
            pl.BlockSpec((1, CPT, P_SP, 128), lambda k: (k, 0, 0, 0)),  # fc1 weight: pipelined tiles
            pl.BlockSpec((1, 128), const2),                        # fc1 bias
            pl.BlockSpec((128, 64), const2),                       # fc2 weight
            pl.BlockSpec((1, 64), const2),                         # fc2 bias
            pl.BlockSpec((64, 10), const2),                        # fc3 weight
            pl.BlockSpec((1, 10), const2),                         # fc3 bias
        ],
        out_specs=pl.BlockSpec((B, 10), const2),
        scratch_shapes=[
            pltpu.VMEM((C_OUT, B, P_SP), jnp.float32),             # pooled activations (channel-major)
            pltpu.VMEM((B, 128), jnp.float32),                     # fc1 accumulator
        ],
        compiler_params=pltpu.CompilerParams(
            dimension_semantics=("arbitrary",)),
    )(patches, wc, bc, w1, b1, w2, b2, w3, b3)


# ---------------------------------------------------------------------------
# Pure-JAX reference (for a correctness self-check) and params
# ---------------------------------------------------------------------------

def reference_forward(x, params):
    B = x.shape[0]
    conv = jax.lax.conv_general_dilated(
        x, params["conv_w"], window_strides=(1, 1), padding=((1, 1), (1, 1)),
        dimension_numbers=("NCHW", "OIHW", "NCHW"))
    conv = jax.nn.relu(conv + params["conv_b"][None, :, None, None])
    pooled = jax.lax.reduce_window(conv, -jnp.inf, jax.lax.max,
                                   (1, 1, 2, 2), (1, 1, 2, 2), "VALID")
    flat = pooled.reshape(B, C_OUT * HW * HW)
    h1 = jax.nn.relu(flat @ params["fc1_w"].T + params["fc1_b"])
    h2 = jax.nn.relu(h1 @ params["fc2_w"].T + params["fc2_b"])
    return h2 @ params["fc3_w"].T + params["fc3_b"]


def init_params(key):
    ks = jax.random.split(key, 8)
    return {
        "conv_w": 0.1 * jax.random.normal(ks[0], (32, 1, 3, 3), jnp.float32),
        "conv_b": 0.1 * jax.random.normal(ks[1], (32,), jnp.float32),
        "fc1_w": 0.02 * jax.random.normal(ks[2], (128, K_FC1), jnp.float32),
        "fc1_b": 0.02 * jax.random.normal(ks[3], (128,), jnp.float32),
        "fc2_w": 0.05 * jax.random.normal(ks[4], (64, 128), jnp.float32),
        "fc2_b": 0.05 * jax.random.normal(ks[5], (64,), jnp.float32),
        "fc3_w": 0.1 * jax.random.normal(ks[6], (10, 64), jnp.float32),
        "fc3_b": 0.1 * jax.random.normal(ks[7], (10,), jnp.float32),
    }


if __name__ == "__main__":
    key = jax.random.PRNGKey(0)
    k_params, k_x = jax.random.split(key)
    params = init_params(k_params)

    # Spatial size must be 28x28 to satisfy the x.view(-1, 32*14*14) in the torch module.
    x = jax.random.normal(k_x, (2, 1, 28, 28), jnp.float32)

    fwd = jax.jit(simple_cnn_forward)
    logits = fwd(x, params)
    jax.block_until_ready(logits)
    assert logits.shape == (2, 10)

    ref = reference_forward(x, params)
    assert jnp.allclose(logits, ref, rtol=2e-3, atol=2e-3), (
        f"max abs err {jnp.max(jnp.abs(logits - ref))}")

    print("KERNEL_OK")
</pallas_src>

<mosaic_0001>
module attributes {stable_mosaic.version = 11 : i64} {
  func.func @fused_cnn_kernel(%arg0: i32, %arg1: memref<4x2x9x196xf32, #tpu.memory_space<vmem>>, %arg2: memref<32x9xf32, #tpu.memory_space<vmem>>, %arg3: memref<32x1xf32, #tpu.memory_space<vmem>>, %arg4: memref<1x8x196x128xf32, #tpu.memory_space<vmem>>, %arg5: memref<1x128xf32, #tpu.memory_space<vmem>>, %arg6: memref<128x64xf32, #tpu.memory_space<vmem>>, %arg7: memref<1x64xf32, #tpu.memory_space<vmem>>, %arg8: memref<64x10xf32, #tpu.memory_space<vmem>>, %arg9: memref<1x10xf32, #tpu.memory_space<vmem>>, %arg10: memref<2x10xf32, #tpu.memory_space<vmem>>, %arg11: memref<32x2x196xf32, #tpu.memory_space<vmem>>, %arg12: memref<2x128xf32, #tpu.memory_space<vmem>>) attributes {dimension_semantics = [#tpu.dimension_semantics<arbitrary>], iteration_bounds = array<i64: 4>, scalar_prefetch = 0 : i64, scratch_operands = 2 : i64, tpu.core_type = #tpu.core_type<tc>, window_params = [{pipeline_mode = #tpu.pipeline_mode<synchronous>, transform_indices = @transform_0, window_bounds = array<i64: 4, 2, 9, 196>}, {pipeline_mode = #tpu.pipeline_mode<synchronous>, transform_indices = @transform_1, window_bounds = array<i64: 32, 9>}, {pipeline_mode = #tpu.pipeline_mode<synchronous>, transform_indices = @transform_2, window_bounds = array<i64: 32, 1>}, {transform_indices = @transform_3, window_bounds = array<i64: 1, 8, 196, 128>}, {pipeline_mode = #tpu.pipeline_mode<synchronous>, transform_indices = @transform_4, window_bounds = array<i64: 1, 128>}, {pipeline_mode = #tpu.pipeline_mode<synchronous>, transform_indices = @transform_5, window_bounds = array<i64: 128, 64>}, {pipeline_mode = #tpu.pipeline_mode<synchronous>, transform_indices = @transform_6, window_bounds = array<i64: 1, 64>}, {pipeline_mode = #tpu.pipeline_mode<synchronous>, transform_indices = @transform_7, window_bounds = array<i64: 64, 10>}, {pipeline_mode = #tpu.pipeline_mode<synchronous>, transform_indices = @transform_8, window_bounds = array<i64: 1, 10>}, {pipeline_mode = #tpu.pipeline_mode<synchronous>, transform_indices = @transform_9, window_bounds = array<i64: 2, 10>}]} {
    %c0_i32 = arith.constant 0 : i32
    %0 = arith.cmpi eq, %arg0, %c0_i32 : i32
    %1 = arith.extui %0 : i1 to i32
    %c0_i32_0 = arith.constant 0 : i32
    %2 = arith.cmpi ne, %1, %c0_i32_0 : i32
    scf.if %2 {
      %c0_63 = arith.constant 0 : index
      %c0_64 = arith.constant 0 : index
      %82 = vector.load %arg2[%c0_63, %c0_64] : memref<32x9xf32, #tpu.memory_space<vmem>>, vector<32x9xf32>
      %c0_65 = arith.constant 0 : index
      %c0_66 = arith.constant 0 : index
      %83 = vector.load %arg3[%c0_65, %c0_66] : memref<32x1xf32, #tpu.memory_space<vmem>>, vector<32x1xf32>
      %c0_67 = arith.constant 0 : index
      %c0_68 = arith.constant 0 : index
      %c0_69 = arith.constant 0 : index
      %c0_70 = arith.constant 0 : index
      %84 = vector.load %arg1[%c0_67, %c0_68, %c0_69, %c0_70] : memref<4x2x9x196xf32, #tpu.memory_space<vmem>>, vector<1x1x9x196xf32>
      %85 = vector.shape_cast %84 : vector<1x1x9x196xf32> to vector<9x196xf32>
      %cst_71 = arith.constant dense<0.000000e+00> : vector<32x196xf32>
      %86 = tpu.matmul %82, %85, %cst_71 {dimension_numbers = #tpu.dot_dimension_numbers<[1], [0], [0], [1], [0, 0, 1, 1], [], []>} : vector<32x9xf32>, vector<9x196xf32>, vector<32x196xf32> -> vector<32x196xf32>
      %c1_72 = arith.constant 1 : index
      %c0_73 = arith.constant 0 : index
      %c0_74 = arith.constant 0 : index
      %c0_75 = arith.constant 0 : index
      %87 = vector.load %arg1[%c1_72, %c0_73, %c0_74, %c0_75] : memref<4x2x9x196xf32, #tpu.memory_space<vmem>>, vector<1x1x9x196xf32>
      %88 = vector.shape_cast %87 : vector<1x1x9x196xf32> to vector<9x196xf32>
      %cst_76 = arith.constant dense<0.000000e+00> : vector<32x196xf32>
      %89 = tpu.matmul %82, %88, %cst_76 {dimension_numbers = #tpu.dot_dimension_numbers<[1], [0], [0], [1], [0, 0, 1, 1], [], []>} : vector<32x9xf32>, vector<9x196xf32>, vector<32x196xf32> -> vector<32x196xf32>
      %c2_77 = arith.constant 2 : index
      %c0_78 = arith.constant 0 : index
      %c0_79 = arith.constant 0 : index
      %c0_80 = arith.constant 0 : index
      %90 = vector.load %arg1[%c2_77, %c0_78, %c0_79, %c0_80] : memref<4x2x9x196xf32, #tpu.memory_space<vmem>>, vector<1x1x9x196xf32>
      %91 = vector.shape_cast %90 : vector<1x1x9x196xf32> to vector<9x196xf32>
      %cst_81 = arith.constant dense<0.000000e+00> : vector<32x196xf32>
      %92 = tpu.matmul %82, %91, %cst_81 {dimension_numbers = #tpu.dot_dimension_numbers<[1], [0], [0], [1], [0, 0, 1, 1], [], []>} : vector<32x9xf32>, vector<9x196xf32>, vector<32x196xf32> -> vector<32x196xf32>
      %c3_82 = arith.constant 3 : index
      %c0_83 = arith.constant 0 : index
      %c0_84 = arith.constant 0 : index
      %c0_85 = arith.constant 0 : index
      %93 = vector.load %arg1[%c3_82, %c0_83, %c0_84, %c0_85] : memref<4x2x9x196xf32, #tpu.memory_space<vmem>>, vector<1x1x9x196xf32>
      %94 = vector.shape_cast %93 : vector<1x1x9x196xf32> to vector<9x196xf32>
      %cst_86 = arith.constant dense<0.000000e+00> : vector<32x196xf32>
      %95 = tpu.matmul %82, %94, %cst_86 {dimension_numbers = #tpu.dot_dimension_numbers<[1], [0], [0], [1], [0, 0, 1, 1], [], []>} : vector<32x9xf32>, vector<9x196xf32>, vector<32x196xf32> -> vector<32x196xf32>
      %96 = arith.maximumf %86, %89 : vector<32x196xf32>
      %97 = arith.maximumf %92, %95 : vector<32x196xf32>
      %98 = arith.maximumf %96, %97 : vector<32x196xf32>
      %99 = vector.broadcast %83 : vector<32x1xf32> to vector<32x196xf32>
      %100 = arith.addf %98, %99 : vector<32x196xf32>
      %cst_87 = arith.constant 0.000000e+00 : f32
      %101 = vector.broadcast %cst_87 : f32 to vector<32x196xf32>
      %102 = arith.maximumf %100, %101 : vector<32x196xf32>
      %103 = vector.extract_strided_slice %102 {offsets = [0, 0], sizes = [1, 196], strides = [1, 1]} : vector<32x196xf32> to vector<1x196xf32>
      %c0_88 = arith.constant 0 : index
      %c0_89 = arith.constant 0 : index
      %c0_90 = arith.constant 0 : index
      %104 = vector.load %arg11[%c0_88, %c0_89, %c0_90] : memref<32x2x196xf32, #tpu.memory_space<vmem>>, vector<1x1x196xf32>
      %105 = vector.shape_cast %104 : vector<1x1x196xf32> to vector<1x196xf32>
      %106 = vector.shape_cast %103 : vector<1x196xf32> to vector<1x1x196xf32>
      tpu.vector_store %arg11[%c0_88, %c0_89, %c0_90], %106 {strides = array<i32>} : memref<32x2x196xf32, #tpu.memory_space<vmem>>, vector<1x1x196xf32>,
      %107 = vector.extract_strided_slice %102 {offsets = [1, 0], sizes = [1, 196], strides = [1, 1]} : vector<32x196xf32> to vector<1x196xf32>
      %c1_91 = arith.constant 1 : index
      %c0_92 = arith.constant 0 : index
      %c0_93 = arith.constant 0 : index
      %108 = vector.load %arg11[%c1_91, %c0_92, %c0_93] : memref<32x2x196xf32, #tpu.memory_space<vmem>>, vector<1x1x196xf32>
      %109 = vector.shape_cast %108 : vector<1x1x196xf32> to vector<1x196xf32>
      %110 = vector.shape_cast %107 : vector<1x196xf32> to vector<1x1x196xf32>
      tpu.vector_store %arg11[%c1_91, %c0_92, %c0_93], %110 {strides = array<i32>} : memref<32x2x196xf32, #tpu.memory_space<vmem>>, vector<1x1x196xf32>,
      %111 = vector.extract_strided_slice %102 {offsets = [2, 0], sizes = [1, 196], strides = [1, 1]} : vector<32x196xf32> to vector<1x196xf32>
      %c2_94 = arith.constant 2 : index
      %c0_95 = arith.constant 0 : index
      %c0_96 = arith.constant 0 : index
      %112 = vector.load %arg11[%c2_94, %c0_95, %c0_96] : memref<32x2x196xf32, #tpu.memory_space<vmem>>, vector<1x1x196xf32>
      %113 = vector.shape_cast %112 : vector<1x1x196xf32> to vector<1x196xf32>
      %114 = vector.shape_cast %111 : vector<1x196xf32> to vector<1x1x196xf32>
      tpu.vector_store %arg11[%c2_94, %c0_95, %c0_96], %114 {strides = array<i32>} : memref<32x2x196xf32, #tpu.memory_space<vmem>>, vector<1x1x196xf32>,
      %115 = vector.extract_strided_slice %102 {offsets = [3, 0], sizes = [1, 196], strides = [1, 1]} : vector<32x196xf32> to vector<1x196xf32>
      %c3_97 = arith.constant 3 : index
      %c0_98 = arith.constant 0 : index
      %c0_99 = arith.constant 0 : index
      %116 = vector.load %arg11[%c3_97, %c0_98, %c0_99] : memref<32x2x196xf32, #tpu.memory_space<vmem>>, vector<1x1x196xf32>
      %117 = vector.shape_cast %116 : vector<1x1x196xf32> to vector<1x196xf32>
      %118 = vector.shape_cast %115 : vector<1x196xf32> to vector<1x1x196xf32>
      tpu.vector_store %arg11[%c3_97, %c0_98, %c0_99], %118 {strides = array<i32>} : memref<32x2x196xf32, #tpu.memory_space<vmem>>, vector<1x1x196xf32>,
      %119 = vector.extract_strided_slice %102 {offsets = [4, 0], sizes = [1, 196], strides = [1, 1]} : vector<32x196xf32> to vector<1x196xf32>
      %c4_100 = arith.constant 4 : index
      %c0_101 = arith.constant 0 : index
      %c0_102 = arith.constant 0 : index
      %120 = vector.load %arg11[%c4_100, %c0_101, %c0_102] : memref<32x2x196xf32, #tpu.memory_space<vmem>>, vector<1x1x196xf32>
      %121 = vector.shape_cast %120 : vector<1x1x196xf32> to vector<1x196xf32>
      %122 = vector.shape_cast %119 : vector<1x196xf32> to vector<1x1x196xf32>
      tpu.vector_store %arg11[%c4_100, %c0_101, %c0_102], %122 {strides = array<i32>} : memref<32x2x196xf32, #tpu.memory_space<vmem>>, vector<1x1x196xf32>,
      %123 = vector.extract_strided_slice %102 {offsets = [5, 0], sizes = [1, 196], strides = [1, 1]} : vector<32x196xf32> to vector<1x196xf32>
      %c5_103 = arith.constant 5 : index
      %c0_104 = arith.constant 0 : index
      %c0_105 = arith.constant 0 : index
      %124 = vector.load %arg11[%c5_103, %c0_104, %c0_105] : memref<32x2x196xf32, #tpu.memory_space<vmem>>, vector<1x1x196xf32>
      %125 = vector.shape_cast %124 : vector<1x1x196xf32> to vector<1x196xf32>
      %126 = vector.shape_cast %123 : vector<1x196xf32> to vector<1x1x196xf32>
      tpu.vector_store %arg11[%c5_103, %c0_104, %c0_105], %126 {strides = array<i32>} : memref<32x2x196xf32, #tpu.memory_space<vmem>>, vector<1x1x196xf32>,
      %127 = vector.extract_strided_slice %102 {offsets = [6, 0], sizes = [1, 196], strides = [1, 1]} : vector<32x196xf32> to vector<1x196xf32>
      %c6_106 = arith.constant 6 : index
      %c0_107 = arith.constant 0 : index
      %c0_108 = arith.constant 0 : index
      %128 = vector.load %arg11[%c6_106, %c0_107, %c0_108] : memref<32x2x196xf32, #tpu.memory_space<vmem>>, vector<1x1x196xf32>
      %129 = vector.shape_cast %128 : vector<1x1x196xf32> to vector<1x196xf32>
      %130 = vector.shape_cast %127 : vector<1x196xf32> to vector<1x1x196xf32>
      tpu.vector_store %arg11[%c6_106, %c0_107, %c0_108], %130 {strides = array<i32>} : memref<32x2x196xf32, #tpu.memory_space<vmem>>, vector<1x1x196xf32>,
      %131 = vector.extract_strided_slice %102 {offsets = [7, 0], sizes = [1, 196], strides = [1, 1]} : vector<32x196xf32> to vector<1x196xf32>
      %c7_109 = arith.constant 7 : index
      %c0_110 = arith.constant 0 : index
      %c0_111 = arith.constant 0 : index
      %132 = vector.load %arg11[%c7_109, %c0_110, %c0_111] : memref<32x2x196xf32, #tpu.memory_space<vmem>>, vector<1x1x196xf32>
      %133 = vector.shape_cast %132 : vector<1x1x196xf32> to vector<1x196xf32>
      %134 = vector.shape_cast %131 : vector<1x196xf32> to vector<1x1x196xf32>
      tpu.vector_store %arg11[%c7_109, %c0_110, %c0_111], %134 {strides = array<i32>} : memref<32x2x196xf32, #tpu.memory_space<vmem>>, vector<1x1x196xf32>,
      %135 = vector.extract_strided_slice %102 {offsets = [8, 0], sizes = [1, 196], strides = [1, 1]} : vector<32x196xf32> to vector<1x196xf32>
      %c8 = arith.constant 8 : index
      %c0_112 = arith.constant 0 : index
      %c0_113 = arith.constant 0 : index
      %136 = vector.load %arg11[%c8, %c0_112, %c0_113] : memref<32x2x196xf32, #tpu.memory_space<vmem>>, vector<1x1x196xf32>
      %137 = vector.shape_cast %136 : vector<1x1x196xf32> to vector<1x196xf32>
      %138 = vector.shape_cast %135 : vector<1x196xf32> to vector<1x1x196xf32>
      tpu.vector_store %arg11[%c8, %c0_112, %c0_113], %138 {strides = array<i32>} : memref<32x2x196xf32, #tpu.memory_space<vmem>>, vector<1x1x196xf32>,
      %139 = vector.extract_strided_slice %102 {offsets = [9, 0], sizes = [1, 196], strides = [1, 1]} : vector<32x196xf32> to vector<1x196xf32>
      %c9 = arith.constant 9 : index
      %c0_114 = arith.constant 0 : index
      %c0_115 = arith.constant 0 : index
      %140 = vector.load %arg11[%c9, %c0_114, %c0_115] : memref<32x2x196xf32, #tpu.memory_space<vmem>>, vector<1x1x196xf32>
      %141 = vector.shape_cast %140 : vector<1x1x196xf32> to vector<1x196xf32>
      %142 = vector.shape_cast %139 : vector<1x196xf32> to vector<1x1x196xf32>
      tpu.vector_store %arg11[%c9, %c0_114, %c0_115], %142 {strides = array<i32>} : memref<32x2x196xf32, #tpu.memory_space<vmem>>, vector<1x1x196xf32>,
      %143 = vector.extract_strided_slice %102 {offsets = [10, 0], sizes = [1, 196], strides = [1, 1]} : vector<32x196xf32> to vector<1x196xf32>
      %c10 = arith.constant 10 : index
      %c0_116 = arith.constant 0 : index
      %c0_117 = arith.constant 0 : index
      %144 = vector.load %arg11[%c10, %c0_116, %c0_117] : memref<32x2x196xf32, #tpu.memory_space<vmem>>, vector<1x1x196xf32>
      %145 = vector.shape_cast %144 : vector<1x1x196xf32> to vector<1x196xf32>
      %146 = vector.shape_cast %143 : vector<1x196xf32> to vector<1x1x196xf32>
      tpu.vector_store %arg11[%c10, %c0_116, %c0_117], %146 {strides = array<i32>} : memref<32x2x196xf32, #tpu.memory_space<vmem>>, vector<1x1x196xf32>,
      %147 = vector.extract_strided_slice %102 {offsets = [11, 0], sizes = [1, 196], strides = [1, 1]} : vector<32x196xf32> to vector<1x196xf32>
      %c11 = arith.constant 11 : index
      %c0_118 = arith.constant 0 : index
      %c0_119 = arith.constant 0 : index
      %148 = vector.load %arg11[%c11, %c0_118, %c0_119] : memref<32x2x196xf32, #tpu.memory_space<vmem>>, vector<1x1x196xf32>
      %149 = vector.shape_cast %148 : vector<1x1x196xf32> to vector<1x196xf32>
      %150 = vector.shape_cast %147 : vector<1x196xf32> to vector<1x1x196xf32>
      tpu.vector_store %arg11[%c11, %c0_118, %c0_119], %150 {strides = array<i32>} : memref<32x2x196xf32, #tpu.memory_space<vmem>>, vector<1x1x196xf32>,
      %151 = vector.extract_strided_slice %102 {offsets = [12, 0], sizes = [1, 196], strides = [1, 1]} : vector<32x196xf32> to vector<1x196xf32>
      %c12 = arith.constant 12 : index
      %c0_120 = arith.constant 0 : index
      %c0_121 = arith.constant 0 : index
      %152 = vector.load %arg11[%c12, %c0_120, %c0_121] : memref<32x2x196xf32, #tpu.memory_space<vmem>>, vector<1x1x196xf32>
      %153 = vector.shape_cast %152 : vector<1x1x196xf32> to vector<1x196xf32>
      %154 = vector.shape_cast %151 : vector<1x196xf32> to vector<1x1x196xf32>
      tpu.vector_store %arg11[%c12, %c0_120, %c0_121], %154 {strides = array<i32>} : memref<32x2x196xf32, #tpu.memory_space<vmem>>, vector<1x1x196xf32>,
      %155 = vector.extract_strided_slice %102 {offsets = [13, 0], sizes = [1, 196], strides = [1, 1]} : vector<32x196xf32> to vector<1x196xf32>
      %c13 = arith.constant 13 : index
      %c0_122 = arith.constant 0 : index
      %c0_123 = arith.constant 0 : index
      %156 = vector.load %arg11[%c13, %c0_122, %c0_123] : memref<32x2x196xf32, #tpu.memory_space<vmem>>, vector<1x1x196xf32>
      %157 = vector.shape_cast %156 : vector<1x1x196xf32> to vector<1x196xf32>
      %158 = vector.shape_cast %155 : vector<1x196xf32> to vector<1x1x196xf32>
      tpu.vector_store %arg11[%c13, %c0_122, %c0_123], %158 {strides = array<i32>} : memref<32x2x196xf32, #tpu.memory_space<vmem>>, vector<1x1x196xf32>,
      %159 = vector.extract_strided_slice %102 {offsets = [14, 0], sizes = [1, 196], strides = [1, 1]} : vector<32x196xf32> to vector<1x196xf32>
      %c14 = arith.constant 14 : index
      %c0_124 = arith.constant 0 : index
      %c0_125 = arith.constant 0 : index
      %160 = vector.load %arg11[%c14, %c0_124, %c0_125] : memref<32x2x196xf32, #tpu.memory_space<vmem>>, vector<1x1x196xf32>
      %161 = vector.shape_cast %160 : vector<1x1x196xf32> to vector<1x196xf32>
      %162 = vector.shape_cast %159 : vector<1x196xf32> to vector<1x1x196xf32>
      tpu.vector_store %arg11[%c14, %c0_124, %c0_125], %162 {strides = array<i32>} : memref<32x2x196xf32, #tpu.memory_space<vmem>>, vector<1x1x196xf32>,
      %163 = vector.extract_strided_slice %102 {offsets = [15, 0], sizes = [1, 196], strides = [1, 1]} : vector<32x196xf32> to vector<1x196xf32>
      %c15 = arith.constant 15 : index
      %c0_126 = arith.constant 0 : index
      %c0_127 = arith.constant 0 : index
      %164 = vector.load %arg11[%c15, %c0_126, %c0_127] : memref<32x2x196xf32, #tpu.memory_space<vmem>>, vector<1x1x196xf32>
      %165 = vector.shape_cast %164 : vector<1x1x196xf32> to vector<1x196xf32>
      %166 = vector.shape_cast %163 : vector<1x196xf32> to vector<1x1x196xf32>
      tpu.vector_store %arg11[%c15, %c0_126, %c0_127], %166 {strides = array<i32>} : memref<32x2x196xf32, #tpu.memory_space<vmem>>, vector<1x1x196xf32>,
      %167 = vector.extract_strided_slice %102 {offsets = [16, 0], sizes = [1, 196], strides = [1, 1]} : vector<32x196xf32> to vector<1x196xf32>
      %c16 = arith.constant 16 : index
      %c0_128 = arith.constant 0 : index
      %c0_129 = arith.constant 0 : index
      %168 = vector.load %arg11[%c16, %c0_128, %c0_129] : memref<32x2x196xf32, #tpu.memory_space<vmem>>, vector<1x1x196xf32>
      %169 = vector.shape_cast %168 : vector<1x1x196xf32> to vector<1x196xf32>
      %170 = vector.shape_cast %167 : vector<1x196xf32> to vector<1x1x196xf32>
      tpu.vector_store %arg11[%c16, %c0_128, %c0_129], %170 {strides = array<i32>} : memref<32x2x196xf32, #tpu.memory_space<vmem>>, vector<1x1x196xf32>,
      %171 = vector.extract_strided_slice %102 {offsets = [17, 0], sizes = [1, 196], strides = [1, 1]} : vector<32x196xf32> to vector<1x196xf32>
      %c17 = arith.constant 17 : index
      %c0_130 = arith.constant 0 : index
      %c0_131 = arith.constant 0 : index
      %172 = vector.load %arg11[%c17, %c0_130, %c0_131] : memref<32x2x196xf32, #tpu.memory_space<vmem>>, vector<1x1x196xf32>
      %173 = vector.shape_cast %172 : vector<1x1x196xf32> to vector<1x196xf32>
      %174 = vector.shape_cast %171 : vector<1x196xf32> to vector<1x1x196xf32>
      tpu.vector_store %arg11[%c17, %c0_130, %c0_131], %174 {strides = array<i32>} : memref<32x2x196xf32, #tpu.memory_space<vmem>>, vector<1x1x196xf32>,
      %175 = vector.extract_strided_slice %102 {offsets = [18, 0], sizes = [1, 196], strides = [1, 1]} : vector<32x196xf32> to vector<1x196xf32>
      %c18 = arith.constant 18 : index
      %c0_132 = arith.constant 0 : index
      %c0_133 = arith.constant 0 : index
      %176 = vector.load %arg11[%c18, %c0_132, %c0_133] : memref<32x2x196xf32, #tpu.memory_space<vmem>>, vector<1x1x196xf32>
      %177 = vector.shape_cast %176 : vector<1x1x196xf32> to vector<1x196xf32>
      %178 = vector.shape_cast %175 : vector<1x196xf32> to vector<1x1x196xf32>
      tpu.vector_store %arg11[%c18, %c0_132, %c0_133], %178 {strides = array<i32>} : memref<32x2x196xf32, #tpu.memory_space<vmem>>, vector<1x1x196xf32>,
      %179 = vector.extract_strided_slice %102 {offsets = [19, 0], sizes = [1, 196], strides = [1, 1]} : vector<32x196xf32> to vector<1x196xf32>
      %c19 = arith.constant 19 : index
      %c0_134 = arith.constant 0 : index
      %c0_135 = arith.constant 0 : index
      %180 = vector.load %arg11[%c19, %c0_134, %c0_135] : memref<32x2x196xf32, #tpu.memory_space<vmem>>, vector<1x1x196xf32>
      %181 = vector.shape_cast %180 : vector<1x1x196xf32> to vector<1x196xf32>
      %182 = vector.shape_cast %179 : vector<1x196xf32> to vector<1x1x196xf32>
      tpu.vector_store %arg11[%c19, %c0_134, %c0_135], %182 {strides = array<i32>} : memref<32x2x196xf32, #tpu.memory_space<vmem>>, vector<1x1x196xf32>,
      %183 = vector.extract_strided_slice %102 {offsets = [20, 0], sizes = [1, 196], strides = [1, 1]} : vector<32x196xf32> to vector<1x196xf32>
      %c20 = arith.constant 20 : index
      %c0_136 = arith.constant 0 : index
      %c0_137 = arith.constant 0 : index
      %184 = vector.load %arg11[%c20, %c0_136, %c0_137] : memref<32x2x196xf32, #tpu.memory_space<vmem>>, vector<1x1x196xf32>
      %185 = vector.shape_cast %184 : vector<1x1x196xf32> to vector<1x196xf32>
      %186 = vector.shape_cast %183 : vector<1x196xf32> to vector<1x1x196xf32>
      tpu.vector_store %arg11[%c20, %c0_136, %c0_137], %186 {strides = array<i32>} : memref<32x2x196xf32, #tpu.memory_space<vmem>>, vector<1x1x196xf32>,
      %187 = vector.extract_strided_slice %102 {offsets = [21, 0], sizes = [1, 196], strides = [1, 1]} : vector<32x196xf32> to vector<1x196xf32>
      %c21 = arith.constant 21 : index
      %c0_138 = arith.constant 0 : index
      %c0_139 = arith.constant 0 : index
      %188 = vector.load %arg11[%c21, %c0_138, %c0_139] : memref<32x2x196xf32, #tpu.memory_space<vmem>>, vector<1x1x196xf32>
      %189 = vector.shape_cast %188 : vector<1x1x196xf32> to vector<1x196xf32>
      %190 = vector.shape_cast %187 : vector<1x196xf32> to vector<1x1x196xf32>
      tpu.vector_store %arg11[%c21, %c0_138, %c0_139], %190 {strides = array<i32>} : memref<32x2x196xf32, #tpu.memory_space<vmem>>, vector<1x1x196xf32>,
      %191 = vector.extract_strided_slice %102 {offsets = [22, 0], sizes = [1, 196], strides = [1, 1]} : vector<32x196xf32> to vector<1x196xf32>
      %c22 = arith.constant 22 : index
      %c0_140 = arith.constant 0 : index
      %c0_141 = arith.constant 0 : index
      %192 = vector.load %arg11[%c22, %c0_140, %c0_141] : memref<32x2x196xf32, #tpu.memory_space<vmem>>, vector<1x1x196xf32>
      %193 = vector.shape_cast %192 : vector<1x1x196xf32> to vector<1x196xf32>
      %194 = vector.shape_cast %191 : vector<1x196xf32> to vector<1x1x196xf32>
      tpu.vector_store %arg11[%c22, %c0_140, %c0_141], %194 {strides = array<i32>} : memref<32x2x196xf32, #tpu.memory_space<vmem>>, vector<1x1x196xf32>,
      %195 = vector.extract_strided_slice %102 {offsets = [23, 0], sizes = [1, 196], strides = [1, 1]} : vector<32x196xf32> to vector<1x196xf32>
      %c23 = arith.constant 23 : index
      %c0_142 = arith.constant 0 : index
      %c0_143 = arith.constant 0 : index
      %196 = vector.load %arg11[%c23, %c0_142, %c0_143] : memref<32x2x196xf32, #tpu.memory_space<vmem>>, vector<1x1x196xf32>
      %197 = vector.shape_cast %196 : vector<1x1x196xf32> to vector<1x196xf32>
      %198 = vector.shape_cast %195 : vector<1x196xf32> to vector<1x1x196xf32>
      tpu.vector_store %arg11[%c23, %c0_142, %c0_143], %198 {strides = array<i32>} : memref<32x2x196xf32, #tpu.memory_space<vmem>>, vector<1x1x196xf32>,
      %199 = vector.extract_strided_slice %102 {offsets = [24, 0], sizes = [1, 196], strides = [1, 1]} : vector<32x196xf32> to vector<1x196xf32>
      %c24 = arith.constant 24 : index
      %c0_144 = arith.constant 0 : index
      %c0_145 = arith.constant 0 : index
      %200 = vector.load %arg11[%c24, %c0_144, %c0_145] : memref<32x2x196xf32, #tpu.memory_space<vmem>>, vector<1x1x196xf32>
      %201 = vector.shape_cast %200 : vector<1x1x196xf32> to vector<1x196xf32>
      %202 = vector.shape_cast %199 : vector<1x196xf32> to vector<1x1x196xf32>
      tpu.vector_store %arg11[%c24, %c0_144, %c0_145], %202 {strides = array<i32>} : memref<32x2x196xf32, #tpu.memory_space<vmem>>, vector<1x1x196xf32>,
      %203 = vector.extract_strided_slice %102 {offsets = [25, 0], sizes = [1, 196], strides = [1, 1]} : vector<32x196xf32> to vector<1x196xf32>
      %c25 = arith.constant 25 : index
      %c0_146 = arith.constant 0 : index
      %c0_147 = arith.constant 0 : index
      %204 = vector.load %arg11[%c25, %c0_146, %c0_147] : memref<32x2x196xf32, #tpu.memory_space<vmem>>, vector<1x1x196xf32>
      %205 = vector.shape_cast %204 : vector<1x1x196xf32> to vector<1x196xf32>
      %206 = vector.shape_cast %203 : vector<1x196xf32> to vector<1x1x196xf32>
      tpu.vector_store %arg11[%c25, %c0_146, %c0_147], %206 {strides = array<i32>} : memref<32x2x196xf32, #tpu.memory_space<vmem>>, vector<1x1x196xf32>,
      %207 = vector.extract_strided_slice %102 {offsets = [26, 0], sizes = [1, 196], strides = [1, 1]} : vector<32x196xf32> to vector<1x196xf32>
      %c26 = arith.constant 26 : index
      %c0_148 = arith.constant 0 : index
      %c0_149 = arith.constant 0 : index
      %208 = vector.load %arg11[%c26, %c0_148, %c0_149] : memref<32x2x196xf32, #tpu.memory_space<vmem>>, vector<1x1x196xf32>
      %209 = vector.shape_cast %208 : vector<1x1x196xf32> to vector<1x196xf32>
      %210 = vector.shape_cast %207 : vector<1x196xf32> to vector<1x1x196xf32>
      tpu.vector_store %arg11[%c26, %c0_148, %c0_149], %210 {strides = array<i32>} : memref<32x2x196xf32, #tpu.memory_space<vmem>>, vector<1x1x196xf32>,
      %211 = vector.extract_strided_slice %102 {offsets = [27, 0], sizes = [1, 196], strides = [1, 1]} : vector<32x196xf32> to vector<1x196xf32>
      %c27 = arith.constant 27 : index
      %c0_150 = arith.constant 0 : index
      %c0_151 = arith.constant 0 : index
      %212 = vector.load %arg11[%c27, %c0_150, %c0_151] : memref<32x2x196xf32, #tpu.memory_space<vmem>>, vector<1x1x196xf32>
      %213 = vector.shape_cast %212 : vector<1x1x196xf32> to vector<1x196xf32>
      %214 = vector.shape_cast %211 : vector<1x196xf32> to vector<1x1x196xf32>
      tpu.vector_store %arg11[%c27, %c0_150, %c0_151], %214 {strides = array<i32>} : memref<32x2x196xf32, #tpu.memory_space<vmem>>, vector<1x1x196xf32>,
      %215 = vector.extract_strided_slice %102 {offsets = [28, 0], sizes = [1, 196], strides = [1, 1]} : vector<32x196xf32> to vector<1x196xf32>
      %c28 = arith.constant 28 : index
      %c0_152 = arith.constant 0 : index
      %c0_153 = arith.constant 0 : index
      %216 = vector.load %arg11[%c28, %c0_152, %c0_153] : memref<32x2x196xf32, #tpu.memory_space<vmem>>, vector<1x1x196xf32>
      %217 = vector.shape_cast %216 : vector<1x1x196xf32> to vector<1x196xf32>
      %218 = vector.shape_cast %215 : vector<1x196xf32> to vector<1x1x196xf32>
      tpu.vector_store %arg11[%c28, %c0_152, %c0_153], %218 {strides = array<i32>} : memref<32x2x196xf32, #tpu.memory_space<vmem>>, vector<1x1x196xf32>,
      %219 = vector.extract_strided_slice %102 {offsets = [29, 0], sizes = [1, 196], strides = [1, 1]} : vector<32x196xf32> to vector<1x196xf32>
      %c29 = arith.constant 29 : index
      %c0_154 = arith.constant 0 : index
      %c0_155 = arith.constant 0 : index
      %220 = vector.load %arg11[%c29, %c0_154, %c0_155] : memref<32x2x196xf32, #tpu.memory_space<vmem>>, vector<1x1x196xf32>
      %221 = vector.shape_cast %220 : vector<1x1x196xf32> to vector<1x196xf32>
      %222 = vector.shape_cast %219 : vector<1x196xf32> to vector<1x1x196xf32>
      tpu.vector_store %arg11[%c29, %c0_154, %c0_155], %222 {strides = array<i32>} : memref<32x2x196xf32, #tpu.memory_space<vmem>>, vector<1x1x196xf32>,
      %223 = vector.extract_strided_slice %102 {offsets = [30, 0], sizes = [1, 196], strides = [1, 1]} : vector<32x196xf32> to vector<1x196xf32>
      %c30 = arith.constant 30 : index
      %c0_156 = arith.constant 0 : index
      %c0_157 = arith.constant 0 : index
      %224 = vector.load %arg11[%c30, %c0_156, %c0_157] : memref<32x2x196xf32, #tpu.memory_space<vmem>>, vector<1x1x196xf32>
      %225 = vector.shape_cast %224 : vector<1x1x196xf32> to vector<1x196xf32>
      %226 = vector.shape_cast %223 : vector<1x196xf32> to vector<1x1x196xf32>
      tpu.vector_store %arg11[%c30, %c0_156, %c0_157], %226 {strides = array<i32>} : memref<32x2x196xf32, #tpu.memory_space<vmem>>, vector<1x1x196xf32>,
      %227 = vector.extract_strided_slice %102 {offsets = [31, 0], sizes = [1, 196], strides = [1, 1]} : vector<32x196xf32> to vector<1x196xf32>
      %c31 = arith.constant 31 : index
      %c0_158 = arith.constant 0 : index
      %c0_159 = arith.constant 0 : index
      %228 = vector.load %arg11[%c31, %c0_158, %c0_159] : memref<32x2x196xf32, #tpu.memory_space<vmem>>, vector<1x1x196xf32>
      %229 = vector.shape_cast %228 : vector<1x1x196xf32> to vector<1x196xf32>
      %230 = vector.shape_cast %227 : vector<1x196xf32> to vector<1x1x196xf32>
      tpu.vector_store %arg11[%c31, %c0_158, %c0_159], %230 {strides = array<i32>} : memref<32x2x196xf32, #tpu.memory_space<vmem>>, vector<1x1x196xf32>,
      %c0_160 = arith.constant 0 : index
      %c1_161 = arith.constant 1 : index
      %c0_162 = arith.constant 0 : index
      %c0_163 = arith.constant 0 : index
      %231 = vector.load %arg1[%c0_160, %c1_161, %c0_162, %c0_163] : memref<4x2x9x196xf32, #tpu.memory_space<vmem>>, vector<1x1x9x196xf32>
      %232 = vector.shape_cast %231 : vector<1x1x9x196xf32> to vector<9x196xf32>
      %cst_164 = arith.constant dense<0.000000e+00> : vector<32x196xf32>
      %233 = tpu.matmul %82, %232, %cst_164 {dimension_numbers = #tpu.dot_dimension_numbers<[1], [0], [0], [1], [0, 0, 1, 1], [], []>} : vector<32x9xf32>, vector<9x196xf32>, vector<32x196xf32> -> vector<32x196xf32>
      %c1_165 = arith.constant 1 : index
      %c1_166 = arith.constant 1 : index
      %c0_167 = arith.constant 0 : index
      %c0_168 = arith.constant 0 : index
      %234 = vector.load %arg1[%c1_165, %c1_166, %c0_167, %c0_168] : memref<4x2x9x196xf32, #tpu.memory_space<vmem>>, vector<1x1x9x196xf32>
      %235 = vector.shape_cast %234 : vector<1x1x9x196xf32> to vector<9x196xf32>
      %cst_169 = arith.constant dense<0.000000e+00> : vector<32x196xf32>
      %236 = tpu.matmul %82, %235, %cst_169 {dimension_numbers = #tpu.dot_dimension_numbers<[1], [0], [0], [1], [0, 0, 1, 1], [], []>} : vector<32x9xf32>, vector<9x196xf32>, vector<32x196xf32> -> vector<32x196xf32>
      %c2_170 = arith.constant 2 : index
      %c1_171 = arith.constant 1 : index
      %c0_172 = arith.constant 0 : index
      %c0_173 = arith.constant 0 : index
      %237 = vector.load %arg1[%c2_170, %c1_171, %c0_172, %c0_173] : memref<4x2x9x196xf32, #tpu.memory_space<vmem>>, vector<1x1x9x196xf32>
      %238 = vector.shape_cast %237 : vector<1x1x9x196xf32> to vector<9x196xf32>
      %cst_174 = arith.constant dense<0.000000e+00> : vector<32x196xf32>
      %239 = tpu.matmul %82, %238, %cst_174 {dimension_numbers = #tpu.dot_dimension_numbers<[1], [0], [0], [1], [0, 0, 1, 1], [], []>} : vector<32x9xf32>, vector<9x196xf32>, vector<32x196xf32> -> vector<32x196xf32>
      %c3_175 = arith.constant 3 : index
      %c1_176 = arith.constant 1 : index
      %c0_177 = arith.constant 0 : index
      %c0_178 = arith.constant 0 : index
      %240 = vector.load %arg1[%c3_175, %c1_176, %c0_177, %c0_178] : memref<4x2x9x196xf32, #tpu.memory_space<vmem>>, vector<1x1x9x196xf32>
      %241 = vector.shape_cast %240 : vector<1x1x9x196xf32> to vector<9x196xf32>
      %cst_179 = arith.constant dense<0.000000e+00> : vector<32x196xf32>
      %242 = tpu.matmul %82, %241, %cst_179 {dimension_numbers = #tpu.dot_dimension_numbers<[1], [0], [0], [1], [0, 0, 1, 1], [], []>} : vector<32x9xf32>, vector<9x196xf32>, vector<32x196xf32> -> vector<32x196xf32>
      %243 = arith.maximumf %233, %236 : vector<32x196xf32>
      %244 = arith.maximumf %239, %242 : vector<32x196xf32>
      %245 = arith.maximumf %243, %244 : vector<32x196xf32>
      %246 = vector.broadcast %83 : vector<32x1xf32> to vector<32x196xf32>
      %247 = arith.addf %245, %246 : vector<32x196xf32>
      %cst_180 = arith.constant 0.000000e+00 : f32
      %248 = vector.broadcast %cst_180 : f32 to vector<32x196xf32>
      %249 = arith.maximumf %247, %248 : vector<32x196xf32>
      %250 = vector.extract_strided_slice %249 {offsets = [0, 0], sizes = [1, 196], strides = [1, 1]} : vector<32x196xf32> to vector<1x196xf32>
      %c0_181 = arith.constant 0 : index
      %c1_182 = arith.constant 1 : index
      %c0_183 = arith.constant 0 : index
      %251 = vector.load %arg11[%c0_181, %c1_182, %c0_183] : memref<32x2x196xf32, #tpu.memory_space<vmem>>, vector<1x1x196xf32>
      %252 = vector.shape_cast %251 : vector<1x1x196xf32> to vector<1x196xf32>
      %253 = vector.shape_cast %250 : vector<1x196xf32> to vector<1x1x196xf32>
      tpu.vector_store %arg11[%c0_181, %c1_182, %c0_183], %253 {strides = array<i32>} : memref<32x2x196xf32, #tpu.memory_space<vmem>>, vector<1x1x196xf32>,
      %254 = vector.extract_strided_slice %249 {offsets = [1, 0], sizes = [1, 196], strides = [1, 1]} : vector<32x196xf32> to vector<1x196xf32>
      %c1_184 = arith.constant 1 : index
      %c1_185 = arith.constant 1 : index
      %c0_186 = arith.constant 0 : index
      %255 = vector.load %arg11[%c1_184, %c1_185, %c0_186] : memref<32x2x196xf32, #tpu.memory_space<vmem>>, vector<1x1x196xf32>
      %256 = vector.shape_cast %255 : vector<1x1x196xf32> to vector<1x196xf32>
      %257 = vector.shape_cast %254 : vector<1x196xf32> to vector<1x1x196xf32>
      tpu.vector_store %arg11[%c1_184, %c1_185, %c0_186], %257 {strides = array<i32>} : memref<32x2x196xf32, #tpu.memory_space<vmem>>, vector<1x1x196xf32>,
      %258 = vector.extract_strided_slice %249 {offsets = [2, 0], sizes = [1, 196], strides = [1, 1]} : vector<32x196xf32> to vector<1x196xf32>
      %c2_187 = arith.constant 2 : index
      %c1_188 = arith.constant 1 : index
      %c0_189 = arith.constant 0 : index
      %259 = vector.load %arg11[%c2_187, %c1_188, %c0_189] : memref<32x2x196xf32, #tpu.memory_space<vmem>>, vector<1x1x196xf32>
      %260 = vector.shape_cast %259 : vector<1x1x196xf32> to vector<1x196xf32>
      %261 = vector.shape_cast %258 : vector<1x196xf32> to vector<1x1x196xf32>
      tpu.vector_store %arg11[%c2_187, %c1_188, %c0_189], %261 {strides = array<i32>} : memref<32x2x196xf32, #tpu.memory_space<vmem>>, vector<1x1x196xf32>,
      %262 = vector.extract_strided_slice %249 {offsets = [3, 0], sizes = [1, 196], strides = [1, 1]} : vector<32x196xf32> to vector<1x196xf32>
      %c3_190 = arith.constant 3 : index
      %c1_191 = arith.constant 1 : index
      %c0_192 = arith.constant 0 : index
      %263 = vector.load %arg11[%c3_190, %c1_191, %c0_192] : memref<32x2x196xf32, #tpu.memory_space<vmem>>, vector<1x1x196xf32>
      %264 = vector.shape_cast %263 : vector<1x1x196xf32> to vector<1x196xf32>
      %265 = vector.shape_cast %262 : vector<1x196xf32> to vector<1x1x196xf32>
      tpu.vector_store %arg11[%c3_190, %c1_191, %c0_192], %265 {strides = array<i32>} : memref<32x2x196xf32, #tpu.memory_space<vmem>>, vector<1x1x196xf32>,
      %266 = vector.extract_strided_slice %249 {offsets = [4, 0], sizes = [1, 196], strides = [1, 1]} : vector<32x196xf32> to vector<1x196xf32>
      %c4_193 = arith.constant 4 : index
      %c1_194 = arith.constant 1 : index
      %c0_195 = arith.constant 0 : index
      %267 = vector.load %arg11[%c4_193, %c1_194, %c0_195] : memref<32x2x196xf32, #tpu.memory_space<vmem>>, vector<1x1x196xf32>
      %268 = vector.shape_cast %267 : vector<1x1x196xf32> to vector<1x196xf32>
      %269 = vector.shape_cast %266 : vector<1x196xf32> to vector<1x1x196xf32>
      tpu.vector_store %arg11[%c4_193, %c1_194, %c0_195], %269 {strides = array<i32>} : memref<32x2x196xf32, #tpu.memory_space<vmem>>, vector<1x1x196xf32>,
      %270 = vector.extract_strided_slice %249 {offsets = [5, 0], sizes = [1, 196], strides = [1, 1]} : vector<32x196xf32> to vector<1x196xf32>
      %c5_196 = arith.constant 5 : index
      %c1_197 = arith.constant 1 : index
      %c0_198 = arith.constant 0 : index
      %271 = vector.load %arg11[%c5_196, %c1_197, %c0_198] : memref<32x2x196xf32, #tpu.memory_space<vmem>>, vector<1x1x196xf32>
      %272 = vector.shape_cast %271 : vector<1x1x196xf32> to vector<1x196xf32>
      %273 = vector.shape_cast %270 : vector<1x196xf32> to vector<1x1x196xf32>
      tpu.vector_store %arg11[%c5_196, %c1_197, %c0_198], %273 {strides = array<i32>} : memref<32x2x196xf32, #tpu.memory_space<vmem>>, vector<1x1x196xf32>,
      %274 = vector.extract_strided_slice %249 {offsets = [6, 0], sizes = [1, 196], strides = [1, 1]} : vector<32x196xf32> to vector<1x196xf32>
      %c6_199 = arith.constant 6 : index
      %c1_200 = arith.constant 1 : index
      %c0_201 = arith.constant 0 : index
      %275 = vector.load %arg11[%c6_199, %c1_200, %c0_201] : memref<32x2x196xf32, #tpu.memory_space<vmem>>, vector<1x1x196xf32>
      %276 = vector.shape_cast %275 : vector<1x1x196xf32> to vector<1x196xf32>
      %277 = vector.shape_cast %274 : vector<1x196xf32> to vector<1x1x196xf32>
      tpu.vector_store %arg11[%c6_199, %c1_200, %c0_201], %277 {strides = array<i32>} : memref<32x2x196xf32, #tpu.memory_space<vmem>>, vector<1x1x196xf32>,
      %278 = vector.extract_strided_slice %249 {offsets = [7, 0], sizes = [1, 196], strides = [1, 1]} : vector<32x196xf32> to vector<1x196xf32>
      %c7_202 = arith.constant 7 : index
      %c1_203 = arith.constant 1 : index
      %c0_204 = arith.constant 0 : index
      %279 = vector.load %arg11[%c7_202, %c1_203, %c0_204] : memref<32x2x196xf32, #tpu.memory_space<vmem>>, vector<1x1x196xf32>
      %280 = vector.shape_cast %279 : vector<1x1x196xf32> to vector<1x196xf32>
      %281 = vector.shape_cast %278 : vector<1x196xf32> to vector<1x1x196xf32>
      tpu.vector_store %arg11[%c7_202, %c1_203, %c0_204], %281 {strides = array<i32>} : memref<32x2x196xf32, #tpu.memory_space<vmem>>, vector<1x1x196xf32>,
      %282 = vector.extract_strided_slice %249 {offsets = [8, 0], sizes = [1, 196], strides = [1, 1]} : vector<32x196xf32> to vector<1x196xf32>
      %c8_205 = arith.constant 8 : index
      %c1_206 = arith.constant 1 : index
      %c0_207 = arith.constant 0 : index
      %283 = vector.load %arg11[%c8_205, %c1_206, %c0_207] : memref<32x2x196xf32, #tpu.memory_space<vmem>>, vector<1x1x196xf32>
      %284 = vector.shape_cast %283 : vector<1x1x196xf32> to vector<1x196xf32>
      %285 = vector.shape_cast %282 : vector<1x196xf32> to vector<1x1x196xf32>
      tpu.vector_store %arg11[%c8_205, %c1_206, %c0_207], %285 {strides = array<i32>} : memref<32x2x196xf32, #tpu.memory_space<vmem>>, vector<1x1x196xf32>,
      %286 = vector.extract_strided_slice %249 {offsets = [9, 0], sizes = [1, 196], strides = [1, 1]} : vector<32x196xf32> to vector<1x196xf32>
      %c9_208 = arith.constant 9 : index
      %c1_209 = arith.constant 1 : index
      %c0_210 = arith.constant 0 : index
      %287 = vector.load %arg11[%c9_208, %c1_209, %c0_210] : memref<32x2x196xf32, #tpu.memory_space<vmem>>, vector<1x1x196xf32>
      %288 = vector.shape_cast %287 : vector<1x1x196xf32> to vector<1x196xf32>
      %289 = vector.shape_cast %286 : vector<1x196xf32> to vector<1x1x196xf32>
      tpu.vector_store %arg11[%c9_208, %c1_209, %c0_210], %289 {strides = array<i32>} : memref<32x2x196xf32, #tpu.memory_space<vmem>>, vector<1x1x196xf32>,
      %290 = vector.extract_strided_slice %249 {offsets = [10, 0], sizes = [1, 196], strides = [1, 1]} : vector<32x196xf32> to vector<1x196xf32>
      %c10_211 = arith.constant 10 : index
      %c1_212 = arith.constant 1 : index
      %c0_213 = arith.constant 0 : index
      %291 = vector.load %arg11[%c10_211, %c1_212, %c0_213] : memref<32x2x196xf32, #tpu.memory_space<vmem>>, vector<1x1x196xf32>
      %292 = vector.shape_cast %291 : vector<1x1x196xf32> to vector<1x196xf32>
      %293 = vector.shape_cast %290 : vector<1x196xf32> to vector<1x1x196xf32>
      tpu.vector_store %arg11[%c10_211, %c1_212, %c0_213], %293 {strides = array<i32>} : memref<32x2x196xf32, #tpu.memory_space<vmem>>, vector<1x1x196xf32>,
      %294 = vector.extract_strided_slice %249 {offsets = [11, 0], sizes = [1, 196], strides = [1, 1]} : vector<32x196xf32> to vector<1x196xf32>
      %c11_214 = arith.constant 11 : index
      %c1_215 = arith.constant 1 : index
      %c0_216 = arith.constant 0 : index
      %295 = vector.load %arg11[%c11_214, %c1_215, %c0_216] : memref<32x2x196xf32, #tpu.memory_space<vmem>>, vector<1x1x196xf32>
      %296 = vector.shape_cast %295 : vector<1x1x196xf32> to vector<1x196xf32>
      %297 = vector.shape_cast %294 : vector<1x196xf32> to vector<1x1x196xf32>
      tpu.vector_store %arg11[%c11_214, %c1_215, %c0_216], %297 {strides = array<i32>} : memref<32x2x196xf32, #tpu.memory_space<vmem>>, vector<1x1x196xf32>,
      %298 = vector.extract_strided_slice %249 {offsets = [12, 0], sizes = [1, 196], strides = [1, 1]} : vector<32x196xf32> to vector<1x196xf32>
      %c12_217 = arith.constant 12 : index
      %c1_218 = arith.constant 1 : index
      %c0_219 = arith.constant 0 : index
      %299 = vector.load %arg11[%c12_217, %c1_218, %c0_219] : memref<32x2x196xf32, #tpu.memory_space<vmem>>, vector<1x1x196xf32>
      %300 = vector.shape_cast %299 : vector<1x1x196xf32> to vector<1x196xf32>
      %301 = vector.shape_cast %298 : vector<1x196xf32> to vector<1x1x196xf32>
      tpu.vector_store %arg11[%c12_217, %c1_218, %c0_219], %301 {strides = array<i32>} : memref<32x2x196xf32, #tpu.memory_space<vmem>>, vector<1x1x196xf32>,
      %302 = vector.extract_strided_slice %249 {offsets = [13, 0], sizes = [1, 196], strides = [1, 1]} : vector<32x196xf32> to vector<1x196xf32>
      %c13_220 = arith.constant 13 : index
      %c1_221 = arith.constant 1 : index
      %c0_222 = arith.constant 0 : index
      %303 = vector.load %arg11[%c13_220, %c1_221, %c0_222] : memref<32x2x196xf32, #tpu.memory_space<vmem>>, vector<1x1x196xf32>
      %304 = vector.shape_cast %303 : vector<1x1x196xf32> to vector<1x196xf32>
      %305 = vector.shape_cast %302 : vector<1x196xf32> to vector<1x1x196xf32>
      tpu.vector_store %arg11[%c13_220, %c1_221, %c0_222], %305 {strides = array<i32>} : memref<32x2x196xf32, #tpu.memory_space<vmem>>, vector<1x1x196xf32>,
      %306 = vector.extract_strided_slice %249 {offsets = [14, 0], sizes = [1, 196], strides = [1, 1]} : vector<32x196xf32> to vector<1x196xf32>
      %c14_223 = arith.constant 14 : index
      %c1_224 = arith.constant 1 : index
      %c0_225 = arith.constant 0 : index
      %307 = vector.load %arg11[%c14_223, %c1_224, %c0_225] : memref<32x2x196xf32, #tpu.memory_space<vmem>>, vector<1x1x196xf32>
      %308 = vector.shape_cast %307 : vector<1x1x196xf32> to vector<1x196xf32>
      %309 = vector.shape_cast %306 : vector<1x196xf32> to vector<1x1x196xf32>
      tpu.vector_store %arg11[%c14_223, %c1_224, %c0_225], %309 {strides = array<i32>} : memref<32x2x196xf32, #tpu.memory_space<vmem>>, vector<1x1x196xf32>,
      %310 = vector.extract_strided_slice %249 {offsets = [15, 0], sizes = [1, 196], strides = [1, 1]} : vector<32x196xf32> to vector<1x196xf32>
      %c15_226 = arith.constant 15 : index
      %c1_227 = arith.constant 1 : index
      %c0_228 = arith.constant 0 : index
      %311 = vector.load %arg11[%c15_226, %c1_227, %c0_228] : memref<32x2x196xf32, #tpu.memory_space<vmem>>, vector<1x1x196xf32>
      %312 = vector.shape_cast %311 : vector<1x1x196xf32> to vector<1x196xf32>
      %313 = vector.shape_cast %310 : vector<1x196xf32> to vector<1x1x196xf32>
      tpu.vector_store %arg11[%c15_226, %c1_227, %c0_228], %313 {strides = array<i32>} : memref<32x2x196xf32, #tpu.memory_space<vmem>>, vector<1x1x196xf32>,
      %314 = vector.extract_strided_slice %249 {offsets = [16, 0], sizes = [1, 196], strides = [1, 1]} : vector<32x196xf32> to vector<1x196xf32>
      %c16_229 = arith.constant 16 : index
      %c1_230 = arith.constant 1 : index
      %c0_231 = arith.constant 0 : index
      %315 = vector.load %arg11[%c16_229, %c1_230, %c0_231] : memref<32x2x196xf32, #tpu.memory_space<vmem>>, vector<1x1x196xf32>
      %316 = vector.shape_cast %315 : vector<1x1x196xf32> to vector<1x196xf32>
      %317 = vector.shape_cast %314 : vector<1x196xf32> to vector<1x1x196xf32>
      tpu.vector_store %arg11[%c16_229, %c1_230, %c0_231], %317 {strides = array<i32>} : memref<32x2x196xf32, #tpu.memory_space<vmem>>, vector<1x1x196xf32>,
      %318 = vector.extract_strided_slice %249 {offsets = [17, 0], sizes = [1, 196], strides = [1, 1]} : vector<32x196xf32> to vector<1x196xf32>
      %c17_232 = arith.constant 17 : index
      %c1_233 = arith.constant 1 : index
      %c0_234 = arith.constant 0 : index
      %319 = vector.load %arg11[%c17_232, %c1_233, %c0_234] : memref<32x2x196xf32, #tpu.memory_space<vmem>>, vector<1x1x196xf32>
      %320 = vector.shape_cast %319 : vector<1x1x196xf32> to vector<1x196xf32>
      %321 = vector.shape_cast %318 : vector<1x196xf32> to vector<1x1x196xf32>
      tpu.vector_store %arg11[%c17_232, %c1_233, %c0_234], %321 {strides = array<i32>} : memref<32x2x196xf32, #tpu.memory_space<vmem>>, vector<1x1x196xf32>,
      %322 = vector.extract_strided_slice %249 {offsets = [18, 0], sizes = [1, 196], strides = [1, 1]} : vector<32x196xf32> to vector<1x196xf32>
      %c18_235 = arith.constant 18 : index
      %c1_236 = arith.constant 1 : index
      %c0_237 = arith.constant 0 : index
      %323 = vector.load %arg11[%c18_235, %c1_236, %c0_237] : memref<32x2x196xf32, #tpu.memory_space<vmem>>, vector<1x1x196xf32>
      %324 = vector.shape_cast %323 : vector<1x1x196xf32> to vector<1x196xf32>
      %325 = vector.shape_cast %322 : vector<1x196xf32> to vector<1x1x196xf32>
      tpu.vector_store %arg11[%c18_235, %c1_236, %c0_237], %325 {strides = array<i32>} : memref<32x2x196xf32, #tpu.memory_space<vmem>>, vector<1x1x196xf32>,
      %326 = vector.extract_strided_slice %249 {offsets = [19, 0], sizes = [1, 196], strides = [1, 1]} : vector<32x196xf32> to vector<1x196xf32>
      %c19_238 = arith.constant 19 : index
      %c1_239 = arith.constant 1 : index
      %c0_240 = arith.constant 0 : index
      %327 = vector.load %arg11[%c19_238, %c1_239, %c0_240] : memref<32x2x196xf32, #tpu.memory_space<vmem>>, vector<1x1x196xf32>
      %328 = vector.shape_cast %327 : vector<1x1x196xf32> to vector<1x196xf32>
      %329 = vector.shape_cast %326 : vector<1x196xf32> to vector<1x1x196xf32>
      tpu.vector_store %arg11[%c19_238, %c1_239, %c0_240], %329 {strides = array<i32>} : memref<32x2x196xf32, #tpu.memory_space<vmem>>, vector<1x1x196xf32>,
      %330 = vector.extract_strided_slice %249 {offsets = [20, 0], sizes = [1, 196], strides = [1, 1]} : vector<32x196xf32> to vector<1x196xf32>
      %c20_241 = arith.constant 20 : index
      %c1_242 = arith.constant 1 : index
      %c0_243 = arith.constant 0 : index
      %331 = vector.load %arg11[%c20_241, %c1_242, %c0_243] : memref<32x2x196xf32, #tpu.memory_space<vmem>>, vector<1x1x196xf32>
      %332 = vector.shape_cast %331 : vector<1x1x196xf32> to vector<1x196xf32>
      %333 = vector.shape_cast %330 : vector<1x196xf32> to vector<1x1x196xf32>
      tpu.vector_store %arg11[%c20_241, %c1_242, %c0_243], %333 {strides = array<i32>} : memref<32x2x196xf32, #tpu.memory_space<vmem>>, vector<1x1x196xf32>,
      %334 = vector.extract_strided_slice %249 {offsets = [21, 0], sizes = [1, 196], strides = [1, 1]} : vector<32x196xf32> to vector<1x196xf32>
      %c21_244 = arith.constant 21 : index
      %c1_245 = arith.constant 1 : index
      %c0_246 = arith.constant 0 : index
      %335 = vector.load %arg11[%c21_244, %c1_245, %c0_246] : memref<32x2x196xf32, #tpu.memory_space<vmem>>, vector<1x1x196xf32>
      %336 = vector.shape_cast %335 : vector<1x1x196xf32> to vector<1x196xf32>
      %337 = vector.shape_cast %334 : vector<1x196xf32> to vector<1x1x196xf32>
      tpu.vector_store %arg11[%c21_244, %c1_245, %c0_246], %337 {strides = array<i32>} : memref<32x2x196xf32, #tpu.memory_space<vmem>>, vector<1x1x196xf32>,
      %338 = vector.extract_strided_slice %249 {offsets = [22, 0], sizes = [1, 196], strides = [1, 1]} : vector<32x196xf32> to vector<1x196xf32>
      %c22_247 = arith.constant 22 : index
      %c1_248 = arith.constant 1 : index
      %c0_249 = arith.constant 0 : index
      %339 = vector.load %arg11[%c22_247, %c1_248, %c0_249] : memref<32x2x196xf32, #tpu.memory_space<vmem>>, vector<1x1x196xf32>
      %340 = vector.shape_cast %339 : vector<1x1x196xf32> to vector<1x196xf32>
      %341 = vector.shape_cast %338 : vector<1x196xf32> to vector<1x1x196xf32>
      tpu.vector_store %arg11[%c22_247, %c1_248, %c0_249], %341 {strides = array<i32>} : memref<32x2x196xf32, #tpu.memory_space<vmem>>, vector<1x1x196xf32>,
      %342 = vector.extract_strided_slice %249 {offsets = [23, 0], sizes = [1, 196], strides = [1, 1]} : vector<32x196xf32> to vector<1x196xf32>
      %c23_250 = arith.constant 23 : index
      %c1_251 = arith.constant 1 : index
      %c0_252 = arith.constant 0 : index
      %343 = vector.load %arg11[%c23_250, %c1_251, %c0_252] : memref<32x2x196xf32, #tpu.memory_space<vmem>>, vector<1x1x196xf32>
      %344 = vector.shape_cast %343 : vector<1x1x196xf32> to vector<1x196xf32>
      %345 = vector.shape_cast %342 : vector<1x196xf32> to vector<1x1x196xf32>
      tpu.vector_store %arg11[%c23_250, %c1_251, %c0_252], %345 {strides = array<i32>} : memref<32x2x196xf32, #tpu.memory_space<vmem>>, vector<1x1x196xf32>,
      %346 = vector.extract_strided_slice %249 {offsets = [24, 0], sizes = [1, 196], strides = [1, 1]} : vector<32x196xf32> to vector<1x196xf32>
      %c24_253 = arith.constant 24 : index
      %c1_254 = arith.constant 1 : index
      %c0_255 = arith.constant 0 : index
      %347 = vector.load %arg11[%c24_253, %c1_254, %c0_255] : memref<32x2x196xf32, #tpu.memory_space<vmem>>, vector<1x1x196xf32>
      %348 = vector.shape_cast %347 : vector<1x1x196xf32> to vector<1x196xf32>
      %349 = vector.shape_cast %346 : vector<1x196xf32> to vector<1x1x196xf32>
      tpu.vector_store %arg11[%c24_253, %c1_254, %c0_255], %349 {strides = array<i32>} : memref<32x2x196xf32, #tpu.memory_space<vmem>>, vector<1x1x196xf32>,
      %350 = vector.extract_strided_slice %249 {offsets = [25, 0], sizes = [1, 196], strides = [1, 1]} : vector<32x196xf32> to vector<1x196xf32>
      %c25_256 = arith.constant 25 : index
      %c1_257 = arith.constant 1 : index
      %c0_258 = arith.constant 0 : index
      %351 = vector.load %arg11[%c25_256, %c1_257, %c0_258] : memref<32x2x196xf32, #tpu.memory_space<vmem>>, vector<1x1x196xf32>
      %352 = vector.shape_cast %351 : vector<1x1x196xf32> to vector<1x196xf32>
      %353 = vector.shape_cast %350 : vector<1x196xf32> to vector<1x1x196xf32>
      tpu.vector_store %arg11[%c25_256, %c1_257, %c0_258], %353 {strides = array<i32>} : memref<32x2x196xf32, #tpu.memory_space<vmem>>, vector<1x1x196xf32>,
      %354 = vector.extract_strided_slice %249 {offsets = [26, 0], sizes = [1, 196], strides = [1, 1]} : vector<32x196xf32> to vector<1x196xf32>
      %c26_259 = arith.constant 26 : index
      %c1_260 = arith.constant 1 : index
      %c0_261 = arith.constant 0 : index
      %355 = vector.load %arg11[%c26_259, %c1_260, %c0_261] : memref<32x2x196xf32, #tpu.memory_space<vmem>>, vector<1x1x196xf32>
      %356 = vector.shape_cast %355 : vector<1x1x196xf32> to vector<1x196xf32>
      %357 = vector.shape_cast %354 : vector<1x196xf32> to vector<1x1x196xf32>
      tpu.vector_store %arg11[%c26_259, %c1_260, %c0_261], %357 {strides = array<i32>} : memref<32x2x196xf32, #tpu.memory_space<vmem>>, vector<1x1x196xf32>,
      %358 = vector.extract_strided_slice %249 {offsets = [27, 0], sizes = [1, 196], strides = [1, 1]} : vector<32x196xf32> to vector<1x196xf32>
      %c27_262 = arith.constant 27 : index
      %c1_263 = arith.constant 1 : index
      %c0_264 = arith.constant 0 : index
      %359 = vector.load %arg11[%c27_262, %c1_263, %c0_264] : memref<32x2x196xf32, #tpu.memory_space<vmem>>, vector<1x1x196xf32>
      %360 = vector.shape_cast %359 : vector<1x1x196xf32> to vector<1x196xf32>
      %361 = vector.shape_cast %358 : vector<1x196xf32> to vector<1x1x196xf32>
      tpu.vector_store %arg11[%c27_262, %c1_263, %c0_264], %361 {strides = array<i32>} : memref<32x2x196xf32, #tpu.memory_space<vmem>>, vector<1x1x196xf32>,
      %362 = vector.extract_strided_slice %249 {offsets = [28, 0], sizes = [1, 196], strides = [1, 1]} : vector<32x196xf32> to vector<1x196xf32>
      %c28_265 = arith.constant 28 : index
      %c1_266 = arith.constant 1 : index
      %c0_267 = arith.constant 0 : index
      %363 = vector.load %arg11[%c28_265, %c1_266, %c0_267] : memref<32x2x196xf32, #tpu.memory_space<vmem>>, vector<1x1x196xf32>
      %364 = vector.shape_cast %363 : vector<1x1x196xf32> to vector<1x196xf32>
      %365 = vector.shape_cast %362 : vector<1x196xf32> to vector<1x1x196xf32>
      tpu.vector_store %arg11[%c28_265, %c1_266, %c0_267], %365 {strides = array<i32>} : memref<32x2x196xf32, #tpu.memory_space<vmem>>, vector<1x1x196xf32>,
      %366 = vector.extract_strided_slice %249 {offsets = [29, 0], sizes = [1, 196], strides = [1, 1]} : vector<32x196xf32> to vector<1x196xf32>
      %c29_268 = arith.constant 29 : index
      %c1_269 = arith.constant 1 : index
      %c0_270 = arith.constant 0 : index
      %367 = vector.load %arg11[%c29_268, %c1_269, %c0_270] : memref<32x2x196xf32, #tpu.memory_space<vmem>>, vector<1x1x196xf32>
      %368 = vector.shape_cast %367 : vector<1x1x196xf32> to vector<1x196xf32>
      %369 = vector.shape_cast %366 : vector<1x196xf32> to vector<1x1x196xf32>
      tpu.vector_store %arg11[%c29_268, %c1_269, %c0_270], %369 {strides = array<i32>} : memref<32x2x196xf32, #tpu.memory_space<vmem>>, vector<1x1x196xf32>,
      %370 = vector.extract_strided_slice %249 {offsets = [30, 0], sizes = [1, 196], strides = [1, 1]} : vector<32x196xf32> to vector<1x196xf32>
      %c30_271 = arith.constant 30 : index
      %c1_272 = arith.constant 1 : index
      %c0_273 = arith.constant 0 : index
      %371 = vector.load %arg11[%c30_271, %c1_272, %c0_273] : memref<32x2x196xf32, #tpu.memory_space<vmem>>, vector<1x1x196xf32>
      %372 = vector.shape_cast %371 : vector<1x1x196xf32> to vector<1x196xf32>
      %373 = vector.shape_cast %370 : vector<1x196xf32> to vector<1x1x196xf32>
      tpu.vector_store %arg11[%c30_271, %c1_272, %c0_273], %373 {strides = array<i32>} : memref<32x2x196xf32, #tpu.memory_space<vmem>>, vector<1x1x196xf32>,
      %374 = vector.extract_strided_slice %249 {offsets = [31, 0], sizes = [1, 196], strides = [1, 1]} : vector<32x196xf32> to vector<1x196xf32>
      %c31_274 = arith.constant 31 : index
      %c1_275 = arith.constant 1 : index
      %c0_276 = arith.constant 0 : index
      %375 = vector.load %arg11[%c31_274, %c1_275, %c0_276] : memref<32x2x196xf32, #tpu.memory_space<vmem>>, vector<1x1x196xf32>
      %376 = vector.shape_cast %375 : vector<1x1x196xf32> to vector<1x196xf32>
      %377 = vector.shape_cast %374 : vector<1x196xf32> to vector<1x1x196xf32>
      tpu.vector_store %arg11[%c31_274, %c1_275, %c0_276], %377 {strides = array<i32>} : memref<32x2x196xf32, #tpu.memory_space<vmem>>, vector<1x1x196xf32>,
      %cst_277 = arith.constant 0.000000e+00 : f32
      %378 = vector.broadcast %cst_277 : f32 to vector<2x128xf32>
      %c0_278 = arith.constant 0 : index
      %c0_279 = arith.constant 0 : index
      %379 = vector.load %arg12[%c0_278, %c0_279] : memref<2x128xf32, #tpu.memory_space<vmem>>, vector<2x128xf32>
      tpu.vector_store %arg12[%c0_278, %c0_279], %378 {strides = array<i32>} : memref<2x128xf32, #tpu.memory_space<vmem>>, vector<2x128xf32>,
    } else {
    }
    %cst = arith.constant 0.000000e+00 : f32
    %3 = vector.broadcast %cst : f32 to vector<2x128xf32>
    %c8_i32 = arith.constant 8 : i32
    %4 = arith.muli %arg0, %c8_i32 : i32
    %c0_i32_1 = arith.constant 0 : i32
    %5 = arith.addi %4, %c0_i32_1 : i32
    %6 = arith.index_cast %5 : i32 to index
    %c0 = arith.constant 0 : index
    %c0_2 = arith.constant 0 : index
    %7 = vector.load %arg11[%6, %c0, %c0_2] : memref<32x2x196xf32, #tpu.memory_space<vmem>>, vector<1x2x196xf32>
    %8 = vector.shape_cast %7 : vector<1x2x196xf32> to vector<2x196xf32>
    %c0_3 = arith.constant 0 : index
    %c0_4 = arith.constant 0 : index
    %c0_5 = arith.constant 0 : index
    %c0_6 = arith.constant 0 : index
    %9 = vector.load %arg4[%c0_3, %c0_4, %c0_5, %c0_6] : memref<1x8x196x128xf32, #tpu.memory_space<vmem>>, vector<1x1x196x128xf32>
    %10 = vector.shape_cast %9 : vector<1x1x196x128xf32> to vector<196x128xf32>
    %cst_7 = arith.constant dense<0.000000e+00> : vector<2x128xf32>
    %11 = tpu.matmul %8, %10, %cst_7 {dimension_numbers = #tpu.dot_dimension_numbers<[1], [0], [0], [1], [0, 0, 1, 1], [], []>} : vector<2x196xf32>, vector<196x128xf32>, vector<2x128xf32> -> vector<2x128xf32>
    %12 = arith.addf %3, %11 : vector<2x128xf32>
    %c8_i32_8 = arith.constant 8 : i32
    %13 = arith.muli %arg0, %c8_i32_8 : i32
    %c1_i32 = arith.constant 1 : i32
    %14 = arith.addi %13, %c1_i32 : i32
    %15 = arith.index_cast %14 : i32 to index
    %c0_9 = arith.constant 0 : index
    %c0_10 = arith.constant 0 : index
    %16 = vector.load %arg11[%15, %c0_9, %c0_10] : memref<32x2x196xf32, #tpu.memory_space<vmem>>, vector<1x2x196xf32>
    %17 = vector.shape_cast %16 : vector<1x2x196xf32> to vector<2x196xf32>
    %c0_11 = arith.constant 0 : index
    %c1 = arith.constant 1 : index
    %c0_12 = arith.constant 0 : index
    %c0_13 = arith.constant 0 : index
    %18 = vector.load %arg4[%c0_11, %c1, %c0_12, %c0_13] : memref<1x8x196x128xf32, #tpu.memory_space<vmem>>, vector<1x1x196x128xf32>
    %19 = vector.shape_cast %18 : vector<1x1x196x128xf32> to vector<196x128xf32>
    %cst_14 = arith.constant dense<0.000000e+00> : vector<2x128xf32>
    %20 = tpu.matmul %17, %19, %cst_14 {dimension_numbers = #tpu.dot_dimension_numbers<[1], [0], [0], [1], [0, 0, 1, 1], [], []>} : vector<2x196xf32>, vector<196x128xf32>, vector<2x128xf32> -> vector<2x128xf32>
    %21 = arith.addf %12, %20 : vector<2x128xf32>
    %c8_i32_15 = arith.constant 8 : i32
    %22 = arith.muli %arg0, %c8_i32_15 : i32
    %c2_i32 = arith.constant 2 : i32
    %23 = arith.addi %22, %c2_i32 : i32
    %24 = arith.index_cast %23 : i32 to index
    %c0_16 = arith.constant 0 : index
    %c0_17 = arith.constant 0 : index
    %25 = vector.load %arg11[%24, %c0_16, %c0_17] : memref<32x2x196xf32, #tpu.memory_space<vmem>>, vector<1x2x196xf32>
    %26 = vector.shape_cast %25 : vector<1x2x196xf32> to vector<2x196xf32>
    %c0_18 = arith.constant 0 : index
    %c2 = arith.constant 2 : index
    %c0_19 = arith.constant 0 : index
    %c0_20 = arith.constant 0 : index
    %27 = vector.load %arg4[%c0_18, %c2, %c0_19, %c0_20] : memref<1x8x196x128xf32, #tpu.memory_space<vmem>>, vector<1x1x196x128xf32>
    %28 = vector.shape_cast %27 : vector<1x1x196x128xf32> to vector<196x128xf32>
    %cst_21 = arith.constant dense<0.000000e+00> : vector<2x128xf32>
    %29 = tpu.matmul %26, %28, %cst_21 {dimension_numbers = #tpu.dot_dimension_numbers<[1], [0], [0], [1], [0, 0, 1, 1], [], []>} : vector<2x196xf32>, vector<196x128xf32>, vector<2x128xf32> -> vector<2x128xf32>
    %30 = arith.addf %21, %29 : vector<2x128xf32>
    %c8_i32_22 = arith.constant 8 : i32
    %31 = arith.muli %arg0, %c8_i32_22 : i32
    %c3_i32 = arith.constant 3 : i32
    %32 = arith.addi %31, %c3_i32 : i32
    %33 = arith.index_cast %32 : i32 to index
    %c0_23 = arith.constant 0 : index
    %c0_24 = arith.constant 0 : index
    %34 = vector.load %arg11[%33, %c0_23, %c0_24] : memref<32x2x196xf32, #tpu.memory_space<vmem>>, vector<1x2x196xf32>
    %35 = vector.shape_cast %34 : vector<1x2x196xf32> to vector<2x196xf32>
    %c0_25 = arith.constant 0 : index
    %c3 = arith.constant 3 : index
    %c0_26 = arith.constant 0 : index
    %c0_27 = arith.constant 0 : index
    %36 = vector.load %arg4[%c0_25, %c3, %c0_26, %c0_27] : memref<1x8x196x128xf32, #tpu.memory_space<vmem>>, vector<1x1x196x128xf32>
    %37 = vector.shape_cast %36 : vector<1x1x196x128xf32> to vector<196x128xf32>
    %cst_28 = arith.constant dense<0.000000e+00> : vector<2x128xf32>
    %38 = tpu.matmul %35, %37, %cst_28 {dimension_numbers = #tpu.dot_dimension_numbers<[1], [0], [0], [1], [0, 0, 1, 1], [], []>} : vector<2x196xf32>, vector<196x128xf32>, vector<2x128xf32> -> vector<2x128xf32>
    %39 = arith.addf %30, %38 : vector<2x128xf32>
    %c8_i32_29 = arith.constant 8 : i32
    %40 = arith.muli %arg0, %c8_i32_29 : i32
    %c4_i32 = arith.constant 4 : i32
    %41 = arith.addi %40, %c4_i32 : i32
    %42 = arith.index_cast %41 : i32 to index
    %c0_30 = arith.constant 0 : index
    %c0_31 = arith.constant 0 : index
    %43 = vector.load %arg11[%42, %c0_30, %c0_31] : memref<32x2x196xf32, #tpu.memory_space<vmem>>, vector<1x2x196xf32>
    %44 = vector.shape_cast %43 : vector<1x2x196xf32> to vector<2x196xf32>
    %c0_32 = arith.constant 0 : index
    %c4 = arith.constant 4 : index
    %c0_33 = arith.constant 0 : index
    %c0_34 = arith.constant 0 : index
    %45 = vector.load %arg4[%c0_32, %c4, %c0_33, %c0_34] : memref<1x8x196x128xf32, #tpu.memory_space<vmem>>, vector<1x1x196x128xf32>
    %46 = vector.shape_cast %45 : vector<1x1x196x128xf32> to vector<196x128xf32>
    %cst_35 = arith.constant dense<0.000000e+00> : vector<2x128xf32>
    %47 = tpu.matmul %44, %46, %cst_35 {dimension_numbers = #tpu.dot_dimension_numbers<[1], [0], [0], [1], [0, 0, 1, 1], [], []>} : vector<2x196xf32>, vector<196x128xf32>, vector<2x128xf32> -> vector<2x128xf32>
    %48 = arith.addf %39, %47 : vector<2x128xf32>
    %c8_i32_36 = arith.constant 8 : i32
    %49 = arith.muli %arg0, %c8_i32_36 : i32
    %c5_i32 = arith.constant 5 : i32
    %50 = arith.addi %49, %c5_i32 : i32
    %51 = arith.index_cast %50 : i32 to index
    %c0_37 = arith.constant 0 : index
    %c0_38 = arith.constant 0 : index
    %52 = vector.load %arg11[%51, %c0_37, %c0_38] : memref<32x2x196xf32, #tpu.memory_space<vmem>>, vector<1x2x196xf32>
    %53 = vector.shape_cast %52 : vector<1x2x196xf32> to vector<2x196xf32>
    %c0_39 = arith.constant 0 : index
    %c5 = arith.constant 5 : index
    %c0_40 = arith.constant 0 : index
    %c0_41 = arith.constant 0 : index
    %54 = vector.load %arg4[%c0_39, %c5, %c0_40, %c0_41] : memref<1x8x196x128xf32, #tpu.memory_space<vmem>>, vector<1x1x196x128xf32>
    %55 = vector.shape_cast %54 : vector<1x1x196x128xf32> to vector<196x128xf32>
    %cst_42 = arith.constant dense<0.000000e+00> : vector<2x128xf32>
    %56 = tpu.matmul %53, %55, %cst_42 {dimension_numbers = #tpu.dot_dimension_numbers<[1], [0], [0], [1], [0, 0, 1, 1], [], []>} : vector<2x196xf32>, vector<196x128xf32>, vector<2x128xf32> -> vector<2x128xf32>
    %57 = arith.addf %48, %56 : vector<2x128xf32>
    %c8_i32_43 = arith.constant 8 : i32
    %58 = arith.muli %arg0, %c8_i32_43 : i32
    %c6_i32 = arith.constant 6 : i32
    %59 = arith.addi %58, %c6_i32 : i32
    %60 = arith.index_cast %59 : i32 to index
    %c0_44 = arith.constant 0 : index
    %c0_45 = arith.constant 0 : index
    %61 = vector.load %arg11[%60, %c0_44, %c0_45] : memref<32x2x196xf32, #tpu.memory_space<vmem>>, vector<1x2x196xf32>
    %62 = vector.shape_cast %61 : vector<1x2x196xf32> to vector<2x196xf32>
    %c0_46 = arith.constant 0 : index
    %c6 = arith.constant 6 : index
    %c0_47 = arith.constant 0 : index
    %c0_48 = arith.constant 0 : index
    %63 = vector.load %arg4[%c0_46, %c6, %c0_47, %c0_48] : memref<1x8x196x128xf32, #tpu.memory_space<vmem>>, vector<1x1x196x128xf32>
    %64 = vector.shape_cast %63 : vector<1x1x196x128xf32> to vector<196x128xf32>
    %cst_49 = arith.constant dense<0.000000e+00> : vector<2x128xf32>
    %65 = tpu.matmul %62, %64, %cst_49 {dimension_numbers = #tpu.dot_dimension_numbers<[1], [0], [0], [1], [0, 0, 1, 1], [], []>} : vector<2x196xf32>, vector<196x128xf32>, vector<2x128xf32> -> vector<2x128xf32>
    %66 = arith.addf %57, %65 : vector<2x128xf32>
    %c8_i32_50 = arith.constant 8 : i32
    %67 = arith.muli %arg0, %c8_i32_50 : i32
    %c7_i32 = arith.constant 7 : i32
    %68 = arith.addi %67, %c7_i32 : i32
    %69 = arith.index_cast %68 : i32 to index
    %c0_51 = arith.constant 0 : index
    %c0_52 = arith.constant 0 : index
    %70 = vector.load %arg11[%69, %c0_51, %c0_52] : memref<32x2x196xf32, #tpu.memory_space<vmem>>, vector<1x2x196xf32>
    %71 = vector.shape_cast %70 : vector<1x2x196xf32> to vector<2x196xf32>
    %c0_53 = arith.constant 0 : index
    %c7 = arith.constant 7 : index
    %c0_54 = arith.constant 0 : index
    %c0_55 = arith.constant 0 : index
    %72 = vector.load %arg4[%c0_53, %c7, %c0_54, %c0_55] : memref<1x8x196x128xf32, #tpu.memory_space<vmem>>, vector<1x1x196x128xf32>
    %73 = vector.shape_cast %72 : vector<1x1x196x128xf32> to vector<196x128xf32>
    %cst_56 = arith.constant dense<0.000000e+00> : vector<2x128xf32>
    %74 = tpu.matmul %71, %73, %cst_56 {dimension_numbers = #tpu.dot_dimension_numbers<[1], [0], [0], [1], [0, 0, 1, 1], [], []>} : vector<2x196xf32>, vector<196x128xf32>, vector<2x128xf32> -> vector<2x128xf32>
    %75 = arith.addf %66, %74 : vector<2x128xf32>
    %c0_57 = arith.constant 0 : index
    %c0_58 = arith.constant 0 : index
    %76 = vector.load %arg12[%c0_57, %c0_58] : memref<2x128xf32, #tpu.memory_space<vmem>>, vector<2x128xf32>
    %77 = arith.addf %76, %75 : vector<2x128xf32>
    %c0_59 = arith.constant 0 : index
    %c0_60 = arith.constant 0 : index
    %78 = vector.load %arg12[%c0_59, %c0_60] : memref<2x128xf32, #tpu.memory_space<vmem>>, vector<2x128xf32>
    tpu.vector_store %arg12[%c0_59, %c0_60], %77 {strides = array<i32>} : memref<2x128xf32, #tpu.memory_space<vmem>>, vector<2x128xf32>,
    %c3_i32_61 = arith.constant 3 : i32
    %79 = arith.cmpi eq, %arg0, %c3_i32_61 : i32
    %80 = arith.extui %79 : i1 to i32
    %c0_i32_62 = arith.constant 0 : i32
    %81 = arith.cmpi ne, %80, %c0_i32_62 : i32
    scf.if %81 {
      %c0_63 = arith.constant 0 : index
      %c0_64 = arith.constant 0 : index
      %82 = vector.load %arg12[%c0_63, %c0_64] : memref<2x128xf32, #tpu.memory_space<vmem>>, vector<2x128xf32>
      %c0_65 = arith.constant 0 : index
      %c0_66 = arith.constant 0 : index
      %83 = vector.load %arg5[%c0_65, %c0_66] : memref<1x128xf32, #tpu.memory_space<vmem>>, vector<1x128xf32>
      %84 = vector.broadcast %83 : vector<1x128xf32> to vector<2x128xf32>
      %85 = arith.addf %82, %84 : vector<2x128xf32>
      %cst_67 = arith.constant 0.000000e+00 : f32
      %86 = vector.broadcast %cst_67 : f32 to vector<2x128xf32>
      %87 = arith.maximumf %85, %86 : vector<2x128xf32>
      %c0_68 = arith.constant 0 : index
      %c0_69 = arith.constant 0 : index
      %88 = vector.load %arg6[%c0_68, %c0_69] : memref<128x64xf32, #tpu.memory_space<vmem>>, vector<128x64xf32>
      %cst_70 = arith.constant dense<0.000000e+00> : vector<2x64xf32>
      %89 = tpu.matmul %87, %88, %cst_70 {dimension_numbers = #tpu.dot_dimension_numbers<[1], [0], [0], [1], [0, 0, 1, 1], [], []>} : vector<2x128xf32>, vector<128x64xf32>, vector<2x64xf32> -> vector<2x64xf32>
      %c0_71 = arith.constant 0 : index
      %c0_72 = arith.constant 0 : index
      %90 = vector.load %arg7[%c0_71, %c0_72] : memref<1x64xf32, #tpu.memory_space<vmem>>, vector<1x64xf32>
      %91 = vector.broadcast %90 : vector<1x64xf32> to vector<2x64xf32>
      %92 = arith.addf %89, %91 : vector<2x64xf32>
      %cst_73 = arith.constant 0.000000e+00 : f32
      %93 = vector.broadcast %cst_73 : f32 to vector<2x64xf32>
      %94 = arith.maximumf %92, %93 : vector<2x64xf32>
      %c0_74 = arith.constant 0 : index
      %c0_75 = arith.constant 0 : index
      %95 = vector.load %arg8[%c0_74, %c0_75] : memref<64x10xf32, #tpu.memory_space<vmem>>, vector<64x10xf32>
      %cst_76 = arith.constant dense<0.000000e+00> : vector<2x10xf32>
      %96 = tpu.matmul %94, %95, %cst_76 {dimension_numbers = #tpu.dot_dimension_numbers<[1], [0], [0], [1], [0, 0, 1, 1], [], []>} : vector<2x64xf32>, vector<64x10xf32>, vector<2x10xf32> -> vector<2x10xf32>
      %c0_77 = arith.constant 0 : index
      %c0_78 = arith.constant 0 : index
      %97 = vector.load %arg9[%c0_77, %c0_78] : memref<1x10xf32, #tpu.memory_space<vmem>>, vector<1x10xf32>
      %98 = vector.broadcast %97 : vector<1x10xf32> to vector<2x10xf32>
      %99 = arith.addf %96, %98 : vector<2x10xf32>
      %c0_79 = arith.constant 0 : index
      %c0_80 = arith.constant 0 : index
      %100 = vector.load %arg10[%c0_79, %c0_80] : memref<2x10xf32, #tpu.memory_space<vmem>>, vector<2x10xf32>
      tpu.vector_store %arg10[%c0_79, %c0_80], %99 {strides = array<i32>} : memref<2x10xf32, #tpu.memory_space<vmem>>, vector<2x10xf32>,
    } else {
    }
    return
  }
  func.func @transform_0(%arg0: i32) -> (i32, i32, i32, i32) {
    %c0_i32 = arith.constant 0 : i32
    %c0_i32_0 = arith.constant 0 : i32
    %c0_i32_1 = arith.constant 0 : i32
    %c0_i32_2 = arith.constant 0 : i32
    %c0_i32_3 = arith.constant 0 : i32
    return %c0_i32, %c0_i32_0, %c0_i32_1, %c0_i32_2 : i32, i32, i32, i32
  }
  func.func @transform_1(%arg0: i32) -> (i32, i32) {
    %c0_i32 = arith.constant 0 : i32
    %c0_i32_0 = arith.constant 0 : i32
    %c0_i32_1 = arith.constant 0 : i32
    return %c0_i32, %c0_i32_0 : i32, i32
  }
  func.func @transform_2(%arg0: i32) -> (i32, i32) {
    %c0_i32 = arith.constant 0 : i32
    %c0_i32_0 = arith.constant 0 : i32
    %c0_i32_1 = arith.constant 0 : i32
    return %c0_i32, %c0_i32_0 : i32, i32
  }
  func.func @transform_3(%arg0: i32) -> (i32, i32, i32, i32) {
    %c0_i32 = arith.constant 0 : i32
    %c0_i32_0 = arith.constant 0 : i32
    %c0_i32_1 = arith.constant 0 : i32
    %c0_i32_2 = arith.constant 0 : i32
    return %arg0, %c0_i32, %c0_i32_0, %c0_i32_1 : i32, i32, i32, i32
  }
  func.func @transform_4(%arg0: i32) -> (i32, i32) {
    %c0_i32 = arith.constant 0 : i32
    %c0_i32_0 = arith.constant 0 : i32
    %c0_i32_1 = arith.constant 0 : i32
    return %c0_i32, %c0_i32_0 : i32, i32
  }
  func.func @transform_5(%arg0: i32) -> (i32, i32) {
    %c0_i32 = arith.constant 0 : i32
    %c0_i32_0 = arith.constant 0 : i32
    %c0_i32_1 = arith.constant 0 : i32
    return %c0_i32, %c0_i32_0 : i32, i32
  }
  func.func @transform_6(%arg0: i32) -> (i32, i32) {
    %c0_i32 = arith.constant 0 : i32
    %c0_i32_0 = arith.constant 0 : i32
    %c0_i32_1 = arith.constant 0 : i32
    return %c0_i32, %c0_i32_0 : i32, i32
  }
  func.func @transform_7(%arg0: i32) -> (i32, i32) {
    %c0_i32 = arith.constant 0 : i32
    %c0_i32_0 = arith.constant 0 : i32
    %c0_i32_1 = arith.constant 0 : i32
    return %c0_i32, %c0_i32_0 : i32, i32
  }
  func.func @transform_8(%arg0: i32) -> (i32, i32) {
    %c0_i32 = arith.constant 0 : i32
    %c0_i32_0 = arith.constant 0 : i32
    %c0_i32_1 = arith.constant 0 : i32
    return %c0_i32, %c0_i32_0 : i32, i32
  }
  func.func @transform_9(%arg0: i32) -> (i32, i32) {
    %c0_i32 = arith.constant 0 : i32
    %c0_i32_0 = arith.constant 0 : i32
    %c0_i32_1 = arith.constant 0 : i32
    return %c0_i32, %c0_i32_0 : i32, i32
  }
}

</mosaic_0001>

<llo_original>
// kernel: simple_cnn_forward.1
$region0: #{simple_cnn_forward.1}
  #allocation0 [shape = 'u32[]', space=smem, size = 0x4, offset = 0x4, fixed_abs, tag = 'smem constant byte address 0x4 - core index']
  #allocation1 [shape = 'u32[144,128]{1,0:T(1,128)}', space=vmem, size = 0x12000, scoped, tag = 'internal scratch']
  #allocation2 [shape = 'f32[32,2,196]{2,1,0:T(2,128)}', space=vmem, size = 0x10000, scoped, tag = 'scratch operand']
  #allocation3 [shape = 'f32[2,128]{1,0:T(2,128)}', space=vmem, size = 0x400, scoped, tag = 'scratch operand']
  %s0 = inlined_call_operand.vmem [shape: f32[4,2,9,196], index: 0, kind: input, shape index: {}]
  %s1 = inlined_call_operand.vmem [shape: f32[32,9], index: 1, kind: input, shape index: {}]
  %s2 = inlined_call_operand.vmem [shape: f32[32,1], index: 2, kind: input, shape index: {}]
  %s3 = inlined_call_operand.vmem [shape: f32[4,8,196,128], index: 3, kind: input, shape index: {}]
  %s4 = inlined_call_operand.vmem [shape: f32[1,128], index: 4, kind: input, shape index: {}]
  %s5 = inlined_call_operand.vmem [shape: f32[128,64], index: 5, kind: input, shape index: {}]
  %s6 = inlined_call_operand.vmem [shape: f32[1,64], index: 6, kind: input, shape index: {}]
  %s7 = inlined_call_operand.vmem [shape: f32[64,10], index: 7, kind: input, shape index: {}]
  %s8 = inlined_call_operand.vmem [shape: f32[1,10], index: 8, kind: input, shape index: {}]
  %s9 = inlined_call_operand.hbm [shape: f32[2,10], index: 9, kind: output, shape index: {}]
  %s10 = sld [smem:[#allocation0]]
  $region77: #{simple_cnn_forward.1} parent=0
    _
  %s12 = ssub.s32 1, %s10
  %s13 = scalar_select 0, %s12, %s10
  $region1: #{simple_cnn_forward.1} parent=0
    #allocation4 [shape = 'u8[1024]{0}', space=vmem, size = 0x400, scoped, tag = 'output window, operand 0, single buffered']
    #allocation5 [shape = 's32[2]{0}', space=sflag, size = 0x8, scoped, tag = 'scoped memory for simple_cnn_forward.1']
    %14 = vsyncpa [#allocation5], 0
    loop: start=0, step=1, limit=6
    $region2: #{simple_cnn_forward.1} parent=1 // loop_pre_header
      _
    $region3: #{simple_cnn_forward.1} parent=1 // loop_header
      %s16 = sphi 0, %s20
      %p17 = scmp.ge.s32.totalorder %s16, 6
      %s24 = sphi 0, %s24
      %s26 = sphi 0, %s24
      %s27 = sphi 0, %s26
      %s41 = sphi 0, %s27
      %s45 = sphi 0, %s45
      %s47 = sphi 0, %s45
      %s48 = sphi 0, %s47
      %s62 = sphi 0, %s48
      %s66 = sphi 0, %s66
      %s68 = sphi 0, %s66
      %s69 = sphi 0, %s68
      %s83 = sphi 0, %s69
      %s89 = sphi 0, %s91
      %s92 = sphi 0, %s89
      %s93 = sphi 0, %s92
      %s109 = sphi 0, %s93
      %s113 = sphi 0, %s113
      %s115 = sphi 0, %s113
      %s116 = sphi 0, %s115
      %s130 = sphi 0, %s116
      %s134 = sphi 0, %s134
      %s136 = sphi 0, %s134
      %s137 = sphi 0, %s136
      %s151 = sphi 0, %s137
      %s155 = sphi 0, %s155
      %s157 = sphi 0, %s155
      %s158 = sphi 0, %s157
      %s172 = sphi 0, %s158
      %s176 = sphi 0, %s176
      %s178 = sphi 0, %s176
      %s179 = sphi 0, %s178
      %s193 = sphi 0, %s179
      %s197 = sphi 0, %s197
      %s199 = sphi 0, %s197
      %s200 = sphi 0, %s199
      %s214 = sphi 0, %s200
      %s218 = sphi 0, %s218
      %s220 = sphi 0, %s218
      %s221 = sphi 0, %s220
      %s235 = sphi 0, %s221
    $region4: #{simple_cnn_forward.1} parent=1 // loop_header_branch
      %19 = sbr.rel (%p17) target = $region8
    $region5: #{simple_cnn_forward.1} parent=1 // loop_body
      %s21 = ssub.s32 %s16, 1
      %s22 = ssub.s32 %s16, 2
      %s23 = sadd.s32 %s16, 1
      %s25 = sadd.s32 %s24, 1
      %p28 = scmp.eq.s32.totalorder %s16, 3
      %p29 = scmp.ne.s32.totalorder %s24, %s26
      %p30 = scmp.eq.s32.totalorder %s16, 0
      %p31 = por %p29, %p30
      %p32 = scmp.ne.s32.totalorder %s24, %s26
      %p33 = scmp.eq.s32.totalorder %s21, 3
      %p34 = por %p32, %p33
      %p35 = scmp.ne.s32.totalorder %s26, %s27
      %p36 = scmp.eq.s32.totalorder %s21, 0
      %p37 = por %p35, %p36
      %p38 = scmp.ne.s32.totalorder %s26, %s27
      %p39 = scmp.eq.s32.totalorder %s22, 3
      %p40 = por %p38, %p39
      %p42 = scmp.ne.s32.totalorder %s27, %s41
      %p43 = scmp.eq.s32.totalorder %s22, 0
      %p44 = por %p42, %p43
      %s46 = sadd.s32 %s45, 1
      %p49 = scmp.eq.s32.totalorder %s16, 3
      %p50 = scmp.ne.s32.totalorder %s45, %s47
      %p51 = scmp.eq.s32.totalorder %s16, 0
      %p52 = por %p50, %p51
      %p53 = scmp.ne.s32.totalorder %s45, %s47
      %p54 = scmp.eq.s32.totalorder %s21, 3
      %p55 = por %p53, %p54
      %p56 = scmp.ne.s32.totalorder %s47, %s48
      %p57 = scmp.eq.s32.totalorder %s21, 0
      %p58 = por %p56, %p57
      %p59 = scmp.ne.s32.totalorder %s47, %s48
      %p60 = scmp.eq.s32.totalorder %s22, 3
      %p61 = por %p59, %p60
      %p63 = scmp.ne.s32.totalorder %s48, %s62
      %p64 = scmp.eq.s32.totalorder %s22, 0
      %p65 = por %p63, %p64
      %s67 = sadd.s32 %s66, 1
      %p70 = scmp.eq.s32.totalorder %s16, 3
      %p71 = scmp.ne.s32.totalorder %s66, %s68
      %p72 = scmp.eq.s32.totalorder %s16, 0
      %p73 = por %p71, %p72
      %p74 = scmp.ne.s32.totalorder %s66, %s68
      %p75 = scmp.eq.s32.totalorder %s21, 3
      %p76 = por %p74, %p75
      %p77 = scmp.ne.s32.totalorder %s68, %s69
      %p78 = scmp.eq.s32.totalorder %s21, 0
      %p79 = por %p77, %p78
      %p80 = scmp.ne.s32.totalorder %s68, %s69
      %p81 = scmp.eq.s32.totalorder %s22, 3
      %p82 = por %p80, %p81
      %p84 = scmp.ne.s32.totalorder %s69, %s83
      %p85 = scmp.eq.s32.totalorder %s22, 0
      %p86 = por %p84, %p85
      %s87 = ssub.s32 %s16, %s23
      %p88 = scmp.eq.s32.totalorder %s87, 0
      %s90 = sadd.s32 %s89, 1
      %s91 = scalar_select %p88, %s89, %s90
      %p94 = pneg %p88
      %p95 = scmp.eq.s32.totalorder %s16, 3
      %p96 = por %p94, %p95
      %p97 = scmp.ne.s32.totalorder %s89, %s92
      %p98 = scmp.eq.s32.totalorder %s16, 0
      %p99 = por %p97, %p98
      %p100 = scmp.ne.s32.totalorder %s89, %s92
      %p101 = scmp.eq.s32.totalorder %s21, 3
      %p102 = por %p100, %p101
      %p103 = scmp.ne.s32.totalorder %s92, %s93
      %p104 = scmp.eq.s32.totalorder %s21, 0
      %p105 = por %p103, %p104
      %p106 = scmp.ne.s32.totalorder %s92, %s93
      %p107 = scmp.eq.s32.totalorder %s22, 3
      %p108 = por %p106, %p107
      %p110 = scmp.ne.s32.totalorder %s93, %s109
      %p111 = scmp.eq.s32.totalorder %s22, 0
      %p112 = por %p110, %p111
      %s114 = sadd.s32 %s113, 1
      %p117 = scmp.eq.s32.totalorder %s16, 3
      %p118 = scmp.ne.s32.totalorder %s113, %s115
      %p119 = scmp.eq.s32.totalorder %s16, 0
      %p120 = por %p118, %p119
      %p121 = scmp.ne.s32.totalorder %s113, %s115
      %p122 = scmp.eq.s32.totalorder %s21, 3
      %p123 = por %p121, %p122
      %p124 = scmp.ne.s32.totalorder %s115, %s116
      %p125 = scmp.eq.s32.totalorder %s21, 0
      %p126 = por %p124, %p125
      %p127 = scmp.ne.s32.totalorder %s115, %s116
      %p128 = scmp.eq.s32.totalorder %s22, 3
      %p129 = por %p127, %p128
      %p131 = scmp.ne.s32.totalorder %s116, %s130
      %p132 = scmp.eq.s32.totalorder %s22, 0
      %p133 = por %p131, %p132
      %s135 = sadd.s32 %s134, 1
      %p138 = scmp.eq.s32.totalorder %s16, 3
      %p139 = scmp.ne.s32.totalorder %s134, %s136
      %p140 = scmp.eq.s32.totalorder %s16, 0
      %p141 = por %p139, %p140
      %p142 = scmp.ne.s32.totalorder %s134, %s136
      %p143 = scmp.eq.s32.totalorder %s21, 3
      %p144 = por %p142, %p143
      %p145 = scmp.ne.s32.totalorder %s136, %s137
      %p146 = scmp.eq.s32.totalorder %s21, 0
      %p147 = por %p145, %p146
      %p148 = scmp.ne.s32.totalorder %s136, %s137
      %p149 = scmp.eq.s32.totalorder %s22, 3
      %p150 = por %p148, %p149
      %p152 = scmp.ne.s32.totalorder %s137, %s151
      %p153 = scmp.eq.s32.totalorder %s22, 0
      %p154 = por %p152, %p153
      %s156 = sadd.s32 %s155, 1
      %p159 = scmp.eq.s32.totalorder %s16, 3
      %p160 = scmp.ne.s32.totalorder %s155, %s157
      %p161 = scmp.eq.s32.totalorder %s16, 0
      %p162 = por %p160, %p161
      %p163 = scmp.ne.s32.totalorder %s155, %s157
      %p164 = scmp.eq.s32.totalorder %s21, 3
      %p165 = por %p163, %p164
      %p166 = scmp.ne.s32.totalorder %s157, %s158
      %p167 = scmp.eq.s32.totalorder %s21, 0
      %p168 = por %p166, %p167
      %p169 = scmp.ne.s32.totalorder %s157, %s158
      %p170 = scmp.eq.s32.totalorder %s22, 3
      %p171 = por %p169, %p170
      %p173 = scmp.ne.s32.totalorder %s158, %s172
      %p174 = scmp.eq.s32.totalorder %s22, 0
      %p175 = por %p173, %p174
      %s177 = sadd.s32 %s176, 1
      %p180 = scmp.eq.s32.totalorder %s16, 3
      %p181 = scmp.ne.s32.totalorder %s176, %s178
      %p182 = scmp.eq.s32.totalorder %s16, 0
      %p183 = por %p181, %p182
      %p184 = scmp.ne.s32.totalorder %s176, %s178
      %p185 = scmp.eq.s32.totalorder %s21, 3
      %p186 = por %p184, %p185
      %p187 = scmp.ne.s32.totalorder %s178, %s179
      %p188 = scmp.eq.s32.totalorder %s21, 0
      %p189 = por %p187, %p188
      %p190 = scmp.ne.s32.totalorder %s178, %s179
      %p191 = scmp.eq.s32.totalorder %s22, 3
      %p192 = por %p190, %p191
      %p194 = scmp.ne.s32.totalorder %s179, %s193
      %p195 = scmp.eq.s32.totalorder %s22, 0
      %p196 = por %p194, %p195
      %s198 = sadd.s32 %s197, 1
      %p201 = scmp.eq.s32.totalorder %s16, 3
      %p202 = scmp.ne.s32.totalorder %s197, %s199
      %p203 = scmp.eq.s32.totalorder %s16, 0
      %p204 = por %p202, %p203
      %p205 = scmp.ne.s32.totalorder %s197, %s199
      %p206 = scmp.eq.s32.totalorder %s21, 3
      %p207 = por %p205, %p206
      %p208 = scmp.ne.s32.totalorder %s199, %s200
      %p209 = scmp.eq.s32.totalorder %s21, 0
      %p210 = por %p208, %p209
      %p211 = scmp.ne.s32.totalorder %s199, %s200
      %p212 = scmp.eq.s32.totalorder %s22, 3
      %p213 = por %p211, %p212
      %p215 = scmp.ne.s32.totalorder %s200, %s214
      %p216 = scmp.eq.s32.totalorder %s22, 0
      %p217 = por %p215, %p216
      %s219 = sadd.s32 %s218, 1
      %p222 = scmp.eq.s32.totalorder %s16, 3
      %p223 = scmp.ne.s32.totalorder %s218, %s220
      %p224 = scmp.eq.s32.totalorder %s16, 0
      %p225 = por %p223, %p224
      %p226 = scmp.ne.s32.totalorder %s218, %s220
      %p227 = scmp.eq.s32.totalorder %s21, 3
      %p228 = por %p226, %p227
      %p229 = scmp.ne.s32.totalorder %s220, %s221
      %p230 = scmp.eq.s32.totalorder %s21, 0
      %p231 = por %p229, %p230
      %p232 = scmp.ne.s32.totalorder %s220, %s221
      %p233 = scmp.eq.s32.totalorder %s22, 3
      %p234 = por %p232, %p233
      %p236 = scmp.ne.s32.totalorder %s221, %s235
      %p237 = scmp.eq.s32.totalorder %s22, 0
      %p238 = por %p236, %p237
      %p239 = scmp.le.s32.totalorder 1, %s16
      %p240 = scmp.lt.s32.totalorder %s16, 5
      %p241 = pnand %p239, %p240
      %p242 = pneg %p241
      // Predicated region
      $region9: #{simple_cnn_forward.1} parent=5 // pred_check
        _
      $region10: #{simple_cnn_forward.1} parent=5 // pred_check_branch
        %244 = sbr.rel (%p241) target = $region12
      $region11: #{simple_cnn_forward.1} parent=5 // pred_region
        %s245 = ssub.s32 %s16, 1
        // Predicated region
        $region13: #{simple_cnn_forward.1} parent=11 // pred_check
          %p246 = pneg %p37
        $region14: #{simple_cnn_forward.1} parent=11 // pred_check_branch
          %248 = sbr.rel (%p246) target = $region16
        $region15: #{simple_cnn_forward.1} parent=11 // pred_region
          _
        $region16: #{simple_cnn_forward.1} parent=11 // pred_fallthru
          _
        // Predicated region
        $region17: #{simple_cnn_forward.1} parent=11 // pred_check
          %p249 = pneg %p58
        $region18: #{simple_cnn_forward.1} parent=11 // pred_check_branch
          %251 = sbr.rel (%p249) target = $region20
        $region19: #{simple_cnn_forward.1} parent=11 // pred_region
          _
        $region20: #{simple_cnn_forward.1} parent=11 // pred_fallthru
          _
        // Predicated region
        $region21: #{simple_cnn_forward.1} parent=11 // pred_check
          %p252 = pneg %p79
        $region22: #{simple_cnn_forward.1} parent=11 // pred_check_branch
          %254 = sbr.rel (%p252) target = $region24
        $region23: #{simple_cnn_forward.1} parent=11 // pred_region
          _
        $region24: #{simple_cnn_forward.1} parent=11 // pred_fallthru
          _
        // Predicated region
        $region25: #{simple_cnn_forward.1} parent=11 // pred_check
          %p255 = pneg %p126
        $region26: #{simple_cnn_forward.1} parent=11 // pred_check_branch
          %257 = sbr.rel (%p255) target = $region28
        $region27: #{simple_cnn_forward.1} parent=11 // pred_region
          _
        $region28: #{simple_cnn_forward.1} parent=11 // pred_fallthru
          _
        // Predicated region
        $region29: #{simple_cnn_forward.1} parent=11 // pred_check
          %p258 = pneg %p147
        $region30: #{simple_cnn_forward.1} parent=11 // pred_check_branch
          %260 = sbr.rel (%p258) target = $region32
        $region31: #{simple_cnn_forward.1} parent=11 // pred_region
          _
        $region32: #{simple_cnn_forward.1} parent=11 // pred_fallthru
          _
        // Predicated region
        $region33: #{simple_cnn_forward.1} parent=11 // pred_check
          %p261 = pneg %p168
        $region34: #{simple_cnn_forward.1} parent=11 // pred_check_branch
          %263 = sbr.rel (%p261) target = $region36
        $region35: #{simple_cnn_forward.1} parent=11 // pred_region
          _
        $region36: #{simple_cnn_forward.1} parent=11 // pred_fallthru
          _
        // Predicated region
        $region37: #{simple_cnn_forward.1} parent=11 // pred_check
          %p264 = pneg %p189
        $region38: #{simple_cnn_forward.1} parent=11 // pred_check_branch
          %266 = sbr.rel (%p264) target = $region40
        $region39: #{simple_cnn_forward.1} parent=11 // pred_region
          _
        $region40: #{simple_cnn_forward.1} parent=11 // pred_fallthru
          _
        // Predicated region
        $region41: #{simple_cnn_forward.1} parent=11 // pred_check
          %p267 = pneg %p210
        $region42: #{simple_cnn_forward.1} parent=11 // pred_check_branch
          %269 = sbr.rel (%p267) target = $region44
        $region43: #{simple_cnn_forward.1} parent=11 // pred_region
          _
        $region44: #{simple_cnn_forward.1} parent=11 // pred_fallthru
          _
      $region12: #{simple_cnn_forward.1} parent=5 // pred_fallthru
        _
      %p270 = scmp.lt.s32.totalorder %s16, 4
      // Predicated region
      $region45: #{simple_cnn_forward.1} parent=5 // pred_check
        %p271 = pneg %p270
      $region46: #{simple_cnn_forward.1} parent=5 // pred_check_branch
        %273 = sbr.rel (%p271) target = $region48
      $region47: #{simple_cnn_forward.1} parent=5 // pred_region
        // Predicated region
        $region49: #{simple_cnn_forward.1} parent=47 // pred_check
          %p274 = pneg %p99
        $region50: #{simple_cnn_forward.1} parent=47 // pred_check_branch
          %276 = sbr.rel (%p274) target = $region52
        $region51: #{simple_cnn_forward.1} parent=47 // pred_region
          %p277 = scmp.lt.s32.totalorder %s16, 3
          %s278 = scalar_select %p277, %s16, 3
          %s279 = smul.addr %s278, 200
          %s280 = smul.addr %s279, 8
          %s281 = scalar_lea.vmem %s3, %s280
        $region52: #{simple_cnn_forward.1} parent=47 // pred_fallthru
          _
      $region48: #{simple_cnn_forward.1} parent=5 // pred_fallthru
        _
      %p282 = scmp.le.s32.totalorder 1, %s16
      %p283 = scmp.lt.s32.totalorder %s16, 5
      %p284 = pnand %p282, %p283
      %p285 = pneg %p284
      // Predicated region
      $region53: #{simple_cnn_forward.1} parent=5 // pred_check
        _
      $region54: #{simple_cnn_forward.1} parent=5 // pred_check_branch
        %287 = sbr.rel (%p284) target = $region56
      $region55: #{simple_cnn_forward.1} parent=5 // pred_region
        %s288 = ssub.s32 %s16, 1
        %p289 = pneg %p37
        %p290 = pneg %p34
        %p291 = pneg %p58
        %p292 = pneg %p55
        %p293 = pneg %p79
        %p294 = pneg %p76
        %p295 = scmp.lt.s32.totalorder %s21, 3
        %s296 = scalar_select %p295, %s21, 3
        %s297 = smul.addr %s296, 200
        %s298 = smul.addr %s297, 8
        %s299 = scalar_lea.vmem %s3, %s298
        %p300 = pneg %p105
        %p301 = pneg %p102
        %p302 = pneg %p126
        %p303 = pneg %p123
        %p304 = pneg %p147
        %p305 = pneg %p144
        %p306 = pneg %p168
        %p307 = pneg %p165
        %p308 = pneg %p189
        %p309 = pneg %p186
        %p310 = pneg %p210
        %p311 = pneg %p207
        %p312 = pneg %p231
        %p313 = pneg %p228
        %p314 = scmp.lt.s32.totalorder %s21, 3
        %s315 = scalar_select %p314, %s21, 3
        %s316 = smul.addr %s315, 200
        %s317 = smul.addr %s316, 8
        %s318 = scalar_lea.vmem %s3, %s317
        %p319 = scmp.eq.s32.totalorder %s21, 0
        // Predicated region
        $region57: #{simple_cnn_forward.1} parent=55 // pred_check
          %p320 = pneg %p319
        $region58: #{simple_cnn_forward.1} parent=55 // pred_check_branch
          %322 = sbr.rel (%p320) target = $region60
        $region59: #{simple_cnn_forward.1} parent=55 // pred_region
          %v323 = vld [vmem:[%s1] sm:$0xff]
          %v324 = vld [vmem:[%s1 + $0x8] sm:$0xff]
          %v325 = vld [vmem:[%s1 + $0x10] sm:$0xff]
          %v326 = vld [vmem:[%s1 + $0x18] sm:$0xff]
          %v327 = vld [vmem:[%s2] sm:$0xff]
          %v328 = vld [vmem:[%s2 + $0x8] sm:$0xff]
          %v329 = vld [vmem:[%s2 + $0x10] sm:$0xff]
          %v330 = vld [vmem:[%s2 + $0x18] sm:$0xff]
          %v331 = vld [vmem:[%s0] sm:$0xff]
          %v332 = vld [vmem:[%s0 + $0x8] sm:$0xff]
          %v333 = vld [vmem:[%s0 + $0x10] sm:$0x1]
          %v334 = vld [vmem:[%s0 + $0x18] sm:$0x1]
          %vm335 = vcmask 72704
          %v337 = vsel %vm335, %v323, 0
          %v340 = vsel %vm335, %v324, 0
          %v343 = vsel %vm335, %v325, 0
          %v346 = vsel %vm335, %v326, 0
          %vm348 = vcmask 1040384
          %v350 = vsel %vm348, %v333, 0
          %v353 = vsel %vm348, %v334, 0
          %355 = vmatprep.subr.mxu0 0.0
          %356 = vmatpush1.msra.mxu0 0.0
          %357 = vmatprep.subr.mxu0 0.0
          %358 = vmatpush1.msra.mxu0 0.0
          %359 = vmatprep.subr.mxu0 0.0
          %360 = vmatpush1.msra.mxu0 0.0
          %361 = vmatprep.subr.mxu0 0.0
          %362 = vmatpush1.msra.mxu0 0.0
          %363 = vmatprep.subr.mxu0 0.0
          %364 = vmatpush1.msra.mxu0 0.0
          %365 = vmatprep.subr.mxu0 0.0
          %366 = vmatpush1.msra.mxu0 0.0
          %367 = vmatprep.subr.mxu0 0.0
          %368 = vmatpush1.msra.mxu0 0.0
          %369 = vmatprep.subr.mxu0 0.0
          %370 = vmatpush1.msra.mxu0 0.0
          %371 = vmatprep.subr.mxu0 0.0
          %372 = vmatpush1.msra.mxu0 0.0
          %373 = vmatprep.subr.mxu0 0.0
          %374 = vmatpush1.msra.mxu0 0.0
          %375 = vmatprep.subr.mxu0 0.0
          %376 = vmatpush1.msra.mxu0 0.0
          %377 = vmatprep.subr.mxu0 0.0
          %378 = vmatpush1.msra.mxu0 0.0
          %379 = vmatprep.subr.mxu0 0.0
          %380 = vmatpush1.msra.mxu0 0.0
          %381 = vmatprep.subr.mxu0 0.0
          %382 = vmatpush1.msra.mxu0 0.0
          %383 = vmatprep.subr.mxu0 %v353
          %384 = vmatpush1.msra.mxu0 %v350
          %385 = vmatprep.subr.mxu0 %v332
          %386 = vmatpush1.msra.mxu0 %v331
          %387 = vmatprep.subr.mxu0 0.0
          %388 = vmatpush2.msra.mxu0 0.0
          %389 = vmatprep.subr.mxu0 0.0
          %390 = vmatpush2.msra.mxu0 0.0
          %391 = vmatprep.subr.mxu0 0.0
          %392 = vmatpush2.msra.mxu0 0.0
          %393 = vmatprep.subr.mxu0 0.0
          %394 = vmatpush2.msra.mxu0 0.0
          %395 = vmatprep.subr.mxu0 0.0
          %396 = vmatpush2.msra.mxu0 0.0
          %397 = vmatprep.subr.mxu0 0.0
          %398 = vmatpush2.msra.mxu0 0.0
          %399 = vmatprep.subr.mxu0 0.0
          %400 = vmatpush2.msra.mxu0 0.0
          %401 = vmatprep.subr.mxu0 0.0
          %402 = vmatpush2.msra.mxu0 0.0
          %403 = vmatprep.subr.mxu0 0.0
          %404 = vmatpush2.msra.mxu0 0.0
          %405 = vmatprep.subr.mxu0 0.0
          %406 = vmatpush2.msra.mxu0 0.0
          %407 = vmatprep.subr.mxu0 0.0
          %408 = vmatpush2.msra.mxu0 0.0
          %409 = vmatprep.subr.mxu0 0.0
          %410 = vmatpush2.msra.mxu0 0.0
          %411 = vmatprep.subr.mxu0 0.0
          %412 = vmatpush2.msra.mxu0 0.0
          %413 = vmatprep.subr.mxu0 0.0
          %414 = vmatpush2.msra.mxu0 0.0
          %415 = vmatprep.subr.mxu0 0.0
          %416 = vmatpush2.msra.mxu0 0.0
          %417 = vmatprep.subr.mxu0 0.0
          %418 = vmatpush2.msra.mxu0 0.0
          %419 = vmatprep.mubr.f32.mxu0 0.0
          %420 = vmatmul.mubr.f32.gmra.mxu0 %v337
          %v421 = vpop.f32.mrf.mxu0
          %v422 = vadd.f32 0.0, %v421
          %v423 = vpop.f32.mrf.mxu0
          %v424 = vadd.f32 0.0, %v423
          %425 = vmatprep.mubr.f32.mxu0 0.0
          %426 = vmatmul.mubr.f32.gmra.mxu0 %v340
          %v427 = vpop.f32.mrf.mxu0
          %v428 = vadd.f32 0.0, %v427
          %v429 = vpop.f32.mrf.mxu0
          %v430 = vadd.f32 0.0, %v429
          %431 = vmatprep.mubr.f32.mxu0 0.0
          %432 = vmatmul.mubr.f32.gmra.mxu0 %v343
          %v433 = vpop.f32.mrf.mxu0
          %v434 = vadd.f32 0.0, %v433
          %v435 = vpop.f32.mrf.mxu0
          %v436 = vadd.f32 0.0, %v435
          %437 = vmatprep.mubr.f32.mxu0 0.0
          %438 = vmatmul.mubr.f32.gmra.mxu0 %v346
          %v439 = vpop.f32.mrf.mxu0
          %v440 = vadd.f32 0.0, %v439
          %v441 = vpop.f32.mrf.mxu0
          %v442 = vadd.f32 0.0, %v441
          %443 = vdwg.mxu0
          %s444 = scalar_lea.vmem %s0, 64
          %v445 = vld [vmem:[%s444] sm:$0xff]
          %v446 = vld [vmem:[%s444 + $0x8] sm:$0xff]
          %v447 = vld [vmem:[%s444 + $0x10] sm:$0x1]
          %v448 = vld [vmem:[%s444 + $0x18] sm:$0x1]
          %v450 = vsel %vm348, %v447, 0
          %v453 = vsel %vm348, %v448, 0
          %455 = vmatprep.subr.mxu0 0.0
          %456 = vmatpush1.msra.mxu0 0.0
          %457 = vmatprep.subr.mxu0 0.0
          %458 = vmatpush1.msra.mxu0 0.0
          %459 = vmatprep.subr.mxu0 0.0
          %460 = vmatpush1.msra.mxu0 0.0
          %461 = vmatprep.subr.mxu0 0.0
          %462 = vmatpush1.msra.mxu0 0.0
          %463 = vmatprep.subr.mxu0 0.0
          %464 = vmatpush1.msra.mxu0 0.0
          %465 = vmatprep.subr.mxu0 0.0
          %466 = vmatpush1.msra.mxu0 0.0
          %467 = vmatprep.subr.mxu0 0.0
          %468 = vmatpush1.msra.mxu0 0.0
          %469 = vmatprep.subr.mxu0 0.0
          %470 = vmatpush1.msra.mxu0 0.0
          %471 = vmatprep.subr.mxu0 0.0
          %472 = vmatpush1.msra.mxu0 0.0
          %473 = vmatprep.subr.mxu0 0.0
          %474 = vmatpush1.msra.mxu0 0.0
          %475 = vmatprep.subr.mxu0 0.0
          %476 = vmatpush1.msra.mxu0 0.0
          %477 = vmatprep.subr.mxu0 0.0
          %478 = vmatpush1.msra.mxu0 0.0
          %479 = vmatprep.subr.mxu0 0.0
          %480 = vmatpush1.msra.mxu0 0.0
          %481 = vmatprep.subr.mxu0 0.0
          %482 = vmatpush1.msra.mxu0 0.0
          %483 = vmatprep.subr.mxu0 %v453
          %484 = vmatpush1.msra.mxu0 %v450
          %485 = vmatprep.subr.mxu0 %v446
          %486 = vmatpush1.msra.mxu0 %v445
          %487 = vmatprep.subr.mxu0 0.0
          %488 = vmatpush2.msra.mxu0 0.0
          %489 = vmatprep.subr.mxu0 0.0
          %490 = vmatpush2.msra.mxu0 0.0
          %491 = vmatprep.subr.mxu0 0.0
          %492 = vmatpush2.msra.mxu0 0.0
          %493 = vmatprep.subr.mxu0 0.0
          %494 = vmatpush2.msra.mxu0 0.0
          %495 = vmatprep.subr.mxu0 0.0
          %496 = vmatpush2.msra.mxu0 0.0
          %497 = vmatprep.subr.mxu0 0.0
          %498 = vmatpush2.msra.mxu0 0.0
          %499 = vmatprep.subr.mxu0 0.0
          %500 = vmatpush2.msra.mxu0 0.0
          %501 = vmatprep.subr.mxu0 0.0
          %502 = vmatpush2.msra.mxu0 0.0
          %503 = vmatprep.subr.mxu0 0.0
          %504 = vmatpush2.msra.mxu0 0.0
          %505 = vmatprep.subr.mxu0 0.0
          %506 = vmatpush2.msra.mxu0 0.0
          %507 = vmatprep.subr.mxu0 0.0
          %508 = vmatpush2.msra.mxu0 0.0
          %509 = vmatprep.subr.mxu0 0.0
          %510 = vmatpush2.msra.mxu0 0.0
          %511 = vmatprep.subr.mxu0 0.0
          %512 = vmatpush2.msra.mxu0 0.0
          %513 = vmatprep.subr.mxu0 0.0
          %514 = vmatpush2.msra.mxu0 0.0
          %515 = vmatprep.subr.mxu0 0.0
          %516 = vmatpush2.msra.mxu0 0.0
          %517 = vmatprep.subr.mxu0 0.0
          %518 = vmatpush2.msra.mxu0 0.0
          %519 = vmatprep.mubr.f32.mxu0 0.0
          %520 = vmatmul.mubr.f32.gmra.mxu0 %v337
          %v521 = vpop.f32.mrf.mxu0
          %v522 = vadd.f32 0.0, %v521
          %v523 = vpop.f32.mrf.mxu0
          %v524 = vadd.f32 0.0, %v523
          %525 = vmatprep.mubr.f32.mxu0 0.0
          %526 = vmatmul.mubr.f32.gmra.mxu0 %v340
          %v527 = vpop.f32.mrf.mxu0
          %v528 = vadd.f32 0.0, %v527
          %v529 = vpop.f32.mrf.mxu0
          %v530 = vadd.f32 0.0, %v529
          %531 = vmatprep.mubr.f32.mxu0 0.0
          %532 = vmatmul.mubr.f32.gmra.mxu0 %v343
          %v533 = vpop.f32.mrf.mxu0
          %v534 = vadd.f32 0.0, %v533
          %v535 = vpop.f32.mrf.mxu0
          %v536 = vadd.f32 0.0, %v535
          %537 = vmatprep.mubr.f32.mxu0 0.0
          %538 = vmatmul.mubr.f32.gmra.mxu0 %v346
          %v539 = vpop.f32.mrf.mxu0
          %v540 = vadd.f32 0.0, %v539
          %v541 = vpop.f32.mrf.mxu0
          %v542 = vadd.f32 0.0, %v541
          %543 = vdwg.mxu0
          %s544 = scalar_lea.vmem %s0, 128
          %v545 = vld [vmem:[%s544] sm:$0xff]
          %v546 = vld [vmem:[%s544 + $0x8] sm:$0xff]
          %v547 = vld [vmem:[%s544 + $0x10] sm:$0x1]
          %v548 = vld [vmem:[%s544 + $0x18] sm:$0x1]
          %v550 = vsel %vm348, %v547, 0
          %v553 = vsel %vm348, %v548, 0
          %555 = vmatprep.subr.mxu0 0.0
          %556 = vmatpush1.msra.mxu0 0.0
          %557 = vmatprep.subr.mxu0 0.0
          %558 = vmatpush1.msra.mxu0 0.0
          %559 = vmatprep.subr.mxu0 0.0
          %560 = vmatpush1.msra.mxu0 0.0
          %561 = vmatprep.subr.mxu0 0.0
          %562 = vmatpush1.msra.mxu0 0.0
          %563 = vmatprep.subr.mxu0 0.0
          %564 = vmatpush1.msra.mxu0 0.0
          %565 = vmatprep.subr.mxu0 0.0
          %566 = vmatpush1.msra.mxu0 0.0
          %567 = vmatprep.subr.mxu0 0.0
          %568 = vmatpush1.msra.mxu0 0.0
          %569 = vmatprep.subr.mxu0 0.0
          %570 = vmatpush1.msra.mxu0 0.0
          %571 = vmatprep.subr.mxu0 0.0
          %572 = vmatpush1.msra.mxu0 0.0
          %573 = vmatprep.subr.mxu0 0.0
          %574 = vmatpush1.msra.mxu0 0.0
          %575 = vmatprep.subr.mxu0 0.0
          %576 = vmatpush1.msra.mxu0 0.0
          %577 = vmatprep.subr.mxu0 0.0
          %578 = vmatpush1.msra.mxu0 0.0
          %579 = vmatprep.subr.mxu0 0.0
          %580 = vmatpush1.msra.mxu0 0.0
          %581 = vmatprep.subr.mxu0 0.0
          %582 = vmatpush1.msra.mxu0 0.0
          %583 = vmatprep.subr.mxu0 %v553
          %584 = vmatpush1.msra.mxu0 %v550
          %585 = vmatprep.subr.mxu0 %v546
          %586 = vmatpush1.msra.mxu0 %v545
          %587 = vmatprep.subr.mxu0 0.0
          %588 = vmatpush2.msra.mxu0 0.0
          %589 = vmatprep.subr.mxu0 0.0
          %590 = vmatpush2.msra.mxu0 0.0
          %591 = vmatprep.subr.mxu0 0.0
          %592 = vmatpush2.msra.mxu0 0.0
          %593 = vmatprep.subr.mxu0 0.0
          %594 = vmatpush2.msra.mxu0 0.0
          %595 = vmatprep.subr.mxu0 0.0
          %596 = vmatpush2.msra.mxu0 0.0
          %597 = vmatprep.subr.mxu0 0.0
          %598 = vmatpush2.msra.mxu0 0.0
          %599 = vmatprep.subr.mxu0 0.0
          %600 = vmatpush2.msra.mxu0 0.0
          %601 = vmatprep.subr.mxu0 0.0
          %602 = vmatpush2.msra.mxu0 0.0
          %603 = vmatprep.subr.mxu0 0.0
          %604 = vmatpush2.msra.mxu0 0.0
          %605 = vmatprep.subr.mxu0 0.0
          %606 = vmatpush2.msra.mxu0 0.0
          %607 = vmatprep.subr.mxu0 0.0
          %608 = vmatpush2.msra.mxu0 0.0
          %609 = vmatprep.subr.mxu0 0.0
          %610 = vmatpush2.msra.mxu0 0.0
          %611 = vmatprep.subr.mxu0 0.0
          %612 = vmatpush2.msra.mxu0 0.0
          %613 = vmatprep.subr.mxu0 0.0
          %614 = vmatpush2.msra.mxu0 0.0
          %615 = vmatprep.subr.mxu0 0.0
          %616 = vmatpush2.msra.mxu0 0.0
          %617 = vmatprep.subr.mxu0 0.0
          %618 = vmatpush2.msra.mxu0 0.0
          %619 = vmatprep.mubr.f32.mxu0 0.0
          %620 = vmatmul.mubr.f32.gmra.mxu0 %v337
          %v621 = vpop.f32.mrf.mxu0
          %v622 = vadd.f32 0.0, %v621
          %v623 = vpop.f32.mrf.mxu0
          %v624 = vadd.f32 0.0, %v623
          %625 = vmatprep.mubr.f32.mxu0 0.0
          %626 = vmatmul.mubr.f32.gmra.mxu0 %v340
          %v627 = vpop.f32.mrf.mxu0
          %v628 = vadd.f32 0.0, %v627
          %v629 = vpop.f32.mrf.mxu0
          %v630 = vadd.f32 0.0, %v629
          %631 = vmatprep.mubr.f32.mxu0 0.0
          %632 = vmatmul.mubr.f32.gmra.mxu0 %v343
          %v633 = vpop.f32.mrf.mxu0
          %v634 = vadd.f32 0.0, %v633
          %v635 = vpop.f32.mrf.mxu0
          %v636 = vadd.f32 0.0, %v635
          %637 = vmatprep.mubr.f32.mxu0 0.0
          %638 = vmatmul.mubr.f32.gmra.mxu0 %v346
          %v639 = vpop.f32.mrf.mxu0
          %v640 = vadd.f32 0.0, %v639
          %v641 = vpop.f32.mrf.mxu0
          %v642 = vadd.f32 0.0, %v641
          %643 = vdwg.mxu0
          %s644 = scalar_lea.vmem %s0, 192
          %v645 = vld [vmem:[%s644] sm:$0xff]
          %v646 = vld [vmem:[%s644 + $0x8] sm:$0xff]
          %v647 = vld [vmem:[%s644 + $0x10] sm:$0x1]
          %v648 = vld [vmem:[%s644 + $0x18] sm:$0x1]
          %v650 = vsel %vm348, %v647, 0
          %v653 = vsel %vm348, %v648, 0
          %655 = vmatprep.subr.mxu0 0.0
          %656 = vmatpush1.msra.mxu0 0.0
          %657 = vmatprep.subr.mxu0 0.0
          %658 = vmatpush1.msra.mxu0 0.0
          %659 = vmatprep.subr.mxu0 0.0
          %660 = vmatpush1.msra.mxu0 0.0
          %661 = vmatprep.subr.mxu0 0.0
          %662 = vmatpush1.msra.mxu0 0.0
          %663 = vmatprep.subr.mxu0 0.0
          %664 = vmatpush1.msra.mxu0 0.0
          %665 = vmatprep.subr.mxu0 0.0
          %666 = vmatpush1.msra.mxu0 0.0
          %667 = vmatprep.subr.mxu0 0.0
          %668 = vmatpush1.msra.mxu0 0.0
          %669 = vmatprep.subr.mxu0 0.0
          %670 = vmatpush1.msra.mxu0 0.0
          %671 = vmatprep.subr.mxu0 0.0
          %672 = vmatpush1.msra.mxu0 0.0
          %673 = vmatprep.subr.mxu0 0.0
          %674 = vmatpush1.msra.mxu0 0.0
          %675 = vmatprep.subr.mxu0 0.0
          %676 = vmatpush1.msra.mxu0 0.0
          %677 = vmatprep.subr.mxu0 0.0
          %678 = vmatpush1.msra.mxu0 0.0
          %679 = vmatprep.subr.mxu0 0.0
          %680 = vmatpush1.msra.mxu0 0.0
          %681 = vmatprep.subr.mxu0 0.0
          %682 = vmatpush1.msra.mxu0 0.0
          %683 = vmatprep.subr.mxu0 %v653
          %684 = vmatpush1.msra.mxu0 %v650
          %685 = vmatprep.subr.mxu0 %v646
          %686 = vmatpush1.msra.mxu0 %v645
          %687 = vmatprep.subr.mxu0 0.0
          %688 = vmatpush2.msra.mxu0 0.0
          %689 = vmatprep.subr.mxu0 0.0
          %690 = vmatpush2.msra.mxu0 0.0
          %691 = vmatprep.subr.mxu0 0.0
          %692 = vmatpush2.msra.mxu0 0.0
          %693 = vmatprep.subr.mxu0 0.0
          %694 = vmatpush2.msra.mxu0 0.0
          %695 = vmatprep.subr.mxu0 0.0
          %696 = vmatpush2.msra.mxu0 0.0
          %697 = vmatprep.subr.mxu0 0.0
          %698 = vmatpush2.msra.mxu0 0.0
          %699 = vmatprep.subr.mxu0 0.0
          %700 = vmatpush2.msra.mxu0 0.0
          %701 = vmatprep.subr.mxu0 0.0
          %702 = vmatpush2.msra.mxu0 0.0
          %703 = vmatprep.subr.mxu0 0.0
          %704 = vmatpush2.msra.mxu0 0.0
          %705 = vmatprep.subr.mxu0 0.0
          %706 = vmatpush2.msra.mxu0 0.0
          %707 = vmatprep.subr.mxu0 0.0
          %708 = vmatpush2.msra.mxu0 0.0
          %709 = vmatprep.subr.mxu0 0.0
          %710 = vmatpush2.msra.mxu0 0.0
          %711 = vmatprep.subr.mxu0 0.0
          %712 = vmatpush2.msra.mxu0 0.0
          %713 = vmatprep.subr.mxu0 0.0
          %714 = vmatpush2.msra.mxu0 0.0
          %715 = vmatprep.subr.mxu0 0.0
          %716 = vmatpush2.msra.mxu0 0.0
          %717 = vmatprep.subr.mxu0 0.0
          %718 = vmatpush2.msra.mxu0 0.0
          %719 = vmatprep.mubr.f32.mxu0 0.0
          %720 = vmatmul.mubr.f32.gmra.mxu0 %v337
          %v721 = vpop.f32.mrf.mxu0
          %v722 = vadd.f32 0.0, %v721
          %v723 = vpop.f32.mrf.mxu0
          %v724 = vadd.f32 0.0, %v723
          %725 = vmatprep.mubr.f32.mxu0 0.0
          %726 = vmatmul.mubr.f32.gmra.mxu0 %v340
          %v727 = vpop.f32.mrf.mxu0
          %v728 = vadd.f32 0.0, %v727
          %v729 = vpop.f32.mrf.mxu0
          %v730 = vadd.f32 0.0, %v729
          %731 = vmatprep.mubr.f32.mxu0 0.0
          %732 = vmatmul.mubr.f32.gmra.mxu0 %v343
          %v733 = vpop.f32.mrf.mxu0
          %v734 = vadd.f32 0.0, %v733
          %v735 = vpop.f32.mrf.mxu0
          %v736 = vadd.f32 0.0, %v735
          %737 = vmatprep.mubr.f32.mxu0 0.0
          %738 = vmatmul.mubr.f32.gmra.mxu0 %v346
          %v739 = vpop.f32.mrf.mxu0
          %v740 = vadd.f32 0.0, %v739
          %v741 = vpop.f32.mrf.mxu0
          %v742 = vadd.f32 0.0, %v741
          %743 = vdwg.mxu0
          %v744 = vmax.f32 %v422, %v522
          %v745 = vmax.f32 %v424, %v524
          %v746 = vmax.f32 %v428, %v528
          %v747 = vmax.f32 %v430, %v530
          %v748 = vmax.f32 %v434, %v534
          %v749 = vmax.f32 %v436, %v536
          %v750 = vmax.f32 %v440, %v540
          %v751 = vmax.f32 %v442, %v542
          %v752 = vmax.f32 %v622, %v722
          %v753 = vmax.f32 %v624, %v724
          %v754 = vmax.f32 %v628, %v728
          %v755 = vmax.f32 %v630, %v730
          %v756 = vmax.f32 %v634, %v734
          %v757 = vmax.f32 %v636, %v736
          %v758 = vmax.f32 %v640, %v740
          %v759 = vmax.f32 %v642, %v742
          %v760 = vmax.f32 %v744, %v752
          %v761 = vmax.f32 %v745, %v753
          %v762 = vmax.f32 %v746, %v754
          %v763 = vmax.f32 %v747, %v755
          %v764 = vmax.f32 %v748, %v756
          %v765 = vmax.f32 %v749, %v757
          %v766 = vmax.f32 %v750, %v758
          %v767 = vmax.f32 %v751, %v759
          %769 = vset.pattern.permute.xlu0 0
          %770 = vperm.xlu0 %769, %v327
          %v771 = vpop.permute.xlu0 %770
          %774 = vset.pattern.permute.xlu0 0
          %775 = vperm.xlu0 %774, %v328
          %v776 = vpop.permute.xlu0 %775
          %779 = vset.pattern.permute.xlu0 0
          %780 = vperm.xlu0 %779, %v329
          %v781 = vpop.permute.xlu0 %780
          %784 = vset.pattern.permute.xlu0 0
          %785 = vperm.xlu0 %784, %v330
          %v786 = vpop.permute.xlu0 %785
          %v788 = vadd.f32 %v760, %v771
          %v789 = vadd.f32 %v761, %v771
          %v790 = vadd.f32 %v762, %v776
          %v791 = vadd.f32 %v763, %v776
          %v792 = vadd.f32 %v764, %v781
          %v793 = vadd.f32 %v765, %v781
          %v794 = vadd.f32 %v766, %v786
          %v795 = vadd.f32 %v767, %v786
          %v796 = vmax.f32 %v788, 0.0
          %v797 = vmax.f32 %v789, 0.0
          %v798 = vmax.f32 %v790, 0.0
          %v799 = vmax.f32 %v791, 0.0
          %v800 = vmax.f32 %v792, 0.0
          %v801 = vmax.f32 %v793, 0.0
          %v802 = vmax.f32 %v794, 0.0
          %v803 = vmax.f32 %v795, 0.0
          %v806 = vcombine.low %v796, %v797
          %v808 = vunpack.c.l.s4 1966171168
          %v809 = vunpack.c.0.s8 %v808
          %v810 = vlaneseq
          %v811 = vshrl.u32 %v810, 7
          %v812 = vsub.s32 %v809, %v811
          %v813 = vrot.slane %v806, %v812
          %v815 = vunpack.c.l.s4 1966171168
          %v816 = vunpack.c.0.s8 %v815
          %v817 = vlaneseq
          %v818 = vshrl.u32 %v817, 7
          %v819 = vsub.s32 %v816, %v818
          %v820 = vrot.slane %v813, %v819
          %v822 = vlaneseq
          %vm823 = vcmp.ge.s32.totalorder %v822, 0
          %vm824 = vcmp.lt.s32.totalorder %v822, 196
          %vm825 = vmand %vm823, %vm824
          %826 = vst.msk [vmem:[#allocation2] ss:$2 sm:$0x3] %vm825, %v820
          %v827 = vcombine.high %v813, %v813
          %v829 = vunpack.c.l.s4 1966171168
          %v830 = vunpack.c.0.s8 %v829
          %v831 = vlaneseq
          %v832 = vshrl.u32 %v831, 7
          %v833 = vsub.s32 %v830, %v832
          %v834 = vrot.slane %v827, %v833
          %s836 = scalar_lea.vmem [#allocation2], 4
          %837 = vst.msk [vmem:[%s836] ss:$2 sm:$0x3] %vm825, %v834
          %v838 = vcombine.high %v820, %v820
          %s840 = scalar_lea.vmem [#allocation2], 8
          %841 = vst.msk [vmem:[%s840] ss:$2 sm:$0x3] %vm825, %v838
          %v842 = vcombine.high %v834, %v834
          %s844 = scalar_lea.vmem [#allocation2], 12
          %845 = vst.msk [vmem:[%s844] ss:$2 sm:$0x3] %vm825, %v842
          %v846 = vcombine.high %v796, %v797
          %v848 = vunpack.c.l.s4 1966171168
          %v849 = vunpack.c.0.s8 %v848
          %v850 = vlaneseq
          %v851 = vshrl.u32 %v850, 7
          %v852 = vsub.s32 %v849, %v851
          %v853 = vrot.slane %v846, %v852
          %v855 = vunpack.c.l.s4 1966171168
          %v856 = vunpack.c.0.s8 %v855
          %v857 = vlaneseq
          %v858 = vshrl.u32 %v857, 7
          %v859 = vsub.s32 %v856, %v858
          %v860 = vrot.slane %v853, %v859
          %s862 = scalar_lea.vmem [#allocation2], 16
          %863 = vst.msk [vmem:[%s862] ss:$2 sm:$0x3] %vm825, %v860
          %v864 = vcombine.high %v853, %v853
          %v866 = vunpack.c.l.s4 1966171168
          %v867 = vunpack.c.0.s8 %v866
          %v868 = vlaneseq
          %v869 = vshrl.u32 %v868, 7
          %v870 = vsub.s32 %v867, %v869
          %v871 = vrot.slane %v864, %v870
          %s873 = scalar_lea.vmem [#allocation2], 20
          %874 = vst.msk [vmem:[%s873] ss:$2 sm:$0x3] %vm825, %v871
          %v875 = vcombine.high %v860, %v860
          %s877 = scalar_lea.vmem [#allocation2], 24
          %878 = vst.msk [vmem:[%s877] ss:$2 sm:$0x3] %vm825, %v875
          %v879 = vcombine.high %v871, %v871
          %s881 = scalar_lea.vmem [#allocation2], 28
          %882 = vst.msk [vmem:[%s881] ss:$2 sm:$0x3] %vm825, %v879
          %v885 = vcombine.low %v798, %v799
          %v887 = vunpack.c.l.s4 1966171168
          %v888 = vunpack.c.0.s8 %v887
          %v889 = vlaneseq
          %v890 = vshrl.u32 %v889, 7
          %v891 = vsub.s32 %v888, %v890
          %v892 = vrot.slane %v885, %v891
          %v894 = vunpack.c.l.s4 1966171168
          %v895 = vunpack.c.0.s8 %v894
          %v896 = vlaneseq
          %v897 = vshrl.u32 %v896, 7
          %v898 = vsub.s32 %v895, %v897
          %v899 = vrot.slane %v892, %v898
          %s901 = scalar_lea.vmem [#allocation2], 32
          %902 = vst.msk [vmem:[%s901] ss:$2 sm:$0x3] %vm825, %v899
          %v903 = vcombine.high %v892, %v892
          %v905 = vunpack.c.l.s4 1966171168
          %v906 = vunpack.c.0.s8 %v905
          %v907 = vlaneseq
          %v908 = vshrl.u32 %v907, 7
          %v909 = vsub.s32 %v906, %v908
          %v910 = vrot.slane %v903, %v909
          %s912 = scalar_lea.vmem [#allocation2], 36
          %913 = vst.msk [vmem:[%s912] ss:$2 sm:$0x3] %vm825, %v910
          %v914 = vcombine.high %v899, %v899
          %s916 = scalar_lea.vmem [#allocation2], 40
          %917 = vst.msk [vmem:[%s916] ss:$2 sm:$0x3] %vm825, %v914
          %v918 = vcombine.high %v910, %v910
          %s920 = scalar_lea.vmem [#allocation2], 44
          %921 = vst.msk [vmem:[%s920] ss:$2 sm:$0x3] %vm825, %v918
          %v922 = vcombine.high %v798, %v799
          %v924 = vunpack.c.l.s4 1966171168
          %v925 = vunpack.c.0.s8 %v924
          %v926 = vlaneseq
          %v927 = vshrl.u32 %v926, 7
          %v928 = vsub.s32 %v925, %v927
          %v929 = vrot.slane %v922, %v928
          %v931 = vunpack.c.l.s4 1966171168
          %v932 = vunpack.c.0.s8 %v931
          %v933 = vlaneseq
          %v934 = vshrl.u32 %v933, 7
          %v935 = vsub.s32 %v932, %v934
          %v936 = vrot.slane %v929, %v935
          %s938 = scalar_lea.vmem [#allocation2], 48
          %939 = vst.msk [vmem:[%s938] ss:$2 sm:$0x3] %vm825, %v936
          %v940 = vcombine.high %v929, %v929
          %v942 = vunpack.c.l.s4 1966171168
          %v943 = vunpack.c.0.s8 %v942
          %v944 = vlaneseq
          %v945 = vshrl.u32 %v944, 7
          %v946 = vsub.s32 %v943, %v945
          %v947 = vrot.slane %v940, %v946
          %s949 = scalar_lea.vmem [#allocation2], 52
          %950 = vst.msk [vmem:[%s949] ss:$2 sm:$0x3] %vm825, %v947
          %v951 = vcombine.high %v936, %v936
          %s953 = scalar_lea.vmem [#allocation2], 56
          %954 = vst.msk [vmem:[%s953] ss:$2 sm:$0x3] %vm825, %v951
          %v955 = vcombine.high %v947, %v947
          %s957 = scalar_lea.vmem [#allocation2], 60
          %958 = vst.msk [vmem:[%s957] ss:$2 sm:$0x3] %vm825, %v955
          %v961 = vcombine.low %v800, %v801
          %v963 = vunpack.c.l.s4 1966171168
          %v964 = vunpack.c.0.s8 %v963
          %v965 = vlaneseq
          %v966 = vshrl.u32 %v965, 7
          %v967 = vsub.s32 %v964, %v966
          %v968 = vrot.slane %v961, %v967
          %v970 = vunpack.c.l.s4 1966171168
          %v971 = vunpack.c.0.s8 %v970
          %v972 = vlaneseq
          %v973 = vshrl.u32 %v972, 7
          %v974 = vsub.s32 %v971, %v973
          %v975 = vrot.slane %v968, %v974
          %s977 = scalar_lea.vmem [#allocation2], 64
          %978 = vst.msk [vmem:[%s977] ss:$2 sm:$0x3] %vm825, %v975
          %v979 = vcombine.high %v968, %v968
          %v981 = vunpack.c.l.s4 1966171168
          %v982 = vunpack.c.0.s8 %v981
          %v983 = vlaneseq
          %v984 = vshrl.u32 %v983, 7
          %v985 = vsub.s32 %v982, %v984
          %v986 = vrot.slane %v979, %v985
          %s988 = scalar_lea.vmem [#allocation2], 68
          %989 = vst.msk [vmem:[%s988] ss:$2 sm:$0x3] %vm825, %v986
          %v990 = vcombine.high %v975, %v975
          %s992 = scalar_lea.vmem [#allocation2], 72
          %993 = vst.msk [vmem:[%s992] ss:$2 sm:$0x3] %vm825, %v990
          %v994 = vcombine.high %v986, %v986
          %s996 = scalar_lea.vmem [#allocation2], 76
          %997 = vst.msk [vmem:[%s996] ss:$2 sm:$0x3] %vm825, %v994
          %v998 = vcombine.high %v800, %v801
          %v1000 = vunpack.c.l.s4 1966171168
          %v1001 = vunpack.c.0.s8 %v1000
          %v1002 = vlaneseq
          %v1003 = vshrl.u32 %v1002, 7
          %v1004 = vsub.s32 %v1001, %v1003
          %v1005 = vrot.slane %v998, %v1004
          %v1007 = vunpack.c.l.s4 1966171168
          %v1008 = vunpack.c.0.s8 %v1007
          %v1009 = vlaneseq
          %v1010 = vshrl.u32 %v1009, 7
          %v1011 = vsub.s32 %v1008, %v1010
          %v1012 = vrot.slane %v1005, %v1011
          %s1014 = scalar_lea.vmem [#allocation2], 80
          %1015 = vst.msk [vmem:[%s1014] ss:$2 sm:$0x3] %vm825, %v1012
          %v1016 = vcombine.high %v1005, %v1005
          %v1018 = vunpack.c.l.s4 1966171168
          %v1019 = vunpack.c.0.s8 %v1018
          %v1020 = vlaneseq
          %v1021 = vshrl.u32 %v1020, 7
          %v1022 = vsub.s32 %v1019, %v1021
          %v1023 = vrot.slane %v1016, %v1022
          %s1025 = scalar_lea.vmem [#allocation2], 84
          %1026 = vst.msk [vmem:[%s1025] ss:$2 sm:$0x3] %vm825, %v1023
          %v1027 = vcombine.high %v1012, %v1012
          %s1029 = scalar_lea.vmem [#allocation2], 88
          %1030 = vst.msk [vmem:[%s1029] ss:$2 sm:$0x3] %vm825, %v1027
          %v1031 = vcombine.high %v1023, %v1023
          %s1033 = scalar_lea.vmem [#allocation2], 92
          %1034 = vst.msk [vmem:[%s1033] ss:$2 sm:$0x3] %vm825, %v1031
          %v1037 = vcombine.low %v802, %v803
          %v1039 = vunpack.c.l.s4 1966171168
          %v1040 = vunpack.c.0.s8 %v1039
          %v1041 = vlaneseq
          %v1042 = vshrl.u32 %v1041, 7
          %v1043 = vsub.s32 %v1040, %v1042
          %v1044 = vrot.slane %v1037, %v1043
          %v1046 = vunpack.c.l.s4 1966171168
          %v1047 = vunpack.c.0.s8 %v1046
          %v1048 = vlaneseq
          %v1049 = vshrl.u32 %v1048, 7
          %v1050 = vsub.s32 %v1047, %v1049
          %v1051 = vrot.slane %v1044, %v1050
          %s1053 = scalar_lea.vmem [#allocation2], 96
          %1054 = vst.msk [vmem:[%s1053] ss:$2 sm:$0x3] %vm825, %v1051
          %v1055 = vcombine.high %v1044, %v1044
          %v1057 = vunpack.c.l.s4 1966171168
          %v1058 = vunpack.c.0.s8 %v1057
          %v1059 = vlaneseq
          %v1060 = vshrl.u32 %v1059, 7
          %v1061 = vsub.s32 %v1058, %v1060
          %v1062 = vrot.slane %v1055, %v1061
          %s1064 = scalar_lea.vmem [#allocation2], 100
          %1065 = vst.msk [vmem:[%s1064] ss:$2 sm:$0x3] %vm825, %v1062
          %v1066 = vcombine.high %v1051, %v1051
          %s1068 = scalar_lea.vmem [#allocation2], 104
          %1069 = vst.msk [vmem:[%s1068] ss:$2 sm:$0x3] %vm825, %v1066
          %v1070 = vcombine.high %v1062, %v1062
          %s1072 = scalar_lea.vmem [#allocation2], 108
          %1073 = vst.msk [vmem:[%s1072] ss:$2 sm:$0x3] %vm825, %v1070
          %v1074 = vcombine.high %v802, %v803
          %v1076 = vunpack.c.l.s4 1966171168
          %v1077 = vunpack.c.0.s8 %v1076
          %v1078 = vlaneseq
          %v1079 = vshrl.u32 %v1078, 7
          %v1080 = vsub.s32 %v1077, %v1079
          %v1081 = vrot.slane %v1074, %v1080
          %v1083 = vunpack.c.l.s4 1966171168
          %v1084 = vunpack.c.0.s8 %v1083
          %v1085 = vlaneseq
          %v1086 = vshrl.u32 %v1085, 7
          %v1087 = vsub.s32 %v1084, %v1086
          %v1088 = vrot.slane %v1081, %v1087
          %s1090 = scalar_lea.vmem [#allocation2], 112
          %1091 = vst.msk [vmem:[%s1090] ss:$2 sm:$0x3] %vm825, %v1088
          %v1092 = vcombine.high %v1081, %v1081
          %v1094 = vunpack.c.l.s4 1966171168
          %v1095 = vunpack.c.0.s8 %v1094
          %v1096 = vlaneseq
          %v1097 = vshrl.u32 %v1096, 7
          %v1098 = vsub.s32 %v1095, %v1097
          %v1099 = vrot.slane %v1092, %v1098
          %s1101 = scalar_lea.vmem [#allocation2], 116
          %1102 = vst.msk [vmem:[%s1101] ss:$2 sm:$0x3] %vm825, %v1099
          %v1103 = vcombine.high %v1088, %v1088
          %s1105 = scalar_lea.vmem [#allocation2], 120
          %1106 = vst.msk [vmem:[%s1105] ss:$2 sm:$0x3] %vm825, %v1103
          %v1107 = vcombine.high %v1099, %v1099
          %s1109 = scalar_lea.vmem [#allocation2], 124
          %1110 = vst.msk [vmem:[%s1109] ss:$2 sm:$0x3] %vm825, %v1107
          %s1111 = scalar_lea.vmem %s0, 32
          %v1112 = vld [vmem:[%s1111] sm:$0xff]
          %v1113 = vld [vmem:[%s1111 + $0x8] sm:$0xff]
          %v1114 = vld [vmem:[%s1111 + $0x10] sm:$0x1]
          %v1115 = vld [vmem:[%s1111 + $0x18] sm:$0x1]
          %v1117 = vsel %vm348, %v1114, 0
          %v1120 = vsel %vm348, %v1115, 0
          %1122 = vmatprep.subr.mxu0 0.0
          %1123 = vmatpush1.msra.mxu0 0.0
          %1124 = vmatprep.subr.mxu0 0.0
          %1125 = vmatpush1.msra.mxu0 0.0
          %1126 = vmatprep.subr.mxu0 0.0
          %1127 = vmatpush1.msra.mxu0 0.0
          %1128 = vmatprep.subr.mxu0 0.0
          %1129 = vmatpush1.msra.mxu0 0.0
          %1130 = vmatprep.subr.mxu0 0.0
          %1131 = vmatpush1.msra.mxu0 0.0
          %1132 = vmatprep.subr.mxu0 0.0
          %1133 = vmatpush1.msra.mxu0 0.0
          %1134 = vmatprep.subr.mxu0 0.0
          %1135 = vmatpush1.msra.mxu0 0.0
          %1136 = vmatprep.subr.mxu0 0.0
          %1137 = vmatpush1.msra.mxu0 0.0
          %1138 = vmatprep.subr.mxu0 0.0
          %1139 = vmatpush1.msra.mxu0 0.0
          %1140 = vmatprep.subr.mxu0 0.0
          %1141 = vmatpush1.msra.mxu0 0.0
          %1142 = vmatprep.subr.mxu0 0.0
          %1143 = vmatpush1.msra.mxu0 0.0
          %1144 = vmatprep.subr.mxu0 0.0
          %1145 = vmatpush1.msra.mxu0 0.0
          %1146 = vmatprep.subr.mxu0 0.0
          %1147 = vmatpush1.msra.mxu0 0.0
          %1148 = vmatprep.subr.mxu0 0.0
          %1149 = vmatpush1.msra.mxu0 0.0
          %1150 = vmatprep.subr.mxu0 %v1120
          %1151 = vmatpush1.msra.mxu0 %v1117
          %1152 = vmatprep.subr.mxu0 %v1113
          %1153 = vmatpush1.msra.mxu0 %v1112
          %1154 = vmatprep.subr.mxu0 0.0
          %1155 = vmatpush2.msra.mxu0 0.0
          %1156 = vmatprep.subr.mxu0 0.0
          %1157 = vmatpush2.msra.mxu0 0.0
          %1158 = vmatprep.subr.mxu0 0.0
          %1159 = vmatpush2.msra.mxu0 0.0
          %1160 = vmatprep.subr.mxu0 0.0
          %1161 = vmatpush2.msra.mxu0 0.0
          %1162 = vmatprep.subr.mxu0 0.0
          %1163 = vmatpush2.msra.mxu0 0.0
          %1164 = vmatprep.subr.mxu0 0.0
          %1165 = vmatpush2.msra.mxu0 0.0
          %1166 = vmatprep.subr.mxu0 0.0
          %1167 = vmatpush2.msra.mxu0 0.0
          %1168 = vmatprep.subr.mxu0 0.0
          %1169 = vmatpush2.msra.mxu0 0.0
          %1170 = vmatprep.subr.mxu0 0.0
          %1171 = vmatpush2.msra.mxu0 0.0
          %1172 = vmatprep.subr.mxu0 0.0
          %1173 = vmatpush2.msra.mxu0 0.0
          %1174 = vmatprep.subr.mxu0 0.0
          %1175 = vmatpush2.msra.mxu0 0.0
          %1176 = vmatprep.subr.mxu0 0.0
          %1177 = vmatpush2.msra.mxu0 0.0
          %1178 = vmatprep.subr.mxu0 0.0
          %1179 = vmatpush2.msra.mxu0 0.0
          %1180 = vmatprep.subr.mxu0 0.0
          %1181 = vmatpush2.msra.mxu0 0.0
          %1182 = vmatprep.subr.mxu0 0.0
          %1183 = vmatpush2.msra.mxu0 0.0
          %1184 = vmatprep.subr.mxu0 0.0
          %1185 = vmatpush2.msra.mxu0 0.0
          %1186 = vmatprep.mubr.f32.mxu0 0.0
          %1187 = vmatmul.mubr.f32.gmra.mxu0 %v337
          %v1188 = vpop.f32.mrf.mxu0
          %v1189 = vadd.f32 0.0, %v1188
          %v1190 = vpop.f32.mrf.mxu0
          %v1191 = vadd.f32 0.0, %v1190
          %1192 = vmatprep.mubr.f32.mxu0 0.0
          %1193 = vmatmul.mubr.f32.gmra.mxu0 %v340
          %v1194 = vpop.f32.mrf.mxu0
          %v1195 = vadd.f32 0.0, %v1194
          %v1196 = vpop.f32.mrf.mxu0
          %v1197 = vadd.f32 0.0, %v1196
          %1198 = vmatprep.mubr.f32.mxu0 0.0
          %1199 = vmatmul.mubr.f32.gmra.mxu0 %v343
          %v1200 = vpop.f32.mrf.mxu0
          %v1201 = vadd.f32 0.0, %v1200
          %v1202 = vpop.f32.mrf.mxu0
          %v1203 = vadd.f32 0.0, %v1202
          %1204 = vmatprep.mubr.f32.mxu0 0.0
          %1205 = vmatmul.mubr.f32.gmra.mxu0 %v346
          %v1206 = vpop.f32.mrf.mxu0
          %v1207 = vadd.f32 0.0, %v1206
          %v1208 = vpop.f32.mrf.mxu0
          %v1209 = vadd.f32 0.0, %v1208
          %1210 = vdwg.mxu0
          %s1211 = scalar_lea.vmem %s0, 96
          %v1212 = vld [vmem:[%s1211] sm:$0xff]
          %v1213 = vld [vmem:[%s1211 + $0x8] sm:$0xff]
          %v1214 = vld [vmem:[%s1211 + $0x10] sm:$0x1]
          %v1215 = vld [vmem:[%s1211 + $0x18] sm:$0x1]
          %v1217 = vsel %vm348, %v1214, 0
          %v1220 = vsel %vm348, %v1215, 0
          %1222 = vmatprep.subr.mxu0 0.0
          %1223 = vmatpush1.msra.mxu0 0.0
          %1224 = vmatprep.subr.mxu0 0.0
          %1225 = vmatpush1.msra.mxu0 0.0
          %1226 = vmatprep.subr.mxu0 0.0
          %1227 = vmatpush1.msra.mxu0 0.0
          %1228 = vmatprep.subr.mxu0 0.0
          %1229 = vmatpush1.msra.mxu0 0.0
          %1230 = vmatprep.subr.mxu0 0.0
          %1231 = vmatpush1.msra.mxu0 0.0
          %1232 = vmatprep.subr.mxu0 0.0
          %1233 = vmatpush1.msra.mxu0 0.0
          %1234 = vmatprep.subr.mxu0 0.0
          %1235 = vmatpush1.msra.mxu0 0.0
          %1236 = vmatprep.subr.mxu0 0.0
          %1237 = vmatpush1.msra.mxu0 0.0
          %1238 = vmatprep.subr.mxu0 0.0
          %1239 = vmatpush1.msra.mxu0 0.0
          %1240 = vmatprep.subr.mxu0 0.0
          %1241 = vmatpush1.msra.mxu0 0.0
          %1242 = vmatprep.subr.mxu0 0.0
          %1243 = vmatpush1.msra.mxu0 0.0
          %1244 = vmatprep.subr.mxu0 0.0
          %1245 = vmatpush1.msra.mxu0 0.0
          %1246 = vmatprep.subr.mxu0 0.0
          %1247 = vmatpush1.msra.mxu0 0.0
          %1248 = vmatprep.subr.mxu0 0.0
          %1249 = vmatpush1.msra.mxu0 0.0
          %1250 = vmatprep.subr.mxu0 %v1220
          %1251 = vmatpush1.msra.mxu0 %v1217
          %1252 = vmatprep.subr.mxu0 %v1213
          %1253 = vmatpush1.msra.mxu0 %v1212
          %1254 = vmatprep.subr.mxu0 0.0
          %1255 = vmatpush2.msra.mxu0 0.0
          %1256 = vmatprep.subr.mxu0 0.0
          %1257 = vmatpush2.msra.mxu0 0.0
          %1258 = vmatprep.subr.mxu0 0.0
          %1259 = vmatpush2.msra.mxu0 0.0
          %1260 = vmatprep.subr.mxu0 0.0
          %1261 = vmatpush2.msra.mxu0 0.0
          %1262 = vmatprep.subr.mxu0 0.0
          %1263 = vmatpush2.msra.mxu0 0.0
          %1264 = vmatprep.subr.mxu0 0.0
          %1265 = vmatpush2.msra.mxu0 0.0
          %1266 = vmatprep.subr.mxu0 0.0
          %1267 = vmatpush2.msra.mxu0 0.0
          %1268 = vmatprep.subr.mxu0 0.0
          %1269 = vmatpush2.msra.mxu0 0.0
          %1270 = vmatprep.subr.mxu0 0.0
          %1271 = vmatpush2.msra.mxu0 0.0
          %1272 = vmatprep.subr.mxu0 0.0
          %1273 = vmatpush2.msra.mxu0 0.0
          %1274 = vmatprep.subr.mxu0 0.0
          %1275 = vmatpush2.msra.mxu0 0.0
          %1276 = vmatprep.subr.mxu0 0.0
          %1277 = vmatpush2.msra.mxu0 0.0
          %1278 = vmatprep.subr.mxu0 0.0
          %1279 = vmatpush2.msra.mxu0 0.0
          %1280 = vmatprep.subr.mxu0 0.0
          %1281 = vmatpush2.msra.mxu0 0.0
          %1282 = vmatprep.subr.mxu0 0.0
          %1283 = vmatpush2.msra.mxu0 0.0
          %1284 = vmatprep.subr.mxu0 0.0
          %1285 = vmatpush2.msra.mxu0 0.0
          %1286 = vmatprep.mubr.f32.mxu0 0.0
          %1287 = vmatmul.mubr.f32.gmra.mxu0 %v337
          %v1288 = vpop.f32.mrf.mxu0
          %v1289 = vadd.f32 0.0, %v1288
          %v1290 = vpop.f32.mrf.mxu0
          %v1291 = vadd.f32 0.0, %v1290
          %1292 = vmatprep.mubr.f32.mxu0 0.0
          %1293 = vmatmul.mubr.f32.gmra.mxu0 %v340
          %v1294 = vpop.f32.mrf.mxu0
          %v1295 = vadd.f32 0.0, %v1294
          %v1296 = vpop.f32.mrf.mxu0
          %v1297 = vadd.f32 0.0, %v1296
          %1298 = vmatprep.mubr.f32.mxu0 0.0
          %1299 = vmatmul.mubr.f32.gmra.mxu0 %v343
          %v1300 = vpop.f32.mrf.mxu0
          %v1301 = vadd.f32 0.0, %v1300
          %v1302 = vpop.f32.mrf.mxu0
          %v1303 = vadd.f32 0.0, %v1302
          %1304 = vmatprep.mubr.f32.mxu0 0.0
          %1305 = vmatmul.mubr.f32.gmra.mxu0 %v346
          %v1306 = vpop.f32.mrf.mxu0
          %v1307 = vadd.f32 0.0, %v1306
          %v1308 = vpop.f32.mrf.mxu0
          %v1309 = vadd.f32 0.0, %v1308
          %1310 = vdwg.mxu0
          %s1311 = scalar_lea.vmem %s0, 160
          %v1312 = vld [vmem:[%s1311] sm:$0xff]
          %v1313 = vld [vmem:[%s1311 + $0x8] sm:$0xff]
          %v1314 = vld [vmem:[%s1311 + $0x10] sm:$0x1]
          %v1315 = vld [vmem:[%s1311 + $0x18] sm:$0x1]
          %v1317 = vsel %vm348, %v1314, 0
          %v1320 = vsel %vm348, %v1315, 0
          %1322 = vmatprep.subr.mxu0 0.0
          %1323 = vmatpush1.msra.mxu0 0.0
          %1324 = vmatprep.subr.mxu0 0.0
          %1325 = vmatpush1.msra.mxu0 0.0
          %1326 = vmatprep.subr.mxu0 0.0
          %1327 = vmatpush1.msra.mxu0 0.0
          %1328 = vmatprep.subr.mxu0 0.0
          %1329 = vmatpush1.msra.mxu0 0.0
          %1330 = vmatprep.subr.mxu0 0.0
          %1331 = vmatpush1.msra.mxu0 0.0
          %1332 = vmatprep.subr.mxu0 0.0
          %1333 = vmatpush1.msra.mxu0 0.0
          %1334 = vmatprep.subr.mxu0 0.0
          %1335 = vmatpush1.msra.mxu0 0.0
          %1336 = vmatprep.subr.mxu0 0.0
          %1337 = vmatpush1.msra.mxu0 0.0
          %1338 = vmatprep.subr.mxu0 0.0
          %1339 = vmatpush1.msra.mxu0 0.0
          %1340 = vmatprep.subr.mxu0 0.0
          %1341 = vmatpush1.msra.mxu0 0.0
          %1342 = vmatprep.subr.mxu0 0.0
          %1343 = vmatpush1.msra.mxu0 0.0
          %1344 = vmatprep.subr.mxu0 0.0
          %1345 = vmatpush1.msra.mxu0 0.0
          %1346 = vmatprep.subr.mxu0 0.0
          %1347 = vmatpush1.msra.mxu0 0.0
          %1348 = vmatprep.subr.mxu0 0.0
          %1349 = vmatpush1.msra.mxu0 0.0
          %1350 = vmatprep.subr.mxu0 %v1320
          %1351 = vmatpush1.msra.mxu0 %v1317
          %1352 = vmatprep.subr.mxu0 %v1313
          %1353 = vmatpush1.msra.mxu0 %v1312
          %1354 = vmatprep.subr.mxu0 0.0
          %1355 = vmatpush2.msra.mxu0 0.0
          %1356 = vmatprep.subr.mxu0 0.0
          %1357 = vmatpush2.msra.mxu0 0.0
          %1358 = vmatprep.subr.mxu0 0.0
          %1359 = vmatpush2.msra.mxu0 0.0
          %1360 = vmatprep.subr.mxu0 0.0
          %1361 = vmatpush2.msra.mxu0 0.0
          %1362 = vmatprep.subr.mxu0 0.0
          %1363 = vmatpush2.msra.mxu0 0.0
          %1364 = vmatprep.subr.mxu0 0.0
          %1365 = vmatpush2.msra.mxu0 0.0
          %1366 = vmatprep.subr.mxu0 0.0
          %1367 = vmatpush2.msra.mxu0 0.0
          %1368 = vmatprep.subr.mxu0 0.0
          %1369 = vmatpush2.msra.mxu0 0.0
          %1370 = vmatprep.subr.mxu0 0.0
          %1371 = vmatpush2.msra.mxu0 0.0
          %1372 = vmatprep.subr.mxu0 0.0
          %1373 = vmatpush2.msra.mxu0 0.0
          %1374 = vmatprep.subr.mxu0 0.0
          %1375 = vmatpush2.msra.mxu0 0.0
          %1376 = vmatprep.subr.mxu0 0.0
          %1377 = vmatpush2.msra.mxu0 0.0
          %1378 = vmatprep.subr.mxu0 0.0
          %1379 = vmatpush2.msra.mxu0 0.0
          %1380 = vmatprep.subr.mxu0 0.0
          %1381 = vmatpush2.msra.mxu0 0.0
          %1382 = vmatprep.subr.mxu0 0.0
          %1383 = vmatpush2.msra.mxu0 0.0
          %1384 = vmatprep.subr.mxu0 0.0
          %1385 = vmatpush2.msra.mxu0 0.0
          %1386 = vmatprep.mubr.f32.mxu0 0.0
          %1387 = vmatmul.mubr.f32.gmra.mxu0 %v337
          %v1388 = vpop.f32.mrf.mxu0
          %v1389 = vadd.f32 0.0, %v1388
          %v1390 = vpop.f32.mrf.mxu0
          %v1391 = vadd.f32 0.0, %v1390
          %1392 = vmatprep.mubr.f32.mxu0 0.0
          %1393 = vmatmul.mubr.f32.gmra.mxu0 %v340
          %v1394 = vpop.f32.mrf.mxu0
          %v1395 = vadd.f32 0.0, %v1394
          %v1396 = vpop.f32.mrf.mxu0
          %v1397 = vadd.f32 0.0, %v1396
          %1398 = vmatprep.mubr.f32.mxu0 0.0
          %1399 = vmatmul.mubr.f32.gmra.mxu0 %v343
          %v1400 = vpop.f32.mrf.mxu0
          %v1401 = vadd.f32 0.0, %v1400
          %v1402 = vpop.f32.mrf.mxu0
          %v1403 = vadd.f32 0.0, %v1402
          %1404 = vmatprep.mubr.f32.mxu0 0.0
          %1405 = vmatmul.mubr.f32.gmra.mxu0 %v346
          %v1406 = vpop.f32.mrf.mxu0
          %v1407 = vadd.f32 0.0, %v1406
          %v1408 = vpop.f32.mrf.mxu0
          %v1409 = vadd.f32 0.0, %v1408
          %1410 = vdwg.mxu0
          %s1411 = scalar_lea.vmem %s0, 224
          %v1412 = vld [vmem:[%s1411] sm:$0xff]
          %v1413 = vld [vmem:[%s1411 + $0x8] sm:$0xff]
          %v1414 = vld [vmem:[%s1411 + $0x10] sm:$0x1]
          %v1415 = vld [vmem:[%s1411 + $0x18] sm:$0x1]
          %v1417 = vsel %vm348, %v1414, 0
          %v1420 = vsel %vm348, %v1415, 0
          %1422 = vmatprep.subr.mxu0 0.0
          %1423 = vmatpush1.msra.mxu0 0.0
          %1424 = vmatprep.subr.mxu0 0.0
          %1425 = vmatpush1.msra.mxu0 0.0
          %1426 = vmatprep.subr.mxu0 0.0
          %1427 = vmatpush1.msra.mxu0 0.0
          %1428 = vmatprep.subr.mxu0 0.0
          %1429 = vmatpush1.msra.mxu0 0.0
          %1430 = vmatprep.subr.mxu0 0.0
          %1431 = vmatpush1.msra.mxu0 0.0
          %1432 = vmatprep.subr.mxu0 0.0
          %1433 = vmatpush1.msra.mxu0 0.0
          %1434 = vmatprep.subr.mxu0 0.0
          %1435 = vmatpush1.msra.mxu0 0.0
          %1436 = vmatprep.subr.mxu0 0.0
          %1437 = vmatpush1.msra.mxu0 0.0
          %1438 = vmatprep.subr.mxu0 0.0
          %1439 = vmatpush1.msra.mxu0 0.0
          %1440 = vmatprep.subr.mxu0 0.0
          %1441 = vmatpush1.msra.mxu0 0.0
          %1442 = vmatprep.subr.mxu0 0.0
          %1443 = vmatpush1.msra.mxu0 0.0
          %1444 = vmatprep.subr.mxu0 0.0
          %1445 = vmatpush1.msra.mxu0 0.0
          %1446 = vmatprep.subr.mxu0 0.0
          %1447 = vmatpush1.msra.mxu0 0.0
          %1448 = vmatprep.subr.mxu0 0.0
          %1449 = vmatpush1.msra.mxu0 0.0
          %1450 = vmatprep.subr.mxu0 %v1420
          %1451 = vmatpush1.msra.mxu0 %v1417
          %1452 = vmatprep.subr.mxu0 %v1413
          %1453 = vmatpush1.msra.mxu0 %v1412
          %1454 = vmatprep.subr.mxu0 0.0
          %1455 = vmatpush2.msra.mxu0 0.0
          %1456 = vmatprep.subr.mxu0 0.0
          %1457 = vmatpush2.msra.mxu0 0.0
          %1458 = vmatprep.subr.mxu0 0.0
          %1459 = vmatpush2.msra.mxu0 0.0
          %1460 = vmatprep.subr.mxu0 0.0
          %1461 = vmatpush2.msra.mxu0 0.0
          %1462 = vmatprep.subr.mxu0 0.0
          %1463 = vmatpush2.msra.mxu0 0.0
          %1464 = vmatprep.subr.mxu0 0.0
          %1465 = vmatpush2.msra.mxu0 0.0
          %1466 = vmatprep.subr.mxu0 0.0
          %1467 = vmatpush2.msra.mxu0 0.0
          %1468 = vmatprep.subr.mxu0 0.0
          %1469 = vmatpush2.msra.mxu0 0.0
          %1470 = vmatprep.subr.mxu0 0.0
          %1471 = vmatpush2.msra.mxu0 0.0
          %1472 = vmatprep.subr.mxu0 0.0
          %1473 = vmatpush2.msra.mxu0 0.0
          %1474 = vmatprep.subr.mxu0 0.0
          %1475 = vmatpush2.msra.mxu0 0.0
          %1476 = vmatprep.subr.mxu0 0.0
          %1477 = vmatpush2.msra.mxu0 0.0
          %1478 = vmatprep.subr.mxu0 0.0
          %1479 = vmatpush2.msra.mxu0 0.0
          %1480 = vmatprep.subr.mxu0 0.0
          %1481 = vmatpush2.msra.mxu0 0.0
          %1482 = vmatprep.subr.mxu0 0.0
          %1483 = vmatpush2.msra.mxu0 0.0
          %1484 = vmatprep.subr.mxu0 0.0
          %1485 = vmatpush2.msra.mxu0 0.0
          %1486 = vmatprep.mubr.f32.mxu0 0.0
          %1487 = vmatmul.mubr.f32.gmra.mxu0 %v337
          %v1488 = vpop.f32.mrf.mxu0
          %v1489 = vadd.f32 0.0, %v1488
          %v1490 = vpop.f32.mrf.mxu0
          %v1491 = vadd.f32 0.0, %v1490
          %1492 = vmatprep.mubr.f32.mxu0 0.0
          %1493 = vmatmul.mubr.f32.gmra.mxu0 %v340
          %v1494 = vpop.f32.mrf.mxu0
          %v1495 = vadd.f32 0.0, %v1494
          %v1496 = vpop.f32.mrf.mxu0
          %v1497 = vadd.f32 0.0, %v1496
          %1498 = vmatprep.mubr.f32.mxu0 0.0
          %1499 = vmatmul.mubr.f32.gmra.mxu0 %v343
          %v1500 = vpop.f32.mrf.mxu0
          %v1501 = vadd.f32 0.0, %v1500
          %v1502 = vpop.f32.mrf.mxu0
          %v1503 = vadd.f32 0.0, %v1502
          %1504 = vmatprep.mubr.f32.mxu0 0.0
          %1505 = vmatmul.mubr.f32.gmra.mxu0 %v346
          %v1506 = vpop.f32.mrf.mxu0
          %v1507 = vadd.f32 0.0, %v1506
          %v1508 = vpop.f32.mrf.mxu0
          %v1509 = vadd.f32 0.0, %v1508
          %1510 = vdwg.mxu0
          %v1511 = vmax.f32 %v1189, %v1289
          %v1512 = vmax.f32 %v1191, %v1291
          %v1513 = vmax.f32 %v1195, %v1295
          %v1514 = vmax.f32 %v1197, %v1297
          %v1515 = vmax.f32 %v1201, %v1301
          %v1516 = vmax.f32 %v1203, %v1303
          %v1517 = vmax.f32 %v1207, %v1307
          %v1518 = vmax.f32 %v1209, %v1309
          %v1519 = vmax.f32 %v1389, %v1489
          %v1520 = vmax.f32 %v1391, %v1491
          %v1521 = vmax.f32 %v1395, %v1495
          %v1522 = vmax.f32 %v1397, %v1497
          %v1523 = vmax.f32 %v1401, %v1501
          %v1524 = vmax.f32 %v1403, %v1503
          %v1525 = vmax.f32 %v1407, %v1507
          %v1526 = vmax.f32 %v1409, %v1509
          %v1527 = vmax.f32 %v1511, %v1519
          %v1528 = vmax.f32 %v1512, %v1520
          %v1529 = vmax.f32 %v1513, %v1521
          %v1530 = vmax.f32 %v1514, %v1522
          %v1531 = vmax.f32 %v1515, %v1523
          %v1532 = vmax.f32 %v1516, %v1524
          %v1533 = vmax.f32 %v1517, %v1525
          %v1534 = vmax.f32 %v1518, %v1526
          %v1535 = vadd.f32 %v1527, %v771
          %v1536 = vadd.f32 %v1528, %v771
          %v1537 = vadd.f32 %v1529, %v776
          %v1538 = vadd.f32 %v1530, %v776
          %v1539 = vadd.f32 %v1531, %v781
          %v1540 = vadd.f32 %v1532, %v781
          %v1541 = vadd.f32 %v1533, %v786
          %v1542 = vadd.f32 %v1534, %v786
          %v1543 = vmax.f32 %v1535, 0.0
          %v1544 = vmax.f32 %v1536, 0.0
          %v1545 = vmax.f32 %v1537, 0.0
          %v1546 = vmax.f32 %v1538, 0.0
          %v1547 = vmax.f32 %v1539, 0.0
          %v1548 = vmax.f32 %v1540, 0.0
          %v1549 = vmax.f32 %v1541, 0.0
          %v1550 = vmax.f32 %v1542, 0.0
          %v1553 = vcombine.low %v1543, %v1544
          %v1555 = vunpack.c.l.s4 1966171168
          %v1556 = vunpack.c.0.s8 %v1555
          %v1557 = vlaneseq
          %v1558 = vshrl.u32 %v1557, 7
          %v1559 = vsub.s32 %v1556, %v1558
          %v1560 = vrot.slane %v1553, %v1559
          %v1562 = vunpack.c.l.s4 1966171168
          %v1563 = vunpack.c.0.s8 %v1562
          %v1564 = vlaneseq
          %v1565 = vshrl.u32 %v1564, 7
          %v1566 = vsub.s32 %v1563, %v1565
          %v1567 = vrot.slane %v1560, %v1566
          %s1569 = scalar_lea.vmem [#allocation2], 1
          %1570 = vst.msk [vmem:[%s1569] ss:$2 sm:$0x3] %vm825, %v1567
          %v1571 = vcombine.high %v1560, %v1560
          %v1573 = vunpack.c.l.s4 1966171168
          %v1574 = vunpack.c.0.s8 %v1573
          %v1575 = vlaneseq
          %v1576 = vshrl.u32 %v1575, 7
          %v1577 = vsub.s32 %v1574, %v1576
          %v1578 = vrot.slane %v1571, %v1577
          %s1580 = scalar_lea.vmem %s836, 1 [#allocation2]
          %1581 = vst.msk [vmem:[%s1580] ss:$2 sm:$0x3] %vm825, %v1578
          %v1582 = vcombine.high %v1567, %v1567
          %s1584 = scalar_lea.vmem %s840, 1 [#allocation2]
          %1585 = vst.msk [vmem:[%s1584] ss:$2 sm:$0x3] %vm825, %v1582
          %v1586 = vcombine.high %v1578, %v1578
          %s1588 = scalar_lea.vmem %s844, 1 [#allocation2]
          %1589 = vst.msk [vmem:[%s1588] ss:$2 sm:$0x3] %vm825, %v1586
          %v1590 = vcombine.high %v1543, %v1544
          %v1592 = vunpack.c.l.s4 1966171168
          %v1593 = vunpack.c.0.s8 %v1592
          %v1594 = vlaneseq
          %v1595 = vshrl.u32 %v1594, 7
          %v1596 = vsub.s32 %v1593, %v1595
          %v1597 = vrot.slane %v1590, %v1596
          %v1599 = vunpack.c.l.s4 1966171168
          %v1600 = vunpack.c.0.s8 %v1599
          %v1601 = vlaneseq
          %v1602 = vshrl.u32 %v1601, 7
          %v1603 = vsub.s32 %v1600, %v1602
          %v1604 = vrot.slane %v1597, %v1603
          %s1606 = scalar_lea.vmem %s862, 1 [#allocation2]
          %1607 = vst.msk [vmem:[%s1606] ss:$2 sm:$0x3] %vm825, %v1604
          %v1608 = vcombine.high %v1597, %v1597
          %v1610 = vunpack.c.l.s4 1966171168
          %v1611 = vunpack.c.0.s8 %v1610
          %v1612 = vlaneseq
          %v1613 = vshrl.u32 %v1612, 7
          %v1614 = vsub.s32 %v1611, %v1613
          %v1615 = vrot.slane %v1608, %v1614
          %s1617 = scalar_lea.vmem %s873, 1 [#allocation2]
          %1618 = vst.msk [vmem:[%s1617] ss:$2 sm:$0x3] %vm825, %v1615
          %v1619 = vcombine.high %v1604, %v1604
          %s1621 = scalar_lea.vmem %s877, 1 [#allocation2]
          %1622 = vst.msk [vmem:[%s1621] ss:$2 sm:$0x3] %vm825, %v1619
          %v1623 = vcombine.high %v1615, %v1615
          %s1625 = scalar_lea.vmem %s881, 1 [#allocation2]
          %1626 = vst.msk [vmem:[%s1625] ss:$2 sm:$0x3] %vm825, %v1623
          %v1629 = vcombine.low %v1545, %v1546
          %v1631 = vunpack.c.l.s4 1966171168
          %v1632 = vunpack.c.0.s8 %v1631
          %v1633 = vlaneseq
          %v1634 = vshrl.u32 %v1633, 7
          %v1635 = vsub.s32 %v1632, %v1634
          %v1636 = vrot.slane %v1629, %v1635
          %v1638 = vunpack.c.l.s4 1966171168
          %v1639 = vunpack.c.0.s8 %v1638
          %v1640 = vlaneseq
          %v1641 = vshrl.u32 %v1640, 7
          %v1642 = vsub.s32 %v1639, %v1641
          %v1643 = vrot.slane %v1636, %v1642
          %s1645 = scalar_lea.vmem %s901, 1 [#allocation2]
          %1646 = vst.msk [vmem:[%s1645] ss:$2 sm:$0x3] %vm825, %v1643
          %v1647 = vcombine.high %v1636, %v1636
          %v1649 = vunpack.c.l.s4 1966171168
          %v1650 = vunpack.c.0.s8 %v1649
          %v1651 = vlaneseq
          %v1652 = vshrl.u32 %v1651, 7
          %v1653 = vsub.s32 %v1650, %v1652
          %v1654 = vrot.slane %v1647, %v1653
          %s1656 = scalar_lea.vmem %s912, 1 [#allocation2]
          %1657 = vst.msk [vmem:[%s1656] ss:$2 sm:$0x3] %vm825, %v1654
          %v1658 = vcombine.high %v1643, %v1643
          %s1660 = scalar_lea.vmem %s916, 1 [#allocation2]
          %1661 = vst.msk [vmem:[%s1660] ss:$2 sm:$0x3] %vm825, %v1658
          %v1662 = vcombine.high %v1654, %v1654
          %s1664 = scalar_lea.vmem %s920, 1 [#allocation2]
          %1665 = vst.msk [vmem:[%s1664] ss:$2 sm:$0x3] %vm825, %v1662
          %v1666 = vcombine.high %v1545, %v1546
          %v1668 = vunpack.c.l.s4 1966171168
          %v1669 = vunpack.c.0.s8 %v1668
          %v1670 = vlaneseq
          %v1671 = vshrl.u32 %v1670, 7
          %v1672 = vsub.s32 %v1669, %v1671
          %v1673 = vrot.slane %v1666, %v1672
          %v1675 = vunpack.c.l.s4 1966171168
          %v1676 = vunpack.c.0.s8 %v1675
          %v1677 = vlaneseq
          %v1678 = vshrl.u32 %v1677, 7
          %v1679 = vsub.s32 %v1676, %v1678
          %v1680 = vrot.slane %v1673, %v1679
          %s1682 = scalar_lea.vmem %s938, 1 [#allocation2]
          %1683 = vst.msk [vmem:[%s1682] ss:$2 sm:$0x3] %vm825, %v1680
          %v1684 = vcombine.high %v1673, %v1673
          %v1686 = vunpack.c.l.s4 1966171168
          %v1687 = vunpack.c.0.s8 %v1686
          %v1688 = vlaneseq
          %v1689 = vshrl.u32 %v1688, 7
          %v1690 = vsub.s32 %v1687, %v1689
          %v1691 = vrot.slane %v1684, %v1690
          %s1693 = scalar_lea.vmem %s949, 1 [#allocation2]
          %1694 = vst.msk [vmem:[%s1693] ss:$2 sm:$0x3] %vm825, %v1691
          %v1695 = vcombine.high %v1680, %v1680
          %s1697 = scalar_lea.vmem %s953, 1 [#allocation2]
          %1698 = vst.msk [vmem:[%s1697] ss:$2 sm:$0x3] %vm825, %v1695
          %v1699 = vcombine.high %v1691, %v1691
          %s1701 = scalar_lea.vmem %s957, 1 [#allocation2]
          %1702 = vst.msk [vmem:[%s1701] ss:$2 sm:$0x3] %vm825, %v1699
          %v1705 = vcombine.low %v1547, %v1548
          %v1707 = vunpack.c.l.s4 1966171168
          %v1708 = vunpack.c.0.s8 %v1707
          %v1709 = vlaneseq
          %v1710 = vshrl.u32 %v1709, 7
          %v1711 = vsub.s32 %v1708, %v1710
          %v1712 = vrot.slane %v1705, %v1711
          %v1714 = vunpack.c.l.s4 1966171168
          %v1715 = vunpack.c.0.s8 %v1714
          %v1716 = vlaneseq
          %v1717 = vshrl.u32 %v1716, 7
          %v1718 = vsub.s32 %v1715, %v1717
          %v1719 = vrot.slane %v1712, %v1718
          %s1721 = scalar_lea.vmem %s977, 1 [#allocation2]
          %1722 = vst.msk [vmem:[%s1721] ss:$2 sm:$0x3] %vm825, %v1719
          %v1723 = vcombine.high %v1712, %v1712
          %v1725 = vunpack.c.l.s4 1966171168
          %v1726 = vunpack.c.0.s8 %v1725
          %v1727 = vlaneseq
          %v1728 = vshrl.u32 %v1727, 7
          %v1729 = vsub.s32 %v1726, %v1728
          %v1730 = vrot.slane %v1723, %v1729
          %s1732 = scalar_lea.vmem %s988, 1 [#allocation2]
          %1733 = vst.msk [vmem:[%s1732] ss:$2 sm:$0x3] %vm825, %v1730
          %v1734 = vcombine.high %v1719, %v1719
          %s1736 = scalar_lea.vmem %s992, 1 [#allocation2]
          %1737 = vst.msk [vmem:[%s1736] ss:$2 sm:$0x3] %vm825, %v1734
          %v1738 = vcombine.high %v1730, %v1730
          %s1740 = scalar_lea.vmem %s996, 1 [#allocation2]
          %1741 = vst.msk [vmem:[%s1740] ss:$2 sm:$0x3] %vm825, %v1738
          %v1742 = vcombine.high %v1547, %v1548
          %v1744 = vunpack.c.l.s4 1966171168
          %v1745 = vunpack.c.0.s8 %v1744
          %v1746 = vlaneseq
          %v1747 = vshrl.u32 %v1746, 7
          %v1748 = vsub.s32 %v1745, %v1747
          %v1749 = vrot.slane %v1742, %v1748
          %v1751 = vunpack.c.l.s4 1966171168
          %v1752 = vunpack.c.0.s8 %v1751
          %v1753 = vlaneseq
          %v1754 = vshrl.u32 %v1753, 7
          %v1755 = vsub.s32 %v1752, %v1754
          %v1756 = vrot.slane %v1749, %v1755
          %s1758 = scalar_lea.vmem %s1014, 1 [#allocation2]
          %1759 = vst.msk [vmem:[%s1758] ss:$2 sm:$0x3] %vm825, %v1756
          %v1760 = vcombine.high %v1749, %v1749
          %v1762 = vunpack.c.l.s4 1966171168
          %v1763 = vunpack.c.0.s8 %v1762
          %v1764 = vlaneseq
          %v1765 = vshrl.u32 %v1764, 7
          %v1766 = vsub.s32 %v1763, %v1765
          %v1767 = vrot.slane %v1760, %v1766
          %s1769 = scalar_lea.vmem %s1025, 1 [#allocation2]
          %1770 = vst.msk [vmem:[%s1769] ss:$2 sm:$0x3] %vm825, %v1767
          %v1771 = vcombine.high %v1756, %v1756
          %s1773 = scalar_lea.vmem %s1029, 1 [#allocation2]
          %1774 = vst.msk [vmem:[%s1773] ss:$2 sm:$0x3] %vm825, %v1771
          %v1775 = vcombine.high %v1767, %v1767
          %s1777 = scalar_lea.vmem %s1033, 1 [#allocation2]
          %1778 = vst.msk [vmem:[%s1777] ss:$2 sm:$0x3] %vm825, %v1775
          %v1781 = vcombine.low %v1549, %v1550
          %v1783 = vunpack.c.l.s4 1966171168
          %v1784 = vunpack.c.0.s8 %v1783
          %v1785 = vlaneseq
          %v1786 = vshrl.u32 %v1785, 7
          %v1787 = vsub.s32 %v1784, %v1786
          %v1788 = vrot.slane %v1781, %v1787
          %v1790 = vunpack.c.l.s4 1966171168
          %v1791 = vunpack.c.0.s8 %v1790
          %v1792 = vlaneseq
          %v1793 = vshrl.u32 %v1792, 7
          %v1794 = vsub.s32 %v1791, %v1793
          %v1795 = vrot.slane %v1788, %v1794
          %s1797 = scalar_lea.vmem %s1053, 1 [#allocation2]
          %1798 = vst.msk [vmem:[%s1797] ss:$2 sm:$0x3] %vm825, %v1795
          %v1799 = vcombine.high %v1788, %v1788
          %v1801 = vunpack.c.l.s4 1966171168
          %v1802 = vunpack.c.0.s8 %v1801
          %v1803 = vlaneseq
          %v1804 = vshrl.u32 %v1803, 7
          %v1805 = vsub.s32 %v1802, %v1804
          %v1806 = vrot.slane %v1799, %v1805
          %s1808 = scalar_lea.vmem %s1064, 1 [#allocation2]
          %1809 = vst.msk [vmem:[%s1808] ss:$2 sm:$0x3] %vm825, %v1806
          %v1810 = vcombine.high %v1795, %v1795
          %s1812 = scalar_lea.vmem %s1068, 1 [#allocation2]
          %1813 = vst.msk [vmem:[%s1812] ss:$2 sm:$0x3] %vm825, %v1810
          %v1814 = vcombine.high %v1806, %v1806
          %s1816 = scalar_lea.vmem %s1072, 1 [#allocation2]
          %1817 = vst.msk [vmem:[%s1816] ss:$2 sm:$0x3] %vm825, %v1814
          %v1818 = vcombine.high %v1549, %v1550
          %v1820 = vunpack.c.l.s4 1966171168
          %v1821 = vunpack.c.0.s8 %v1820
          %v1822 = vlaneseq
          %v1823 = vshrl.u32 %v1822, 7
          %v1824 = vsub.s32 %v1821, %v1823
          %v1825 = vrot.slane %v1818, %v1824
          %v1827 = vunpack.c.l.s4 1966171168
          %v1828 = vunpack.c.0.s8 %v1827
          %v1829 = vlaneseq
          %v1830 = vshrl.u32 %v1829, 7
          %v1831 = vsub.s32 %v1828, %v1830
          %v1832 = vrot.slane %v1825, %v1831
          %s1834 = scalar_lea.vmem %s1090, 1 [#allocation2]
          %1835 = vst.msk [vmem:[%s1834] ss:$2 sm:$0x3] %vm825, %v1832
          %v1836 = vcombine.high %v1825, %v1825
          %v1838 = vunpack.c.l.s4 1966171168
          %v1839 = vunpack.c.0.s8 %v1838
          %v1840 = vlaneseq
          %v1841 = vshrl.u32 %v1840, 7
          %v1842 = vsub.s32 %v1839, %v1841
          %v1843 = vrot.slane %v1836, %v1842
          %s1845 = scalar_lea.vmem %s1101, 1 [#allocation2]
          %1846 = vst.msk [vmem:[%s1845] ss:$2 sm:$0x3] %vm825, %v1843
          %v1847 = vcombine.high %v1832, %v1832
          %s1849 = scalar_lea.vmem %s1105, 1 [#allocation2]
          %1850 = vst.msk [vmem:[%s1849] ss:$2 sm:$0x3] %vm825, %v1847
          %v1851 = vcombine.high %v1843, %v1843
          %s1853 = scalar_lea.vmem %s1109, 1 [#allocation2]
          %1854 = vst.msk [vmem:[%s1853] ss:$2 sm:$0x3] %vm825, %v1851
          %1855 = vst [vmem:[#allocation3] sm:$0x3] 0.0
        $region60: #{simple_cnn_forward.1} parent=55 // pred_fallthru
          _
        %s1856 = smul.u32 %s21, 8
        %s1857 = smul.u32 %s1856, 2
        %s1858 = smul.addr %s1857, 2
        %s1859 = scalar_lea.vmem [#allocation2], %s1858
        %v1860 = vld [vmem:[%s1859] sm:$0xf]
        %v1861 = vld [vmem:[%s318] sm:$0xff]
        %v1862 = vld [vmem:[%s318 + $0x8] sm:$0xff]
        %v1863 = vld [vmem:[%s318 + $0x10] sm:$0xff]
        %v1864 = vld [vmem:[%s318 + $0x18] sm:$0xff]
        %v1865 = vld [vmem:[%s318 + $0x20] sm:$0xff]
        %v1866 = vld [vmem:[%s318 + $0x28] sm:$0xff]
        %v1867 = vld [vmem:[%s318 + $0x30] sm:$0xff]
        %v1868 = vld [vmem:[%s318 + $0x38] sm:$0xff]
        %v1869 = vld [vmem:[%s318 + $0x40] sm:$0xff]
        %v1870 = vld [vmem:[%s318 + $0x48] sm:$0xff]
        %v1871 = vld [vmem:[%s318 + $0x50] sm:$0xff]
        %v1872 = vld [vmem:[%s318 + $0x58] sm:$0xff]
        %v1873 = vld [vmem:[%s318 + $0x60] sm:$0xff]
        %v1874 = vld [vmem:[%s318 + $0x68] sm:$0xff]
        %v1875 = vld [vmem:[%s318 + $0x70] sm:$0xff]
        %v1876 = vld [vmem:[%s318 + $0x78] sm:$0xff]
        %v1877 = vld [vmem:[%s318 + $0x80] sm:$0xff]
        %v1878 = vld [vmem:[%s318 + $0x88] sm:$0xff]
        %v1879 = vld [vmem:[%s318 + $0x90] sm:$0xff]
        %v1880 = vld [vmem:[%s318 + $0x98] sm:$0xff]
        %v1881 = vld [vmem:[%s318 + $0xa0] sm:$0xff]
        %v1882 = vld [vmem:[%s318 + $0xa8] sm:$0xff]
        %v1883 = vld [vmem:[%s318 + $0xb0] sm:$0xff]
        %v1884 = vld [vmem:[%s318 + $0xb8] sm:$0xff]
        %v1885 = vld [vmem:[%s318 + $0xc0] sm:$0xf]
        %s1886 = sadd.s32 %s1856, 1
        %s1887 = smul.u32 %s1886, 2
        %s1888 = smul.addr %s1887, 2
        %s1889 = scalar_lea.vmem [#allocation2], %s1888
        %v1890 = vld [vmem:[%s1889] sm:$0xf]
        %s1891 = scalar_lea.vmem %s318, 200
        %v1892 = vld [vmem:[%s1891] sm:$0xff]
        %v1893 = vld [vmem:[%s1891 + $0x8] sm:$0xff]
        %v1894 = vld [vmem:[%s1891 + $0x10] sm:$0xff]
        %v1895 = vld [vmem:[%s1891 + $0x18] sm:$0xff]
        %v1896 = vld [vmem:[%s1891 + $0x20] sm:$0xff]
        %v1897 = vld [vmem:[%s1891 + $0x28] sm:$0xff]
        %v1898 = vld [vmem:[%s1891 + $0x30] sm:$0xff]
        %v1899 = vld [vmem:[%s1891 + $0x38] sm:$0xff]
        %v1900 = vld [vmem:[%s1891 + $0x40] sm:$0xff]
        %v1901 = vld [vmem:[%s1891 + $0x48] sm:$0xff]
        %v1902 = vld [vmem:[%s1891 + $0x50] sm:$0xff]
        %v1903 = vld [vmem:[%s1891 + $0x58] sm:$0xff]
        %v1904 = vld [vmem:[%s1891 + $0x60] sm:$0xff]
        %v1905 = vld [vmem:[%s1891 + $0x68] sm:$0xff]
        %v1906 = vld [vmem:[%s1891 + $0x70] sm:$0xff]
        %v1907 = vld [vmem:[%s1891 + $0x78] sm:$0xff]
        %v1908 = vld [vmem:[%s1891 + $0x80] sm:$0xff]
        %v1909 = vld [vmem:[%s1891 + $0x88] sm:$0xff]
        %v1910 = vld [vmem:[%s1891 + $0x90] sm:$0xff]
        %v1911 = vld [vmem:[%s1891 + $0x98] sm:$0xff]
        %v1912 = vld [vmem:[%s1891 + $0xa0] sm:$0xff]
        %v1913 = vld [vmem:[%s1891 + $0xa8] sm:$0xff]
        %v1914 = vld [vmem:[%s1891 + $0xb0] sm:$0xff]
        %v1915 = vld [vmem:[%s1891 + $0xb8] sm:$0xff]
        %v1916 = vld [vmem:[%s1891 + $0xc0] sm:$0xf]
        %v1919 = vunpack.c.l.s4 1983009808
        %v1920 = vunpack.c.0.s8 %v1919
        %v1921 = vlaneseq
        %v1922 = vshrl.u32 %v1921, 7
        %v1923 = vsub.s32 %v1920, %v1922
        %v1924 = vrot.slane %v1890, %v1923
        %v1925 = vcombine.high %v1924, %v1924
        %vm1927 = vcmask 556032
        %v1928 = vsel %vm1927, %v1925, 0
        %vm1930 = vcmask 1043456
        %v1932 = vsel %vm1930, %v1916, 0
        %1934 = vmatprep.subr.mxu0 0.0
        %1935 = vmatpush1.msra.mxu0 %v1907
        %1936 = vmatprep.subr.mxu0 0.0
        %1937 = vmatpush1.msra.mxu0 %v1906
        %1938 = vmatprep.subr.mxu0 0.0
        %1939 = vmatpush1.msra.mxu0 %v1905
        %1940 = vmatprep.subr.mxu0 0.0
        %1941 = vmatpush1.msra.mxu0 %v1904
        %1942 = vmatprep.subr.mxu0 0.0
        %1943 = vmatpush1.msra.mxu0 %v1903
        %1944 = vmatprep.subr.mxu0 0.0
        %1945 = vmatpush1.msra.mxu0 %v1902
        %1946 = vmatprep.subr.mxu0 0.0
        %1947 = vmatpush1.msra.mxu0 %v1901
        %1948 = vmatprep.subr.mxu0 0.0
        %1949 = vmatpush1.msra.mxu0 %v1900
        %1950 = vmatprep.subr.mxu0 0.0
        %1951 = vmatpush1.msra.mxu0 %v1899
        %1952 = vmatprep.subr.mxu0 0.0
        %1953 = vmatpush1.msra.mxu0 %v1898
        %1954 = vmatprep.subr.mxu0 0.0
        %1955 = vmatpush1.msra.mxu0 %v1897
        %1956 = vmatprep.subr.mxu0 0.0
        %1957 = vmatpush1.msra.mxu0 %v1896
        %1958 = vmatprep.subr.mxu0 0.0
        %1959 = vmatpush1.msra.mxu0 %v1895
        %1960 = vmatprep.subr.mxu0 0.0
        %1961 = vmatpush1.msra.mxu0 %v1894
        %1962 = vmatprep.subr.mxu0 0.0
        %1963 = vmatpush1.msra.mxu0 %v1893
        %1964 = vmatprep.subr.mxu0 0.0
        %1965 = vmatpush1.msra.mxu0 %v1892
        %1966 = vmatprep.subr.mxu0 0.0
        %1967 = vmatpush2.msra.mxu0 0.0
        %1968 = vmatprep.subr.mxu0 0.0
        %1969 = vmatpush2.msra.mxu0 0.0
        %1970 = vmatprep.subr.mxu0 0.0
        %1971 = vmatpush2.msra.mxu0 0.0
        %1972 = vmatprep.subr.mxu0 0.0
        %1973 = vmatpush2.msra.mxu0 0.0
        %1974 = vmatprep.subr.mxu0 0.0
        %1975 = vmatpush2.msra.mxu0 0.0
        %1976 = vmatprep.subr.mxu0 0.0
        %1977 = vmatpush2.msra.mxu0 0.0
        %1978 = vmatprep.subr.mxu0 0.0
        %1979 = vmatpush2.msra.mxu0 0.0
        %1980 = vmatprep.subr.mxu0 0.0
        %1981 = vmatpush2.msra.mxu0 %v1932
        %1982 = vmatprep.subr.mxu0 0.0
        %1983 = vmatpush2.msra.mxu0 %v1915
        %1984 = vmatprep.subr.mxu0 0.0
        %1985 = vmatpush2.msra.mxu0 %v1914
        %1986 = vmatprep.subr.mxu0 0.0
        %1987 = vmatpush2.msra.mxu0 %v1913
        %1988 = vmatprep.subr.mxu0 0.0
        %1989 = vmatpush2.msra.mxu0 %v1912
        %1990 = vmatprep.subr.mxu0 0.0
        %1991 = vmatpush2.msra.mxu0 %v1911
        %1992 = vmatprep.subr.mxu0 0.0
        %1993 = vmatpush2.msra.mxu0 %v1910
        %1994 = vmatprep.subr.mxu0 0.0
        %1995 = vmatpush2.msra.mxu0 %v1909
        %1996 = vmatprep.subr.mxu0 0.0
        %1997 = vmatpush2.msra.mxu0 %v1908
        %1998 = vmatprep.mubr.f32.mxu0 %v1928
        %1999 = vmatmul.mubr.f32.gmra.mxu0 %v1924
        %v2000 = vpop.f32.mrf.mxu0
        %v2001 = vadd.f32 0.0, %v2000
        %v2002 = vpop.f32.mrf.mxu0
        %2003 = vdwg.mxu0
        %v2006 = vunpack.c.l.s4 1983009808
        %v2007 = vunpack.c.0.s8 %v2006
        %v2008 = vlaneseq
        %v2009 = vshrl.u32 %v2008, 7
        %v2010 = vsub.s32 %v2007, %v2009
        %v2011 = vrot.slane %v1860, %v2010
        %v2012 = vcombine.high %v2011, %v2011
        %v2014 = vsel %vm1927, %v2012, 0
        %v2017 = vsel %vm1930, %v1885, 0
        %2019 = vmatprep.subr.mxu0 0.0
        %2020 = vmatpush1.msra.mxu0 %v1876
        %2021 = vmatprep.subr.mxu0 0.0
        %2022 = vmatpush1.msra.mxu0 %v1875
        %2023 = vmatprep.subr.mxu0 0.0
        %2024 = vmatpush1.msra.mxu0 %v1874
        %2025 = vmatprep.subr.mxu0 0.0
        %2026 = vmatpush1.msra.mxu0 %v1873
        %2027 = vmatprep.subr.mxu0 0.0
        %2028 = vmatpush1.msra.mxu0 %v1872
        %2029 = vmatprep.subr.mxu0 0.0
        %2030 = vmatpush1.msra.mxu0 %v1871
        %2031 = vmatprep.subr.mxu0 0.0
        %2032 = vmatpush1.msra.mxu0 %v1870
        %2033 = vmatprep.subr.mxu0 0.0
        %2034 = vmatpush1.msra.mxu0 %v1869
        %2035 = vmatprep.subr.mxu0 0.0
        %2036 = vmatpush1.msra.mxu0 %v1868
        %2037 = vmatprep.subr.mxu0 0.0
        %2038 = vmatpush1.msra.mxu0 %v1867
        %2039 = vmatprep.subr.mxu0 0.0
        %2040 = vmatpush1.msra.mxu0 %v1866
        %2041 = vmatprep.subr.mxu0 0.0
        %2042 = vmatpush1.msra.mxu0 %v1865
        %2043 = vmatprep.subr.mxu0 0.0
        %2044 = vmatpush1.msra.mxu0 %v1864
        %2045 = vmatprep.subr.mxu0 0.0
        %2046 = vmatpush1.msra.mxu0 %v1863
        %2047 = vmatprep.subr.mxu0 0.0
        %2048 = vmatpush1.msra.mxu0 %v1862
        %2049 = vmatprep.subr.mxu0 0.0
        %2050 = vmatpush1.msra.mxu0 %v1861
        %2051 = vmatprep.subr.mxu0 0.0
        %2052 = vmatpush2.msra.mxu0 0.0
        %2053 = vmatprep.subr.mxu0 0.0
        %2054 = vmatpush2.msra.mxu0 0.0
        %2055 = vmatprep.subr.mxu0 0.0
        %2056 = vmatpush2.msra.mxu0 0.0
        %2057 = vmatprep.subr.mxu0 0.0
        %2058 = vmatpush2.msra.mxu0 0.0
        %2059 = vmatprep.subr.mxu0 0.0
        %2060 = vmatpush2.msra.mxu0 0.0
        %2061 = vmatprep.subr.mxu0 0.0
        %2062 = vmatpush2.msra.mxu0 0.0
        %2063 = vmatprep.subr.mxu0 0.0
        %2064 = vmatpush2.msra.mxu0 0.0
        %2065 = vmatprep.subr.mxu0 0.0
        %2066 = vmatpush2.msra.mxu0 %v2017
        %2067 = vmatprep.subr.mxu0 0.0
        %2068 = vmatpush2.msra.mxu0 %v1884
        %2069 = vmatprep.subr.mxu0 0.0
        %2070 = vmatpush2.msra.mxu0 %v1883
        %2071 = vmatprep.subr.mxu0 0.0
        %2072 = vmatpush2.msra.mxu0 %v1882
        %2073 = vmatprep.subr.mxu0 0.0
        %2074 = vmatpush2.msra.mxu0 %v1881
        %2075 = vmatprep.subr.mxu0 0.0
        %2076 = vmatpush2.msra.mxu0 %v1880
        %2077 = vmatprep.subr.mxu0 0.0
        %2078 = vmatpush2.msra.mxu0 %v1879
        %2079 = vmatprep.subr.mxu0 0.0
        %2080 = vmatpush2.msra.mxu0 %v1878
        %2081 = vmatprep.subr.mxu0 0.0
        %2082 = vmatpush2.msra.mxu0 %v1877
        %2083 = vmatprep.mubr.f32.mxu0 %v2014
        %2084 = vmatmul.mubr.f32.gmra.mxu0 %v2011
        %v2085 = vpop.f32.mrf.mxu0
        %v2086 = vadd.f32 %v2001, %v2085
        %v2087 = vpop.f32.mrf.mxu0
        %2088 = vdwg.mxu0
        %s2089 = sadd.s32 %s1856, 2
        %s2090 = smul.u32 %s2089, 2
        %s2091 = smul.addr %s2090, 2
        %s2092 = scalar_lea.vmem [#allocation2], %s2091
        %v2093 = vld [vmem:[%s2092] sm:$0xf]
        %s2094 = scalar_lea.vmem %s318, 400
        %v2095 = vld [vmem:[%s2094] sm:$0xff]
        %v2096 = vld [vmem:[%s2094 + $0x8] sm:$0xff]
        %v2097 = vld [vmem:[%s2094 + $0x10] sm:$0xff]
        %v2098 = vld [vmem:[%s2094 + $0x18] sm:$0xff]
        %v2099 = vld [vmem:[%s2094 + $0x20] sm:$0xff]
        %v2100 = vld [vmem:[%s2094 + $0x28] sm:$0xff]
        %v2101 = vld [vmem:[%s2094 + $0x30] sm:$0xff]
        %v2102 = vld [vmem:[%s2094 + $0x38] sm:$0xff]
        %v2103 = vld [vmem:[%s2094 + $0x40] sm:$0xff]
        %v2104 = vld [vmem:[%s2094 + $0x48] sm:$0xff]
        %v2105 = vld [vmem:[%s2094 + $0x50] sm:$0xff]
        %v2106 = vld [vmem:[%s2094 + $0x58] sm:$0xff]
        %v2107 = vld [vmem:[%s2094 + $0x60] sm:$0xff]
        %v2108 = vld [vmem:[%s2094 + $0x68] sm:$0xff]
        %v2109 = vld [vmem:[%s2094 + $0x70] sm:$0xff]
        %v2110 = vld [vmem:[%s2094 + $0x78] sm:$0xff]
        %v2111 = vld [vmem:[%s2094 + $0x80] sm:$0xff]
        %v2112 = vld [vmem:[%s2094 + $0x88] sm:$0xff]
        %v2113 = vld [vmem:[%s2094 + $0x90] sm:$0xff]
        %v2114 = vld [vmem:[%s2094 + $0x98] sm:$0xff]
        %v2115 = vld [vmem:[%s2094 + $0xa0] sm:$0xff]
        %v2116 = vld [vmem:[%s2094 + $0xa8] sm:$0xff]
        %v2117 = vld [vmem:[%s2094 + $0xb0] sm:$0xff]
        %v2118 = vld [vmem:[%s2094 + $0xb8] sm:$0xff]
        %v2119 = vld [vmem:[%s2094 + $0xc0] sm:$0xf]
        %v2122 = vunpack.c.l.s4 1983009808
        %v2123 = vunpack.c.0.s8 %v2122
        %v2124 = vlaneseq
        %v2125 = vshrl.u32 %v2124, 7
        %v2126 = vsub.s32 %v2123, %v2125
        %v2127 = vrot.slane %v2093, %v2126
        %v2128 = vcombine.high %v2127, %v2127
        %v2130 = vsel %vm1927, %v2128, 0
        %v2133 = vsel %vm1930, %v2119, 0
        %2135 = vmatprep.subr.mxu0 0.0
        %2136 = vmatpush1.msra.mxu0 %v2110
        %2137 = vmatprep.subr.mxu0 0.0
        %2138 = vmatpush1.msra.mxu0 %v2109
        %2139 = vmatprep.subr.mxu0 0.0
        %2140 = vmatpush1.msra.mxu0 %v2108
        %2141 = vmatprep.subr.mxu0 0.0
        %2142 = vmatpush1.msra.mxu0 %v2107
        %2143 = vmatprep.subr.mxu0 0.0
        %2144 = vmatpush1.msra.mxu0 %v2106
        %2145 = vmatprep.subr.mxu0 0.0
        %2146 = vmatpush1.msra.mxu0 %v2105
        %2147 = vmatprep.subr.mxu0 0.0
        %2148 = vmatpush1.msra.mxu0 %v2104
        %2149 = vmatprep.subr.mxu0 0.0
        %2150 = vmatpush1.msra.mxu0 %v2103
        %2151 = vmatprep.subr.mxu0 0.0
        %2152 = vmatpush1.msra.mxu0 %v2102
        %2153 = vmatprep.subr.mxu0 0.0
        %2154 = vmatpush1.msra.mxu0 %v2101
        %2155 = vmatprep.subr.mxu0 0.0
        %2156 = vmatpush1.msra.mxu0 %v2100
        %2157 = vmatprep.subr.mxu0 0.0
        %2158 = vmatpush1.msra.mxu0 %v2099
        %2159 = vmatprep.subr.mxu0 0.0
        %2160 = vmatpush1.msra.mxu0 %v2098
        %2161 = vmatprep.subr.mxu0 0.0
        %2162 = vmatpush1.msra.mxu0 %v2097
        %2163 = vmatprep.subr.mxu0 0.0
        %2164 = vmatpush1.msra.mxu0 %v2096
        %2165 = vmatprep.subr.mxu0 0.0
        %2166 = vmatpush1.msra.mxu0 %v2095
        %2167 = vmatprep.subr.mxu0 0.0
        %2168 = vmatpush2.msra.mxu0 0.0
        %2169 = vmatprep.subr.mxu0 0.0
        %2170 = vmatpush2.msra.mxu0 0.0
        %2171 = vmatprep.subr.mxu0 0.0
        %2172 = vmatpush2.msra.mxu0 0.0
        %2173 = vmatprep.subr.mxu0 0.0
        %2174 = vmatpush2.msra.mxu0 0.0
        %2175 = vmatprep.subr.mxu0 0.0
        %2176 = vmatpush2.msra.mxu0 0.0
        %2177 = vmatprep.subr.mxu0 0.0
        %2178 = vmatpush2.msra.mxu0 0.0
        %2179 = vmatprep.subr.mxu0 0.0
        %2180 = vmatpush2.msra.mxu0 0.0
        %2181 = vmatprep.subr.mxu0 0.0
        %2182 = vmatpush2.msra.mxu0 %v2133
        %2183 = vmatprep.subr.mxu0 0.0
        %2184 = vmatpush2.msra.mxu0 %v2118
        %2185 = vmatprep.subr.mxu0 0.0
        %2186 = vmatpush2.msra.mxu0 %v2117
        %2187 = vmatprep.subr.mxu0 0.0
        %2188 = vmatpush2.msra.mxu0 %v2116
        %2189 = vmatprep.subr.mxu0 0.0
        %2190 = vmatpush2.msra.mxu0 %v2115
        %2191 = vmatprep.subr.mxu0 0.0
        %2192 = vmatpush2.msra.mxu0 %v2114
        %2193 = vmatprep.subr.mxu0 0.0
        %2194 = vmatpush2.msra.mxu0 %v2113
        %2195 = vmatprep.subr.mxu0 0.0
        %2196 = vmatpush2.msra.mxu0 %v2112
        %2197 = vmatprep.subr.mxu0 0.0
        %2198 = vmatpush2.msra.mxu0 %v2111
        %2199 = vmatprep.mubr.f32.mxu0 %v2130
        %2200 = vmatmul.mubr.f32.gmra.mxu0 %v2127
        %v2201 = vpop.f32.mrf.mxu0
        %v2202 = vadd.f32 0.0, %v2201
        %v2203 = vpop.f32.mrf.mxu0
        %2204 = vdwg.mxu0
        %v2205 = vadd.f32 %v2086, %v2202
        %s2206 = sadd.s32 %s1856, 3
        %s2207 = smul.u32 %s2206, 2
        %s2208 = smul.addr %s2207, 2
        %s2209 = scalar_lea.vmem [#allocation2], %s2208
        %v2210 = vld [vmem:[%s2209] sm:$0xf]
        %s2211 = scalar_lea.vmem %s318, 600
        %v2212 = vld [vmem:[%s2211] sm:$0xff]
        %v2213 = vld [vmem:[%s2211 + $0x8] sm:$0xff]
        %v2214 = vld [vmem:[%s2211 + $0x10] sm:$0xff]
        %v2215 = vld [vmem:[%s2211 + $0x18] sm:$0xff]
        %v2216 = vld [vmem:[%s2211 + $0x20] sm:$0xff]
        %v2217 = vld [vmem:[%s2211 + $0x28] sm:$0xff]
        %v2218 = vld [vmem:[%s2211 + $0x30] sm:$0xff]
        %v2219 = vld [vmem:[%s2211 + $0x38] sm:$0xff]
        %v2220 = vld [vmem:[%s2211 + $0x40] sm:$0xff]
        %v2221 = vld [vmem:[%s2211 + $0x48] sm:$0xff]
        %v2222 = vld [vmem:[%s2211 + $0x50] sm:$0xff]
        %v2223 = vld [vmem:[%s2211 + $0x58] sm:$0xff]
        %v2224 = vld [vmem:[%s2211 + $0x60] sm:$0xff]
        %v2225 = vld [vmem:[%s2211 + $0x68] sm:$0xff]
        %v2226 = vld [vmem:[%s2211 + $0x70] sm:$0xff]
        %v2227 = vld [vmem:[%s2211 + $0x78] sm:$0xff]
        %v2228 = vld [vmem:[%s2211 + $0x80] sm:$0xff]
        %v2229 = vld [vmem:[%s2211 + $0x88] sm:$0xff]
        %v2230 = vld [vmem:[%s2211 + $0x90] sm:$0xff]
        %v2231 = vld [vmem:[%s2211 + $0x98] sm:$0xff]
        %v2232 = vld [vmem:[%s2211 + $0xa0] sm:$0xff]
        %v2233 = vld [vmem:[%s2211 + $0xa8] sm:$0xff]
        %v2234 = vld [vmem:[%s2211 + $0xb0] sm:$0xff]
        %v2235 = vld [vmem:[%s2211 + $0xb8] sm:$0xff]
        %v2236 = vld [vmem:[%s2211 + $0xc0] sm:$0xf]
        %v2239 = vunpack.c.l.s4 1983009808
        %v2240 = vunpack.c.0.s8 %v2239
        %v2241 = vlaneseq
        %v2242 = vshrl.u32 %v2241, 7
        %v2243 = vsub.s32 %v2240, %v2242
        %v2244 = vrot.slane %v2210, %v2243
        %v2245 = vcombine.high %v2244, %v2244
        %v2247 = vsel %vm1927, %v2245, 0
        %v2250 = vsel %vm1930, %v2236, 0
        %2252 = vmatprep.subr.mxu0 0.0
        %2253 = vmatpush1.msra.mxu0 %v2227
        %2254 = vmatprep.subr.mxu0 0.0
        %2255 = vmatpush1.msra.mxu0 %v2226
        %2256 = vmatprep.subr.mxu0 0.0
        %2257 = vmatpush1.msra.mxu0 %v2225
        %2258 = vmatprep.subr.mxu0 0.0
        %2259 = vmatpush1.msra.mxu0 %v2224
        %2260 = vmatprep.subr.mxu0 0.0
        %2261 = vmatpush1.msra.mxu0 %v2223
        %2262 = vmatprep.subr.mxu0 0.0
        %2263 = vmatpush1.msra.mxu0 %v2222
        %2264 = vmatprep.subr.mxu0 0.0
        %2265 = vmatpush1.msra.mxu0 %v2221
        %2266 = vmatprep.subr.mxu0 0.0
        %2267 = vmatpush1.msra.mxu0 %v2220
        %2268 = vmatprep.subr.mxu0 0.0
        %2269 = vmatpush1.msra.mxu0 %v2219
        %2270 = vmatprep.subr.mxu0 0.0
        %2271 = vmatpush1.msra.mxu0 %v2218
        %2272 = vmatprep.subr.mxu0 0.0
        %2273 = vmatpush1.msra.mxu0 %v2217
        %2274 = vmatprep.subr.mxu0 0.0
        %2275 = vmatpush1.msra.mxu0 %v2216
        %2276 = vmatprep.subr.mxu0 0.0
        %2277 = vmatpush1.msra.mxu0 %v2215
        %2278 = vmatprep.subr.mxu0 0.0
        %2279 = vmatpush1.msra.mxu0 %v2214
        %2280 = vmatprep.subr.mxu0 0.0
        %2281 = vmatpush1.msra.mxu0 %v2213
        %2282 = vmatprep.subr.mxu0 0.0
        %2283 = vmatpush1.msra.mxu0 %v2212
        %2284 = vmatprep.subr.mxu0 0.0
        %2285 = vmatpush2.msra.mxu0 0.0
        %2286 = vmatprep.subr.mxu0 0.0
        %2287 = vmatpush2.msra.mxu0 0.0
        %2288 = vmatprep.subr.mxu0 0.0
        %2289 = vmatpush2.msra.mxu0 0.0
        %2290 = vmatprep.subr.mxu0 0.0
        %2291 = vmatpush2.msra.mxu0 0.0
        %2292 = vmatprep.subr.mxu0 0.0
        %2293 = vmatpush2.msra.mxu0 0.0
        %2294 = vmatprep.subr.mxu0 0.0
        %2295 = vmatpush2.msra.mxu0 0.0
        %2296 = vmatprep.subr.mxu0 0.0
        %2297 = vmatpush2.msra.mxu0 0.0
        %2298 = vmatprep.subr.mxu0 0.0
        %2299 = vmatpush2.msra.mxu0 %v2250
        %2300 = vmatprep.subr.mxu0 0.0
        %2301 = vmatpush2.msra.mxu0 %v2235
        %2302 = vmatprep.subr.mxu0 0.0
        %2303 = vmatpush2.msra.mxu0 %v2234
        %2304 = vmatprep.subr.mxu0 0.0
        %2305 = vmatpush2.msra.mxu0 %v2233
        %2306 = vmatprep.subr.mxu0 0.0
        %2307 = vmatpush2.msra.mxu0 %v2232
        %2308 = vmatprep.subr.mxu0 0.0
        %2309 = vmatpush2.msra.mxu0 %v2231
        %2310 = vmatprep.subr.mxu0 0.0
        %2311 = vmatpush2.msra.mxu0 %v2230
        %2312 = vmatprep.subr.mxu0 0.0
        %2313 = vmatpush2.msra.mxu0 %v2229
        %2314 = vmatprep.subr.mxu0 0.0
        %2315 = vmatpush2.msra.mxu0 %v2228
        %2316 = vmatprep.mubr.f32.mxu0 %v2247
        %2317 = vmatmul.mubr.f32.gmra.mxu0 %v2244
        %v2318 = vpop.f32.mrf.mxu0
        %v2319 = vadd.f32 0.0, %v2318
        %v2320 = vpop.f32.mrf.mxu0
        %2321 = vdwg.mxu0
        %v2322 = vadd.f32 %v2205, %v2319
        %s2323 = sadd.s32 %s1856, 4
        %s2324 = smul.u32 %s2323, 2
        %s2325 = smul.addr %s2324, 2
        %s2326 = scalar_lea.vmem [#allocation2], %s2325
        %v2327 = vld [vmem:[%s2326] sm:$0xf]
        %s2328 = scalar_lea.vmem %s318, 800
        %v2329 = vld [vmem:[%s2328] sm:$0xff]
        %v2330 = vld [vmem:[%s2328 + $0x8] sm:$0xff]
        %v2331 = vld [vmem:[%s2328 + $0x10] sm:$0xff]
        %v2332 = vld [vmem:[%s2328 + $0x18] sm:$0xff]
        %v2333 = vld [vmem:[%s2328 + $0x20] sm:$0xff]
        %v2334 = vld [vmem:[%s2328 + $0x28] sm:$0xff]
        %v2335 = vld [vmem:[%s2328 + $0x30] sm:$0xff]
        %v2336 = vld [vmem:[%s2328 + $0x38] sm:$0xff]
        %v2337 = vld [vmem:[%s2328 + $0x40] sm:$0xff]
        %v2338 = vld [vmem:[%s2328 + $0x48] sm:$0xff]
        %v2339 = vld [vmem:[%s2328 + $0x50] sm:$0xff]
        %v2340 = vld [vmem:[%s2328 + $0x58] sm:$0xff]
        %v2341 = vld [vmem:[%s2328 + $0x60] sm:$0xff]
        %v2342 = vld [vmem:[%s2328 + $0x68] sm:$0xff]
        %v2343 = vld [vmem:[%s2328 + $0x70] sm:$0xff]
        %v2344 = vld [vmem:[%s2328 + $0x78] sm:$0xff]
        %v2345 = vld [vmem:[%s2328 + $0x80] sm:$0xff]
        %v2346 = vld [vmem:[%s2328 + $0x88] sm:$0xff]
        %v2347 = vld [vmem:[%s2328 + $0x90] sm:$0xff]
        %v2348 = vld [vmem:[%s2328 + $0x98] sm:$0xff]
        %v2349 = vld [vmem:[%s2328 + $0xa0] sm:$0xff]
        %v2350 = vld [vmem:[%s2328 + $0xa8] sm:$0xff]
        %v2351 = vld [vmem:[%s2328 + $0xb0] sm:$0xff]
        %v2352 = vld [vmem:[%s2328 + $0xb8] sm:$0xff]
        %v2353 = vld [vmem:[%s2328 + $0xc0] sm:$0xf]
        %v2356 = vunpack.c.l.s4 1983009808
        %v2357 = vunpack.c.0.s8 %v2356
        %v2358 = vlaneseq
        %v2359 = vshrl.u32 %v2358, 7
        %v2360 = vsub.s32 %v2357, %v2359
        %v2361 = vrot.slane %v2327, %v2360
        %v2362 = vcombine.high %v2361, %v2361
        %v2364 = vsel %vm1927, %v2362, 0
        %v2367 = vsel %vm1930, %v2353, 0
        %2369 = vmatprep.subr.mxu0 0.0
        %2370 = vmatpush1.msra.mxu0 %v2344
        %2371 = vmatprep.subr.mxu0 0.0
        %2372 = vmatpush1.msra.mxu0 %v2343
        %2373 = vmatprep.subr.mxu0 0.0
        %2374 = vmatpush1.msra.mxu0 %v2342
        %2375 = vmatprep.subr.mxu0 0.0
        %2376 = vmatpush1.msra.mxu0 %v2341
        %2377 = vmatprep.subr.mxu0 0.0
        %2378 = vmatpush1.msra.mxu0 %v2340
        %2379 = vmatprep.subr.mxu0 0.0
        %2380 = vmatpush1.msra.mxu0 %v2339
        %2381 = vmatprep.subr.mxu0 0.0
        %2382 = vmatpush1.msra.mxu0 %v2338
        %2383 = vmatprep.subr.mxu0 0.0
        %2384 = vmatpush1.msra.mxu0 %v2337
        %2385 = vmatprep.subr.mxu0 0.0
        %2386 = vmatpush1.msra.mxu0 %v2336
        %2387 = vmatprep.subr.mxu0 0.0
        %2388 = vmatpush1.msra.mxu0 %v2335
        %2389 = vmatprep.subr.mxu0 0.0
        %2390 = vmatpush1.msra.mxu0 %v2334
        %2391 = vmatprep.subr.mxu0 0.0
        %2392 = vmatpush1.msra.mxu0 %v2333
        %2393 = vmatprep.subr.mxu0 0.0
        %2394 = vmatpush1.msra.mxu0 %v2332
        %2395 = vmatprep.subr.mxu0 0.0
        %2396 = vmatpush1.msra.mxu0 %v2331
        %2397 = vmatprep.subr.mxu0 0.0
        %2398 = vmatpush1.msra.mxu0 %v2330
        %2399 = vmatprep.subr.mxu0 0.0
        %2400 = vmatpush1.msra.mxu0 %v2329
        %2401 = vmatprep.subr.mxu0 0.0
        %2402 = vmatpush2.msra.mxu0 0.0
        %2403 = vmatprep.subr.mxu0 0.0
        %2404 = vmatpush2.msra.mxu0 0.0
        %2405 = vmatprep.subr.mxu0 0.0
        %2406 = vmatpush2.msra.mxu0 0.0
        %2407 = vmatprep.subr.mxu0 0.0
        %2408 = vmatpush2.msra.mxu0 0.0
        %2409 = vmatprep.subr.mxu0 0.0
        %2410 = vmatpush2.msra.mxu0 0.0
        %2411 = vmatprep.subr.mxu0 0.0
        %2412 = vmatpush2.msra.mxu0 0.0
        %2413 = vmatprep.subr.mxu0 0.0
        %2414 = vmatpush2.msra.mxu0 0.0
        %2415 = vmatprep.subr.mxu0 0.0
        %2416 = vmatpush2.msra.mxu0 %v2367
        %2417 = vmatprep.subr.mxu0 0.0
        %2418 = vmatpush2.msra.mxu0 %v2352
        %2419 = vmatprep.subr.mxu0 0.0
        %2420 = vmatpush2.msra.mxu0 %v2351
        %2421 = vmatprep.subr.mxu0 0.0
        %2422 = vmatpush2.msra.mxu0 %v2350
        %2423 = vmatprep.subr.mxu0 0.0
        %2424 = vmatpush2.msra.mxu0 %v2349
        %2425 = vmatprep.subr.mxu0 0.0
        %2426 = vmatpush2.msra.mxu0 %v2348
        %2427 = vmatprep.subr.mxu0 0.0
        %2428 = vmatpush2.msra.mxu0 %v2347
        %2429 = vmatprep.subr.mxu0 0.0
        %2430 = vmatpush2.msra.mxu0 %v2346
        %2431 = vmatprep.subr.mxu0 0.0
        %2432 = vmatpush2.msra.mxu0 %v2345
        %2433 = vmatprep.mubr.f32.mxu0 %v2364
        %2434 = vmatmul.mubr.f32.gmra.mxu0 %v2361
        %v2435 = vpop.f32.mrf.mxu0
        %v2436 = vadd.f32 0.0, %v2435
        %v2437 = vpop.f32.mrf.mxu0
        %2438 = vdwg.mxu0
        %v2439 = vadd.f32 %v2322, %v2436
        %s2440 = sadd.s32 %s1856, 5
        %s2441 = smul.u32 %s2440, 2
        %s2442 = smul.addr %s2441, 2
        %s2443 = scalar_lea.vmem [#allocation2], %s2442
        %v2444 = vld [vmem:[%s2443] sm:$0xf]
        %s2445 = scalar_lea.vmem %s318, 1000
        %v2446 = vld [vmem:[%s2445] sm:$0xff]
        %v2447 = vld [vmem:[%s2445 + $0x8] sm:$0xff]
        %v2448 = vld [vmem:[%s2445 + $0x10] sm:$0xff]
        %v2449 = vld [vmem:[%s2445 + $0x18] sm:$0xff]
        %v2450 = vld [vmem:[%s2445 + $0x20] sm:$0xff]
        %v2451 = vld [vmem:[%s2445 + $0x28] sm:$0xff]
        %v2452 = vld [vmem:[%s2445 + $0x30] sm:$0xff]
        %v2453 = vld [vmem:[%s2445 + $0x38] sm:$0xff]
        %v2454 = vld [vmem:[%s2445 + $0x40] sm:$0xff]
        %v2455 = vld [vmem:[%s2445 + $0x48] sm:$0xff]
        %v2456 = vld [vmem:[%s2445 + $0x50] sm:$0xff]
        %v2457 = vld [vmem:[%s2445 + $0x58] sm:$0xff]
        %v2458 = vld [vmem:[%s2445 + $0x60] sm:$0xff]
        %v2459 = vld [vmem:[%s2445 + $0x68] sm:$0xff]
        %v2460 = vld [vmem:[%s2445 + $0x70] sm:$0xff]
        %v2461 = vld [vmem:[%s2445 + $0x78] sm:$0xff]
        %v2462 = vld [vmem:[%s2445 + $0x80] sm:$0xff]
        %v2463 = vld [vmem:[%s2445 + $0x88] sm:$0xff]
        %v2464 = vld [vmem:[%s2445 + $0x90] sm:$0xff]
        %v2465 = vld [vmem:[%s2445 + $0x98] sm:$0xff]
        %v2466 = vld [vmem:[%s2445 + $0xa0] sm:$0xff]
        %v2467 = vld [vmem:[%s2445 + $0xa8] sm:$0xff]
        %v2468 = vld [vmem:[%s2445 + $0xb0] sm:$0xff]
        %v2469 = vld [vmem:[%s2445 + $0xb8] sm:$0xff]
        %v2470 = vld [vmem:[%s2445 + $0xc0] sm:$0xf]
        %v2473 = vunpack.c.l.s4 1983009808
        %v2474 = vunpack.c.0.s8 %v2473
        %v2475 = vlaneseq
        %v2476 = vshrl.u32 %v2475, 7
        %v2477 = vsub.s32 %v2474, %v2476
        %v2478 = vrot.slane %v2444, %v2477
        %v2479 = vcombine.high %v2478, %v2478
        %v2481 = vsel %vm1927, %v2479, 0
        %v2484 = vsel %vm1930, %v2470, 0
        %2486 = vmatprep.subr.mxu0 0.0
        %2487 = vmatpush1.msra.mxu0 %v2461
        %2488 = vmatprep.subr.mxu0 0.0
        %2489 = vmatpush1.msra.mxu0 %v2460
        %2490 = vmatprep.subr.mxu0 0.0
        %2491 = vmatpush1.msra.mxu0 %v2459
        %2492 = vmatprep.subr.mxu0 0.0
        %2493 = vmatpush1.msra.mxu0 %v2458
        %2494 = vmatprep.subr.mxu0 0.0
        %2495 = vmatpush1.msra.mxu0 %v2457
        %2496 = vmatprep.subr.mxu0 0.0
        %2497 = vmatpush1.msra.mxu0 %v2456
        %2498 = vmatprep.subr.mxu0 0.0
        %2499 = vmatpush1.msra.mxu0 %v2455
        %2500 = vmatprep.subr.mxu0 0.0
        %2501 = vmatpush1.msra.mxu0 %v2454
        %2502 = vmatprep.subr.mxu0 0.0
        %2503 = vmatpush1.msra.mxu0 %v2453
        %2504 = vmatprep.subr.mxu0 0.0
        %2505 = vmatpush1.msra.mxu0 %v2452
        %2506 = vmatprep.subr.mxu0 0.0
        %2507 = vmatpush1.msra.mxu0 %v2451
        %2508 = vmatprep.subr.mxu0 0.0
        %2509 = vmatpush1.msra.mxu0 %v2450
        %2510 = vmatprep.subr.mxu0 0.0
        %2511 = vmatpush1.msra.mxu0 %v2449
        %2512 = vmatprep.subr.mxu0 0.0
        %2513 = vmatpush1.msra.mxu0 %v2448
        %2514 = vmatprep.subr.mxu0 0.0
        %2515 = vmatpush1.msra.mxu0 %v2447
        %2516 = vmatprep.subr.mxu0 0.0
        %2517 = vmatpush1.msra.mxu0 %v2446
        %2518 = vmatprep.subr.mxu0 0.0
        %2519 = vmatpush2.msra.mxu0 0.0
        %2520 = vmatprep.subr.mxu0 0.0
        %2521 = vmatpush2.msra.mxu0 0.0
        %2522 = vmatprep.subr.mxu0 0.0
        %2523 = vmatpush2.msra.mxu0 0.0
        %2524 = vmatprep.subr.mxu0 0.0
        %2525 = vmatpush2.msra.mxu0 0.0
        %2526 = vmatprep.subr.mxu0 0.0
        %2527 = vmatpush2.msra.mxu0 0.0
        %2528 = vmatprep.subr.mxu0 0.0
        %2529 = vmatpush2.msra.mxu0 0.0
        %2530 = vmatprep.subr.mxu0 0.0
        %2531 = vmatpush2.msra.mxu0 0.0
        %2532 = vmatprep.subr.mxu0 0.0
        %2533 = vmatpush2.msra.mxu0 %v2484
        %2534 = vmatprep.subr.mxu0 0.0
        %2535 = vmatpush2.msra.mxu0 %v2469
        %2536 = vmatprep.subr.mxu0 0.0
        %2537 = vmatpush2.msra.mxu0 %v2468
        %2538 = vmatprep.subr.mxu0 0.0
        %2539 = vmatpush2.msra.mxu0 %v2467
        %2540 = vmatprep.subr.mxu0 0.0
        %2541 = vmatpush2.msra.mxu0 %v2466
        %2542 = vmatprep.subr.mxu0 0.0
        %2543 = vmatpush2.msra.mxu0 %v2465
        %2544 = vmatprep.subr.mxu0 0.0
        %2545 = vmatpush2.msra.mxu0 %v2464
        %2546 = vmatprep.subr.mxu0 0.0
        %2547 = vmatpush2.msra.mxu0 %v2463
        %2548 = vmatprep.subr.mxu0 0.0
        %2549 = vmatpush2.msra.mxu0 %v2462
        %2550 = vmatprep.mubr.f32.mxu0 %v2481
        %2551 = vmatmul.mubr.f32.gmra.mxu0 %v2478
        %v2552 = vpop.f32.mrf.mxu0
        %v2553 = vadd.f32 0.0, %v2552
        %v2554 = vpop.f32.mrf.mxu0
        %2555 = vdwg.mxu0
        %v2556 = vadd.f32 %v2439, %v2553
        %s2557 = sadd.s32 %s1856, 6
        %s2558 = smul.u32 %s2557, 2
        %s2559 = smul.addr %s2558, 2
        %s2560 = scalar_lea.vmem [#allocation2], %s2559
        %v2561 = vld [vmem:[%s2560] sm:$0xf]
        %s2562 = scalar_lea.vmem %s318, 1200
        %v2563 = vld [vmem:[%s2562] sm:$0xff]
        %v2564 = vld [vmem:[%s2562 + $0x8] sm:$0xff]
        %v2565 = vld [vmem:[%s2562 + $0x10] sm:$0xff]
        %v2566 = vld [vmem:[%s2562 + $0x18] sm:$0xff]
        %v2567 = vld [vmem:[%s2562 + $0x20] sm:$0xff]
        %v2568 = vld [vmem:[%s2562 + $0x28] sm:$0xff]
        %v2569 = vld [vmem:[%s2562 + $0x30] sm:$0xff]
        %v2570 = vld [vmem:[%s2562 + $0x38] sm:$0xff]
        %v2571 = vld [vmem:[%s2562 + $0x40] sm:$0xff]
        %v2572 = vld [vmem:[%s2562 + $0x48] sm:$0xff]
        %v2573 = vld [vmem:[%s2562 + $0x50] sm:$0xff]
        %v2574 = vld [vmem:[%s2562 + $0x58] sm:$0xff]
        %v2575 = vld [vmem:[%s2562 + $0x60] sm:$0xff]
        %v2576 = vld [vmem:[%s2562 + $0x68] sm:$0xff]
        %v2577 = vld [vmem:[%s2562 + $0x70] sm:$0xff]
        %v2578 = vld [vmem:[%s2562 + $0x78] sm:$0xff]
        %v2579 = vld [vmem:[%s2562 + $0x80] sm:$0xff]
        %v2580 = vld [vmem:[%s2562 + $0x88] sm:$0xff]
        %v2581 = vld [vmem:[%s2562 + $0x90] sm:$0xff]
        %v2582 = vld [vmem:[%s2562 + $0x98] sm:$0xff]
        %v2583 = vld [vmem:[%s2562 + $0xa0] sm:$0xff]
        %v2584 = vld [vmem:[%s2562 + $0xa8] sm:$0xff]
        %v2585 = vld [vmem:[%s2562 + $0xb0] sm:$0xff]
        %v2586 = vld [vmem:[%s2562 + $0xb8] sm:$0xff]
        %v2587 = vld [vmem:[%s2562 + $0xc0] sm:$0xf]
        %v2590 = vunpack.c.l.s4 1983009808
        %v2591 = vunpack.c.0.s8 %v2590
        %v2592 = vlaneseq
        %v2593 = vshrl.u32 %v2592, 7
        %v2594 = vsub.s32 %v2591, %v2593
        %v2595 = vrot.slane %v2561, %v2594
        %v2596 = vcombine.high %v2595, %v2595
        %v2598 = vsel %vm1927, %v2596, 0
        %v2601 = vsel %vm1930, %v2587, 0
        %2603 = vmatprep.subr.mxu0 0.0
        %2604 = vmatpush1.msra.mxu0 %v2578
        %2605 = vmatprep.subr.mxu0 0.0
        %2606 = vmatpush1.msra.mxu0 %v2577
        %2607 = vmatprep.subr.mxu0 0.0
        %2608 = vmatpush1.msra.mxu0 %v2576
        %2609 = vmatprep.subr.mxu0 0.0
        %2610 = vmatpush1.msra.mxu0 %v2575
        %2611 = vmatprep.subr.mxu0 0.0
        %2612 = vmatpush1.msra.mxu0 %v2574
        %2613 = vmatprep.subr.mxu0 0.0
        %2614 = vmatpush1.msra.mxu0 %v2573
        %2615 = vmatprep.subr.mxu0 0.0
        %2616 = vmatpush1.msra.mxu0 %v2572
        %2617 = vmatprep.subr.mxu0 0.0
        %2618 = vmatpush1.msra.mxu0 %v2571
        %2619 = vmatprep.subr.mxu0 0.0
        %2620 = vmatpush1.msra.mxu0 %v2570
        %2621 = vmatprep.subr.mxu0 0.0
        %2622 = vmatpush1.msra.mxu0 %v2569
        %2623 = vmatprep.subr.mxu0 0.0
        %2624 = vmatpush1.msra.mxu0 %v2568
        %2625 = vmatprep.subr.mxu0 0.0
        %2626 = vmatpush1.msra.mxu0 %v2567
        %2627 = vmatprep.subr.mxu0 0.0
        %2628 = vmatpush1.msra.mxu0 %v2566
        %2629 = vmatprep.subr.mxu0 0.0
        %2630 = vmatpush1.msra.mxu0 %v2565
        %2631 = vmatprep.subr.mxu0 0.0
        %2632 = vmatpush1.msra.mxu0 %v2564
        %2633 = vmatprep.subr.mxu0 0.0
        %2634 = vmatpush1.msra.mxu0 %v2563
        %2635 = vmatprep.subr.mxu0 0.0
        %2636 = vmatpush2.msra.mxu0 0.0
        %2637 = vmatprep.subr.mxu0 0.0
        %2638 = vmatpush2.msra.mxu0 0.0
        %2639 = vmatprep.subr.mxu0 0.0
        %2640 = vmatpush2.msra.mxu0 0.0
        %2641 = vmatprep.subr.mxu0 0.0
        %2642 = vmatpush2.msra.mxu0 0.0
        %2643 = vmatprep.subr.mxu0 0.0
        %2644 = vmatpush2.msra.mxu0 0.0
        %2645 = vmatprep.subr.mxu0 0.0
        %2646 = vmatpush2.msra.mxu0 0.0
        %2647 = vmatprep.subr.mxu0 0.0
        %2648 = vmatpush2.msra.mxu0 0.0
        %2649 = vmatprep.subr.mxu0 0.0
        %2650 = vmatpush2.msra.mxu0 %v2601
        %2651 = vmatprep.subr.mxu0 0.0
        %2652 = vmatpush2.msra.mxu0 %v2586
        %2653 = vmatprep.subr.mxu0 0.0
        %2654 = vmatpush2.msra.mxu0 %v2585
        %2655 = vmatprep.subr.mxu0 0.0
        %2656 = vmatpush2.msra.mxu0 %v2584
        %2657 = vmatprep.subr.mxu0 0.0
        %2658 = vmatpush2.msra.mxu0 %v2583
        %2659 = vmatprep.subr.mxu0 0.0
        %2660 = vmatpush2.msra.mxu0 %v2582
        %2661 = vmatprep.subr.mxu0 0.0
        %2662 = vmatpush2.msra.mxu0 %v2581
        %2663 = vmatprep.subr.mxu0 0.0
        %2664 = vmatpush2.msra.mxu0 %v2580
        %2665 = vmatprep.subr.mxu0 0.0
        %2666 = vmatpush2.msra.mxu0 %v2579
        %2667 = vmatprep.mubr.f32.mxu0 %v2598
        %2668 = vmatmul.mubr.f32.gmra.mxu0 %v2595
        %v2669 = vpop.f32.mrf.mxu0
        %v2670 = vadd.f32 0.0, %v2669
        %v2671 = vpop.f32.mrf.mxu0
        %2672 = vdwg.mxu0
        %v2673 = vadd.f32 %v2556, %v2670
        %s2674 = sadd.s32 %s1856, 7
        %s2675 = smul.u32 %s2674, 2
        %s2676 = smul.addr %s2675, 2
        %s2677 = scalar_lea.vmem [#allocation2], %s2676
        %v2678 = vld [vmem:[%s2677] sm:$0xf]
        %s2679 = scalar_lea.vmem %s318, 1400
        %v2680 = vld [vmem:[%s2679] sm:$0xff]
        %v2681 = vld [vmem:[%s2679 + $0x8] sm:$0xff]
        %v2682 = vld [vmem:[%s2679 + $0x10] sm:$0xff]
        %v2683 = vld [vmem:[%s2679 + $0x18] sm:$0xff]
        %v2684 = vld [vmem:[%s2679 + $0x20] sm:$0xff]
        %v2685 = vld [vmem:[%s2679 + $0x28] sm:$0xff]
        %v2686 = vld [vmem:[%s2679 + $0x30] sm:$0xff]
        %v2687 = vld [vmem:[%s2679 + $0x38] sm:$0xff]
        %v2688 = vld [vmem:[%s2679 + $0x40] sm:$0xff]
        %v2689 = vld [vmem:[%s2679 + $0x48] sm:$0xff]
        %v2690 = vld [vmem:[%s2679 + $0x50] sm:$0xff]
        %v2691 = vld [vmem:[%s2679 + $0x58] sm:$0xff]
        %v2692 = vld [vmem:[%s2679 + $0x60] sm:$0xff]
        %v2693 = vld [vmem:[%s2679 + $0x68] sm:$0xff]
        %v2694 = vld [vmem:[%s2679 + $0x70] sm:$0xff]
        %v2695 = vld [vmem:[%s2679 + $0x78] sm:$0xff]
        %v2696 = vld [vmem:[%s2679 + $0x80] sm:$0xff]
        %v2697 = vld [vmem:[%s2679 + $0x88] sm:$0xff]
        %v2698 = vld [vmem:[%s2679 + $0x90] sm:$0xff]
        %v2699 = vld [vmem:[%s2679 + $0x98] sm:$0xff]
        %v2700 = vld [vmem:[%s2679 + $0xa0] sm:$0xff]
        %v2701 = vld [vmem:[%s2679 + $0xa8] sm:$0xff]
        %v2702 = vld [vmem:[%s2679 + $0xb0] sm:$0xff]
        %v2703 = vld [vmem:[%s2679 + $0xb8] sm:$0xff]
        %v2704 = vld [vmem:[%s2679 + $0xc0] sm:$0xf]
        %v2707 = vunpack.c.l.s4 1983009808
        %v2708 = vunpack.c.0.s8 %v2707
        %v2709 = vlaneseq
        %v2710 = vshrl.u32 %v2709, 7
        %v2711 = vsub.s32 %v2708, %v2710
        %v2712 = vrot.slane %v2678, %v2711
        %v2713 = vcombine.high %v2712, %v2712
        %v2715 = vsel %vm1927, %v2713, 0
        %v2718 = vsel %vm1930, %v2704, 0
        %2720 = vmatprep.subr.mxu0 0.0
        %2721 = vmatpush1.msra.mxu0 %v2695
        %2722 = vmatprep.subr.mxu0 0.0
        %2723 = vmatpush1.msra.mxu0 %v2694
        %2724 = vmatprep.subr.mxu0 0.0
        %2725 = vmatpush1.msra.mxu0 %v2693
        %2726 = vmatprep.subr.mxu0 0.0
        %2727 = vmatpush1.msra.mxu0 %v2692
        %2728 = vmatprep.subr.mxu0 0.0
        %2729 = vmatpush1.msra.mxu0 %v2691
        %2730 = vmatprep.subr.mxu0 0.0
        %2731 = vmatpush1.msra.mxu0 %v2690
        %2732 = vmatprep.subr.mxu0 0.0
        %2733 = vmatpush1.msra.mxu0 %v2689
        %2734 = vmatprep.subr.mxu0 0.0
        %2735 = vmatpush1.msra.mxu0 %v2688
        %2736 = vmatprep.subr.mxu0 0.0
        %2737 = vmatpush1.msra.mxu0 %v2687
        %2738 = vmatprep.subr.mxu0 0.0
        %2739 = vmatpush1.msra.mxu0 %v2686
        %2740 = vmatprep.subr.mxu0 0.0
        %2741 = vmatpush1.msra.mxu0 %v2685
        %2742 = vmatprep.subr.mxu0 0.0
        %2743 = vmatpush1.msra.mxu0 %v2684
        %2744 = vmatprep.subr.mxu0 0.0
        %2745 = vmatpush1.msra.mxu0 %v2683
        %2746 = vmatprep.subr.mxu0 0.0
        %2747 = vmatpush1.msra.mxu0 %v2682
        %2748 = vmatprep.subr.mxu0 0.0
        %2749 = vmatpush1.msra.mxu0 %v2681
        %2750 = vmatprep.subr.mxu0 0.0
        %2751 = vmatpush1.msra.mxu0 %v2680
        %2752 = vmatprep.subr.mxu0 0.0
        %2753 = vmatpush2.msra.mxu0 0.0
        %2754 = vmatprep.subr.mxu0 0.0
        %2755 = vmatpush2.msra.mxu0 0.0
        %2756 = vmatprep.subr.mxu0 0.0
        %2757 = vmatpush2.msra.mxu0 0.0
        %2758 = vmatprep.subr.mxu0 0.0
        %2759 = vmatpush2.msra.mxu0 0.0
        %2760 = vmatprep.subr.mxu0 0.0
        %2761 = vmatpush2.msra.mxu0 0.0
        %2762 = vmatprep.subr.mxu0 0.0
        %2763 = vmatpush2.msra.mxu0 0.0
        %2764 = vmatprep.subr.mxu0 0.0
        %2765 = vmatpush2.msra.mxu0 0.0
        %2766 = vmatprep.subr.mxu0 0.0
        %2767 = vmatpush2.msra.mxu0 %v2718
        %2768 = vmatprep.subr.mxu0 0.0
        %2769 = vmatpush2.msra.mxu0 %v2703
        %2770 = vmatprep.subr.mxu0 0.0
        %2771 = vmatpush2.msra.mxu0 %v2702
        %2772 = vmatprep.subr.mxu0 0.0
        %2773 = vmatpush2.msra.mxu0 %v2701
        %2774 = vmatprep.subr.mxu0 0.0
        %2775 = vmatpush2.msra.mxu0 %v2700
        %2776 = vmatprep.subr.mxu0 0.0
        %2777 = vmatpush2.msra.mxu0 %v2699
        %2778 = vmatprep.subr.mxu0 0.0
        %2779 = vmatpush2.msra.mxu0 %v2698
        %2780 = vmatprep.subr.mxu0 0.0
        %2781 = vmatpush2.msra.mxu0 %v2697
        %2782 = vmatprep.subr.mxu0 0.0
        %2783 = vmatpush2.msra.mxu0 %v2696
        %2784 = vmatprep.mubr.f32.mxu0 %v2715
        %2785 = vmatmul.mubr.f32.gmra.mxu0 %v2712
        %v2786 = vpop.f32.mrf.mxu0
        %v2787 = vadd.f32 0.0, %v2786
        %v2788 = vpop.f32.mrf.mxu0
        %2789 = vdwg.mxu0
        %v2790 = vadd.f32 %v2673, %v2787
        %v2791 = vld [vmem:[#allocation3] sm:$0x3]
        %v2792 = vadd.f32 %v2791, %v2790
        %2793 = vst [vmem:[#allocation3] sm:$0x3] %v2792
        %p2794 = scmp.eq.s32.totalorder %s21, 3
        // Predicated region
        $region61: #{simple_cnn_forward.1} parent=55 // pred_check
          %p2795 = pneg %p2794
        $region62: #{simple_cnn_forward.1} parent=55 // pred_check_branch
          %2797 = sbr.rel (%p2795) target = $region64
        $region63: #{simple_cnn_forward.1} parent=55 // pred_region
          %v2798 = vld [vmem:[#allocation3] sm:$0x3]
          %v2799 = vld [vmem:[%s4] sm:$0x1]
          %v2801 = vlaneseq
          %v2802 = vshrl.u32 %v2801, 7
          %v2803 = vsub.s32 0, %v2802
          %v2804 = vrot.slane %v2799, %v2803
          %v2806 = vadd.f32 %v2798, %v2804
          %v2807 = vmax.f32 %v2806, 0.0
          %v2808 = vld [vmem:[%s5] sm:$0xff]
          %v2809 = vld [vmem:[%s5 + $0x8] sm:$0xff]
          %v2810 = vld [vmem:[%s5 + $0x10] sm:$0xff]
          %v2811 = vld [vmem:[%s5 + $0x18] sm:$0xff]
          %v2812 = vld [vmem:[%s5 + $0x20] sm:$0xff]
          %v2813 = vld [vmem:[%s5 + $0x28] sm:$0xff]
          %v2814 = vld [vmem:[%s5 + $0x30] sm:$0xff]
          %v2815 = vld [vmem:[%s5 + $0x38] sm:$0xff]
          %v2816 = vld [vmem:[%s5 + $0x40] sm:$0xff]
          %v2817 = vld [vmem:[%s5 + $0x48] sm:$0xff]
          %v2818 = vld [vmem:[%s5 + $0x50] sm:$0xff]
          %v2819 = vld [vmem:[%s5 + $0x58] sm:$0xff]
          %v2820 = vld [vmem:[%s5 + $0x60] sm:$0xff]
          %v2821 = vld [vmem:[%s5 + $0x68] sm:$0xff]
          %v2822 = vld [vmem:[%s5 + $0x70] sm:$0xff]
          %v2823 = vld [vmem:[%s5 + $0x78] sm:$0xff]
          %v2824 = vld [vmem:[%s6] sm:$0x1]
          %v2826 = vlaneseq
          %v2827 = vshrl.u32 %v2826, 7
          %v2828 = vsub.s32 0, %v2827
          %v2829 = vrot.slane %v2824, %v2828
          %2831 = vmatprep.subr.mxu0 0.0
          %2832 = vmatpush1.msra.mxu0 %v2823
          %2833 = vmatprep.subr.mxu0 0.0
          %2834 = vmatpush1.msra.mxu0 %v2822
          %2835 = vmatprep.subr.mxu0 0.0
          %2836 = vmatpush1.msra.mxu0 %v2821
          %2837 = vmatprep.subr.mxu0 0.0
          %2838 = vmatpush1.msra.mxu0 %v2820
          %2839 = vmatprep.subr.mxu0 0.0
          %2840 = vmatpush1.msra.mxu0 %v2819
          %2841 = vmatprep.subr.mxu0 0.0
          %2842 = vmatpush1.msra.mxu0 %v2818
          %2843 = vmatprep.subr.mxu0 0.0
          %2844 = vmatpush1.msra.mxu0 %v2817
          %2845 = vmatprep.subr.mxu0 0.0
          %2846 = vmatpush1.msra.mxu0 %v2816
          %2847 = vmatprep.subr.mxu0 0.0
          %2848 = vmatpush1.msra.mxu0 %v2815
          %2849 = vmatprep.subr.mxu0 0.0
          %2850 = vmatpush1.msra.mxu0 %v2814
          %2851 = vmatprep.subr.mxu0 0.0
          %2852 = vmatpush1.msra.mxu0 %v2813
          %2853 = vmatprep.subr.mxu0 0.0
          %2854 = vmatpush1.msra.mxu0 %v2812
          %2855 = vmatprep.subr.mxu0 0.0
          %2856 = vmatpush1.msra.mxu0 %v2811
          %2857 = vmatprep.subr.mxu0 0.0
          %2858 = vmatpush1.msra.mxu0 %v2810
          %2859 = vmatprep.subr.mxu0 0.0
          %2860 = vmatpush1.msra.mxu0 %v2809
          %2861 = vmatprep.subr.mxu0 0.0
          %2862 = vmatpush1.msra.mxu0 %v2808
          %2863 = vmatprep.subr.mxu0 0.0
          %2864 = vmatpush2.msra.mxu0 0.0
          %2865 = vmatprep.subr.mxu0 0.0
          %2866 = vmatpush2.msra.mxu0 0.0
          %2867 = vmatprep.subr.mxu0 0.0
          %2868 = vmatpush2.msra.mxu0 0.0
          %2869 = vmatprep.subr.mxu0 0.0
          %2870 = vmatpush2.msra.mxu0 0.0
          %2871 = vmatprep.subr.mxu0 0.0
          %2872 = vmatpush2.msra.mxu0 0.0
          %2873 = vmatprep.subr.mxu0 0.0
          %2874 = vmatpush2.msra.mxu0 0.0
          %2875 = vmatprep.subr.mxu0 0.0
          %2876 = vmatpush2.msra.mxu0 0.0
          %2877 = vmatprep.subr.mxu0 0.0
          %2878 = vmatpush2.msra.mxu0 0.0
          %2879 = vmatprep.subr.mxu0 0.0
          %2880 = vmatpush2.msra.mxu0 0.0
          %2881 = vmatprep.subr.mxu0 0.0
          %2882 = vmatpush2.msra.mxu0 0.0
          %2883 = vmatprep.subr.mxu0 0.0
          %2884 = vmatpush2.msra.mxu0 0.0
          %2885 = vmatprep.subr.mxu0 0.0
          %2886 = vmatpush2.msra.mxu0 0.0
          %2887 = vmatprep.subr.mxu0 0.0
          %2888 = vmatpush2.msra.mxu0 0.0
          %2889 = vmatprep.subr.mxu0 0.0
          %2890 = vmatpush2.msra.mxu0 0.0
          %2891 = vmatprep.subr.mxu0 0.0
          %2892 = vmatpush2.msra.mxu0 0.0
          %2893 = vmatprep.subr.mxu0 0.0
          %2894 = vmatpush2.msra.mxu0 0.0
          %2895 = vmatprep.mubr.f32.mxu0 0.0
          %2896 = vmatmul.mubr.f32.gmra.mxu0 %v2807
          %v2897 = vpop.f32.mrf.mxu0
          %v2898 = vadd.f32 %v2829, %v2897
          %v2899 = vpop.f32.mrf.mxu0
          %2900 = vdwg.mxu0
          %v2901 = vmax.f32 %v2898, 0.0
          %v2902 = vld [vmem:[%s7] sm:$0xff]
          %v2903 = vld [vmem:[%s7 + $0x8] sm:$0xff]
          %v2904 = vld [vmem:[%s7 + $0x10] sm:$0xff]
          %v2905 = vld [vmem:[%s7 + $0x18] sm:$0xff]
          %v2906 = vld [vmem:[%s7 + $0x20] sm:$0xff]
          %v2907 = vld [vmem:[%s7 + $0x28] sm:$0xff]
          %v2908 = vld [vmem:[%s7 + $0x30] sm:$0xff]
          %v2909 = vld [vmem:[%s7 + $0x38] sm:$0xff]
          %v2910 = vld [vmem:[%s8] sm:$0x1]
          %v2912 = vlaneseq
          %v2913 = vshrl.u32 %v2912, 7
          %v2914 = vsub.s32 0, %v2913
          %v2915 = vrot.slane %v2910, %v2914
          %vm2917 = vcmask 523264
          %v2919 = vsel %vm2917, %v2901, 0
          %2921 = vmatprep.subr.mxu0 0.0
          %2922 = vmatpush1.msra.mxu0 0.0
          %2923 = vmatprep.subr.mxu0 0.0
          %2924 = vmatpush1.msra.mxu0 0.0
          %2925 = vmatprep.subr.mxu0 0.0
          %2926 = vmatpush1.msra.mxu0 0.0
          %2927 = vmatprep.subr.mxu0 0.0
          %2928 = vmatpush1.msra.mxu0 0.0
          %2929 = vmatprep.subr.mxu0 0.0
          %2930 = vmatpush1.msra.mxu0 0.0
          %2931 = vmatprep.subr.mxu0 0.0
          %2932 = vmatpush1.msra.mxu0 0.0
          %2933 = vmatprep.subr.mxu0 0.0
          %2934 = vmatpush1.msra.mxu0 0.0
          %2935 = vmatprep.subr.mxu0 0.0
          %2936 = vmatpush1.msra.mxu0 0.0
          %2937 = vmatprep.subr.mxu0 0.0
          %2938 = vmatpush1.msra.mxu0 %v2909
          %2939 = vmatprep.subr.mxu0 0.0
          %2940 = vmatpush1.msra.mxu0 %v2908
          %2941 = vmatprep.subr.mxu0 0.0
          %2942 = vmatpush1.msra.mxu0 %v2907
          %2943 = vmatprep.subr.mxu0 0.0
          %2944 = vmatpush1.msra.mxu0 %v2906
          %2945 = vmatprep.subr.mxu0 0.0
          %2946 = vmatpush1.msra.mxu0 %v2905
          %2947 = vmatprep.subr.mxu0 0.0
          %2948 = vmatpush1.msra.mxu0 %v2904
          %2949 = vmatprep.subr.mxu0 0.0
          %2950 = vmatpush1.msra.mxu0 %v2903
          %2951 = vmatprep.subr.mxu0 0.0
          %2952 = vmatpush1.msra.mxu0 %v2902
          %2953 = vmatprep.subr.mxu0 0.0
          %2954 = vmatpush2.msra.mxu0 0.0
          %2955 = vmatprep.subr.mxu0 0.0
          %2956 = vmatpush2.msra.mxu0 0.0
          %2957 = vmatprep.subr.mxu0 0.0
          %2958 = vmatpush2.msra.mxu0 0.0
          %2959 = vmatprep.subr.mxu0 0.0
          %2960 = vmatpush2.msra.mxu0 0.0
          %2961 = vmatprep.subr.mxu0 0.0
          %2962 = vmatpush2.msra.mxu0 0.0
          %2963 = vmatprep.subr.mxu0 0.0
          %2964 = vmatpush2.msra.mxu0 0.0
          %2965 = vmatprep.subr.mxu0 0.0
          %2966 = vmatpush2.msra.mxu0 0.0
          %2967 = vmatprep.subr.mxu0 0.0
          %2968 = vmatpush2.msra.mxu0 0.0
          %2969 = vmatprep.subr.mxu0 0.0
          %2970 = vmatpush2.msra.mxu0 0.0
          %2971 = vmatprep.subr.mxu0 0.0
          %2972 = vmatpush2.msra.mxu0 0.0
          %2973 = vmatprep.subr.mxu0 0.0
          %2974 = vmatpush2.msra.mxu0 0.0
          %2975 = vmatprep.subr.mxu0 0.0
          %2976 = vmatpush2.msra.mxu0 0.0
          %2977 = vmatprep.subr.mxu0 0.0
          %2978 = vmatpush2.msra.mxu0 0.0
          %2979 = vmatprep.subr.mxu0 0.0
          %2980 = vmatpush2.msra.mxu0 0.0
          %2981 = vmatprep.subr.mxu0 0.0
          %2982 = vmatpush2.msra.mxu0 0.0
          %2983 = vmatprep.subr.mxu0 0.0
          %2984 = vmatpush2.msra.mxu0 0.0
          %2985 = vmatprep.mubr.f32.mxu0 0.0
          %2986 = vmatmul.mubr.f32.gmra.mxu0 %v2919
          %v2987 = vpop.f32.mrf.mxu0
          %v2988 = vadd.f32 %v2915, %v2987
          %v2989 = vpop.f32.mrf.mxu0
          %2990 = vdwg.mxu0
          %vm2991 = vcmask 74752
          %2992 = vst.msk [vmem:[#allocation4] sm:$0x3] %vm2991, %v2988
        $region64: #{simple_cnn_forward.1} parent=55 // pred_fallthru
          _
        // Predicated region
        $region65: #{simple_cnn_forward.1} parent=55 // pred_check
          %p2993 = pneg %p228
        $region66: #{simple_cnn_forward.1} parent=55 // pred_check_branch
          %2995 = sbr.rel (%p2993) target = $region68
        $region67: #{simple_cnn_forward.1} parent=55 // pred_region
          %s2997 = ssub.s32 32, 32
          %2998 = vsyncadd [#allocation5], %s2997
          %s3000 = sshll.u32 [#allocation4], 4
          %s3001 = int_to_ptr.vmem [resolvable:$true] %s3000
          %3003 = dma.vmem_to_hbm [thread:$0]  %s3001, 32, %s9, [#allocation5]
        $region68: #{simple_cnn_forward.1} parent=55 // pred_fallthru
          _
        // Predicated region
        $region69: #{simple_cnn_forward.1} parent=55 // pred_check
          %p3004 = pneg %p228
        $region70: #{simple_cnn_forward.1} parent=55 // pred_check_branch
          %3006 = sbr.rel (%p3004) target = $region72
        $region71: #{simple_cnn_forward.1} parent=55 // pred_region
          %3007 = dma.done [#allocation5], 32
        $region72: #{simple_cnn_forward.1} parent=55 // pred_fallthru
          _
      $region56: #{simple_cnn_forward.1} parent=5 // pred_fallthru
        _
      %p3008 = scmp.le.s32.totalorder 2, %s16
      // Predicated region
      $region73: #{simple_cnn_forward.1} parent=5 // pred_check
        %p3009 = pneg %p3008
      $region74: #{simple_cnn_forward.1} parent=5 // pred_check_branch
        %3011 = sbr.rel (%p3009) target = $region76
      $region75: #{simple_cnn_forward.1} parent=5 // pred_region
        %s3012 = ssub.s32 %s16, 2
      $region76: #{simple_cnn_forward.1} parent=5 // pred_fallthru
        _
    $region6: #{simple_cnn_forward.1} parent=1 // loop_footer
      %s20 = sadd.s32 1, %s16
    $region7: #{simple_cnn_forward.1} parent=1 // loop_footer_branch
      %15 = sbr.rel target = $region3
    $region8: #{simple_cnn_forward.1} parent=1 // loop_exit
      _
    %3013 = vsyncpa [#allocation5], 1
    %s3014 = scalar_lea.sflag [#allocation5], 1
    %3015 = vsyncpa %s3014, 1

</llo_original>
